<compile_context>
chip_gen: v5e
topology: v5e:2x2
jax: 0.10.0
libtpu: 0.0.40
codegen_flags: <defaults>
</compile_context>

<pallas_src>
import math

import jax
import jax.numpy as jnp
from jax.experimental import pallas as pl
from jax.experimental.pallas import tpu as pltpu


def _vmem_limit_bytes():
    # Generation-aware scoped-VMEM budget (v5e/v6e: 128 MiB phys, v7x: 64 MiB).
    try:
        cap = int(pltpu.get_tpu_info().vmem_capacity_bytes)
    except Exception:
        cap = 64 << 20
    return int(min(cap * 3 // 4, 96 << 20))


_VMEM_LIMIT = _vmem_limit_bytes()


# ----------------------- fused direct-conv GEMM kernel -----------------------
def _make_conv_kernel(offs_per_input, cins, lout, has_bias, has_res, use_panel):
    """out(Cout,L) = W_flat @ panel(K_total,L) (+bias)(+residual)."""
    n_inputs = len(offs_per_input)

    def kernel(*refs):
        i = 0
        x_refs = refs[i:i + n_inputs]; i += n_inputs
        w_ref = refs[i]; i += 1
        b_ref = refs[i] if has_bias else None; i += int(has_bias)
        r_ref = refs[i] if has_res else None; i += int(has_res)
        o_ref = refs[i]; i += 1

        if use_panel:
            panel_ref = refs[i]
            # Build the (K_total, lout) bf16 panel once per grid step:
            # kh*kw cheap VMEM copies instead of kh*kw small dots + casts.
            row = 0
            for x_ref, offs, cin in zip(x_refs, offs_per_input, cins):
                for off in offs:
                    panel_ref[row:row + cin, :] = x_ref[:, pl.ds(off, lout)]
                    row += cin
            acc = jnp.dot(w_ref[...], panel_ref[...],
                          preferred_element_type=jnp.float32)
        else:
            # Single input / single tap (1x1 conv): feed the MXU directly.
            acc = jnp.dot(w_ref[...],
                          x_refs[0][:, pl.ds(offs_per_input[0][0], lout)],
                          preferred_element_type=jnp.float32)

        if has_bias:
            acc = acc + b_ref[...]          # (Cout, 1) broadcast over lanes
        if has_res:
            acc = acc + r_ref[...]          # (Cout, L) f32 residual
        o_ref[...] = acc.astype(o_ref.dtype)

    return kernel


def fused_conv_gemm(inputs, w_flat, lout, bias=None, residual=None,
                    out_dtype=jnp.float32):
    """out[b] = W_flat @ panel_b (+bias)(+residual[b])   -- lane-dense output.

    inputs: list of (x, offs)
        x:    (B, Cin_k, Lin_k) activations (cast to bf16 here)
        offs: tuple of python-int flat window offsets (taps)
    w_flat: (Cout, K_total) -- columns ordered input-major, tap-major,
            channel-minor (matches the panel row order built in-kernel).
    bias:     (Cout,) or None
    residual: (B, Cout, lout) f32 or None
    """
    B = inputs[0][0].shape[0]
    Cout, k_total = w_flat.shape
    n_in = len(inputs)
    has_bias = bias is not None
    has_res = residual is not None
    cins = tuple(int(x.shape[1]) for x, _ in inputs)
    offs_list = tuple(tuple(int(o) for o in offs) for _, offs in inputs)
    assert k_total == sum(c * len(o) for c, o in zip(cins, offs_list))
    use_panel = not (n_in == 1 and len(offs_list[0]) == 1)

    args, in_specs = [], []
    for x, _ in inputs:
        _, cin, lin = x.shape
        args.append(x.astype(jnp.bfloat16))
        in_specs.append(pl.BlockSpec((None, cin, lin), lambda b: (b, 0, 0)))
    args.append(w_flat.astype(jnp.bfloat16))        # grid-resident weights
    in_specs.append(pl.BlockSpec((Cout, k_total), lambda b: (0, 0)))
    if has_bias:
        args.append(bias.astype(jnp.float32).reshape(Cout, 1))
        in_specs.append(pl.BlockSpec((Cout, 1), lambda b: (0, 0)))
    if has_res:
        args.append(residual.astype(jnp.float32))
        in_specs.append(pl.BlockSpec((None, Cout, lout), lambda b: (b, 0, 0)))

    scratch = [pltpu.VMEM((k_total, lout), jnp.bfloat16)] if use_panel else []

    out_bytes = B * Cout * lout * jnp.dtype(out_dtype).itemsize
    cost = pl.CostEstimate(
        flops=int(2 * B * Cout * k_total * lout),
        transcendentals=0,
        bytes_accessed=int(sum(int(a.size) * a.dtype.itemsize for a in args)
                           + out_bytes),
    )

    kernel = _make_conv_kernel(offs_list, cins, lout, has_bias, has_res,
                               use_panel)
    return pl.pallas_call(
        kernel,
        out_shape=jax.ShapeDtypeStruct((B, Cout, lout), out_dtype),
        grid_spec=pltpu.PrefetchScalarGridSpec(
            num_scalar_prefetch=0,
            grid=(B,),
            in_specs=in_specs,
            out_specs=pl.BlockSpec((None, Cout, lout), lambda b: (b, 0, 0)),
            scratch_shapes=scratch,
        ),
        compiler_params=pltpu.CompilerParams(
            dimension_semantics=("parallel",),
            vmem_limit_bytes=_VMEM_LIMIT),
        cost_estimate=cost,
    )(*args)


# ----------------------------- conv lowerings --------------------------------
def conv2d_direct(x_nchw, w_oihw, bias=None, residual=None, pad=0,
                  slack_rows=0, out_dtype=jnp.float32):
    """Stride-1 NCHW conv on the padded-width row grid, cropped afterwards.

    `slack_rows` zero rows are already appended at the bottom of `x_nchw` by
    the caller; they only provide flat tail slack for the in-row taps and
    never reach a kept output column.  All padding happens in ONE jnp.pad.
    """
    assert pad == 0 or slack_rows == 0
    B, C, h_in, W = x_nchw.shape
    H = h_in - slack_rows
    Cout, Cin, kh, kw = w_oihw.shape
    assert Cin == C
    Hp, Wp = H + 2 * pad, W + 2 * pad
    Ho, Wo = Hp - kh + 1, Wp - kw + 1
    lout = Ho * Wp                                    # padded-width row grid

    xb = x_nchw.astype(jnp.bfloat16)                  # bf16 before the pad pass
    need = kw - 1 - slack_rows * Wp                   # missing flat tail slack
    extra = 0 if need <= 0 else -(-need // Wp)        # whole extra bottom rows
    if pad or extra:                                  # single merged pad pass
        xb = jnp.pad(xb, ((0, 0), (0, 0), (pad, pad + extra), (pad, pad)))
    rows_total = Hp + slack_rows + extra
    x_flat = xb.reshape(B, C, rows_total * Wp)

    # weight columns ordered (tap i, tap j, cin) == panel row order
    w_flat = jnp.transpose(w_oihw, (0, 2, 3, 1)).reshape(Cout, kh * kw * Cin)
    offs = tuple(i * Wp + j for i in range(kh) for j in range(kw))

    res = None
    if residual is not None:
        r = residual
        if Wp != Wo:                                  # place on padded-width grid
            r = jnp.pad(r, ((0, 0), (0, 0), (0, 0), (0, Wp - Wo)))
        res = r.reshape(B, Cout, lout)

    out = fused_conv_gemm([(x_flat, offs)], w_flat, lout, bias=bias,
                          residual=res, out_dtype=out_dtype)
    return out.reshape(B, Cout, Ho, Wp)[:, :, :, :Wo]


def conv2d_k4s2(x_nchw, w_oihw, pad=1):
    """4x4 stride-2 conv == space-to-depth(2) + 2x2 stride-1 direct conv.
    The flat tail-slack row is folded into the single space-to-depth pad."""
    B, C, H, W = x_nchw.shape
    Cout, Cin, _, _ = w_oihw.shape
    Hp, Wp = H + 2 * pad, W + 2 * pad
    assert Hp % 2 == 0 and Wp % 2 == 0
    xb = x_nchw.astype(jnp.bfloat16)
    # +2 extra bottom rows -> one zero slack row after the /2 space-to-depth
    xp = jnp.pad(xb, ((0, 0), (0, 0), (pad, pad + 2), (pad, pad)))
    H2, W2 = Hp // 2 + 1, Wp // 2                     # H2 includes slack row
    x2 = xp.reshape(B, C, H2, 2, W2, 2).transpose(0, 1, 3, 5, 2, 4)
    x2 = x2.reshape(B, 4 * C, H2, W2)
    # w2[co, (c,pi,pj), i2, j2] = w[co, c, 2*i2+pi, 2*j2+pj]
    w2 = w_oihw.reshape(Cout, Cin, 2, 2, 2, 2).transpose(0, 1, 3, 5, 2, 4)
    w2 = w2.reshape(Cout, 4 * Cin, 2, 2)
    return conv2d_direct(x2, w2, pad=0, slack_rows=1)


def conv_transpose2x2_s2(x_nchw, w_iohw, bias, out_dtype=jnp.float32):
    """ConvTranspose2d(kernel=2, stride=2, pad=0).  w_iohw: (Cin, Cout, 2, 2)."""
    B, Cin, H, W = x_nchw.shape
    Cout = w_iohw.shape[1]
    # rows ordered (p, q, cout): w_mat[(p,q,co), ci] = w[ci, co, p, q]
    w_mat = jnp.transpose(w_iohw, (2, 3, 1, 0)).reshape(4 * Cout, Cin)
    b_full = jnp.tile(bias, 4)
    y = fused_conv_gemm([(x_nchw.reshape(B, Cin, H * W), (0,))], w_mat, H * W,
                        bias=b_full, out_dtype=out_dtype)
    # TODO(synk): the (p,q) de-interleave stays in XLA (moving bf16 now); a
    # native-layout fusion into upConv1 was considered but not applied here.
    y = y.reshape(B, 2, 2, Cout, H, W).transpose(0, 3, 4, 1, 5, 2)
    return y.reshape(B, Cout, 2 * H, 2 * W)


def up_conv1(en1, dn1_temp, w_oihw, out_dtype=jnp.float32):
    """upConv1 fused over the channel concat: W[:, :dim]@en1 + W[:, dim:]@dn1."""
    B, dim, H, W = en1.shape
    Cout = w_oihw.shape[0]
    w_flat = w_oihw.reshape(Cout, 2 * dim)
    lout = H * W
    out = fused_conv_gemm(
        [(en1.reshape(B, dim, lout), (0,)),
         (dn1_temp.reshape(B, dim, lout), (0,))],
        w_flat, lout, out_dtype=out_dtype)
    return out.reshape(B, Cout, H, W)


def fft_deblur(x_nchw, w1, b1, w2, b2):
    """FFTDeblur: rfft2 -> composed 1x1 conv on [real | imag] lanes -> irfft2."""
    B, C, H, W = x_nchw.shape
    # TODO(synk): torch.fft.rfft2/irfft2 have no Pallas primitive; FFTs in jnp.
    y = jnp.fft.rfft2(x_nchw.astype(jnp.float32), axes=(-2, -1))
    # compose the two 1x1 convs (the Sequential has no nonlinearity between)
    W1 = w1.reshape(w1.shape[0], w1.shape[1])
    W2 = w2.reshape(w2.shape[0], w2.shape[1])
    Wc = W2 @ W1                       # (outdim, dim)
    bc = W2 @ b1 + b2                  # (outdim,)
    Hf, Wf = y.shape[-2], y.shape[-1]
    # real & imag stacked along the LANE axis: grid stays (B,), 2x wider
    # lane-dense store, one pallas_call per FFTDeblur.
    z = jnp.concatenate([jnp.real(y), jnp.imag(y)], axis=-1).astype(jnp.bfloat16)
    out = fused_conv_gemm([(z.reshape(B, C, Hf * 2 * Wf), (0,))], Wc,
                          Hf * 2 * Wf, bias=bc)
    out = out.reshape(B, -1, Hf, 2 * Wf)
    yr, yi = out[..., :Wf], out[..., Wf:]
    res = jnp.fft.irfft2(jax.lax.complex(yr, yi), s=(H, W), axes=(-2, -1))
    return res.astype(jnp.float32)


# --------------------------------- FFMlite ------------------------------------
def _uniform(key, shape, fan_in):
    bound = 1.0 / math.sqrt(fan_in)
    return jax.random.uniform(key, shape, jnp.float32, -bound, bound)


def init_params(key, in_dim, dim):
    d2 = 2 * dim
    keys = jax.random.split(key, 14)
    p = {}
    p["emb_w"] = _uniform(keys[0], (dim, in_dim, 3, 3), in_dim * 9)      # embedding (no bias)
    p["fca1_w1"] = _uniform(keys[1], (dim, dim, 1, 1), dim)              # fca1.fft_res[0]
    p["fca1_b1"] = _uniform(keys[2], (dim,), dim)
    p["fca1_w2"] = _uniform(keys[3], (dim, dim, 1, 1), dim)              # fca1.fft_res[1]
    p["fca1_b2"] = _uniform(keys[4], (dim,), dim)
    p["down_w"] = _uniform(keys[5], (d2, dim, 4, 4), dim * 16)           # downsize1 (no bias)
    p["fca2_w1"] = _uniform(keys[6], (d2, d2, 1, 1), d2)                 # fca2.fft_res[0]
    p["fca2_b1"] = _uniform(keys[7], (d2,), d2)
    p["fca2_w2"] = _uniform(keys[8], (d2, d2, 1, 1), d2)                 # fca2.fft_res[1]
    p["fca2_b2"] = _uniform(keys[9], (d2,), d2)
    p["up_w"] = _uniform(keys[10], (d2, dim, 2, 2), d2 * 4)              # upSample1 (with bias)
    p["up_b"] = _uniform(keys[11], (dim,), d2 * 4)
    p["upconv_w"] = _uniform(keys[12], (dim, d2, 1, 1), d2)              # upConv1 (no bias)
    p["map_w"] = _uniform(keys[13], (dim, dim, 3, 3), dim * 9)           # mapping (no bias)
    return p


def ffmlite_forward(x_nchw, p):
    """x: [B, C, H, W] -> out: [B, C, H, W]  (matches PyTorch FFMlite.forward)."""
    x = x_nchw.astype(jnp.float32)

    fea = conv2d_direct(x, p["emb_w"], pad=1)                            # embedding
    en1 = fft_deblur(fea, p["fca1_w1"], p["fca1_b1"], p["fca1_w2"], p["fca1_b2"])
    en2 = conv2d_k4s2(en1, p["down_w"], pad=1)                           # downsize1
    bott = fft_deblur(en2, p["fca2_w1"], p["fca2_b1"], p["fca2_w2"], p["fca2_b2"])
    dn1_temp = conv_transpose2x2_s2(bott, p["up_w"], p["up_b"],
                                    out_dtype=jnp.bfloat16)              # upSample1
    dn1 = up_conv1(en1, dn1_temp, p["upconv_w"], out_dtype=jnp.bfloat16)  # upConv1 (concat fused)
    out = conv2d_direct(dn1, p["map_w"], pad=1, residual=x)              # mapping + x (fused)
    return out


if __name__ == "__main__":
    key = jax.random.PRNGKey(0)
    k_x, k_p = jax.random.split(key)

    B, C, H, W = 2, 4, 16, 16        # small shapes: batch=2, channels=4, spatial=16
    dim = 4                          # FFMlite(in_dim=4, dim=4)

    x = jax.random.normal(k_x, (B, C, H, W), jnp.float32)
    params = init_params(k_p, C, dim)

    fwd = jax.jit(lambda inp: ffmlite_forward(inp, params))
    out = jax.block_until_ready(fwd(x))

    assert out.shape == (B, C, H, W), out.shape
    assert out.dtype == jnp.float32
    assert bool(jnp.all(jnp.isfinite(out)))
    print("KERNEL_OK")
</pallas_src>

<mosaic_0001>
module attributes {stable_mosaic.version = 11 : i64} {
  func.func @kernel(%arg0: i32, %arg1: memref<1x4x342xbf16, #tpu.memory_space<vmem>>, %arg2: memref<4x36xbf16, #tpu.memory_space<vmem>>, %arg3: memref<1x4x288xf32, #tpu.memory_space<vmem>>, %arg4: memref<36x288xbf16, #tpu.memory_space<vmem>>) attributes {dimension_semantics = [#tpu.dimension_semantics<parallel>], iteration_bounds = array<i64: 2>, scalar_prefetch = 0 : i64, scratch_operands = 1 : i64, tpu.core_type = #tpu.core_type<tc>, window_params = [{transform_indices = @transform_0, window_bounds = array<i64: 1, 4, 342>}, {pipeline_mode = #tpu.pipeline_mode<synchronous>, transform_indices = @transform_1, window_bounds = array<i64: 4, 36>}, {transform_indices = @transform_2, window_bounds = array<i64: 1, 4, 288>}]} {
    %c0 = arith.constant 0 : index
    %c0_0 = arith.constant 0 : index
    %c0_1 = arith.constant 0 : index
    %0 = vector.load %arg1[%c0, %c0_0, %c0_1] : memref<1x4x342xbf16, #tpu.memory_space<vmem>>, vector<1x4x288xbf16>
    %1 = vector.shape_cast %0 : vector<1x4x288xbf16> to vector<4x288xbf16>
    %c0_2 = arith.constant 0 : index
    %c0_3 = arith.constant 0 : index
    %2 = vector.load %arg4[%c0_2, %c0_3] : memref<36x288xbf16, #tpu.memory_space<vmem>>, vector<4x288xbf16>
    tpu.vector_store %arg4[%c0_2, %c0_3], %1 {strides = array<i32>} : memref<36x288xbf16, #tpu.memory_space<vmem>>, vector<4x288xbf16>,
    %c0_4 = arith.constant 0 : index
    %c0_5 = arith.constant 0 : index
    %c1 = arith.constant 1 : index
    %3 = vector.load %arg1[%c0_4, %c0_5, %c1] : memref<1x4x342xbf16, #tpu.memory_space<vmem>>, vector<1x4x288xbf16>
    %4 = vector.shape_cast %3 : vector<1x4x288xbf16> to vector<4x288xbf16>
    %c4 = arith.constant 4 : index
    %c0_6 = arith.constant 0 : index
    %5 = vector.load %arg4[%c4, %c0_6] : memref<36x288xbf16, #tpu.memory_space<vmem>>, vector<4x288xbf16>
    tpu.vector_store %arg4[%c4, %c0_6], %4 {strides = array<i32>} : memref<36x288xbf16, #tpu.memory_space<vmem>>, vector<4x288xbf16>,
    %c0_7 = arith.constant 0 : index
    %c0_8 = arith.constant 0 : index
    %c2 = arith.constant 2 : index
    %6 = vector.load %arg1[%c0_7, %c0_8, %c2] : memref<1x4x342xbf16, #tpu.memory_space<vmem>>, vector<1x4x288xbf16>
    %7 = vector.shape_cast %6 : vector<1x4x288xbf16> to vector<4x288xbf16>
    %c8 = arith.constant 8 : index
    %c0_9 = arith.constant 0 : index
    %8 = vector.load %arg4[%c8, %c0_9] : memref<36x288xbf16, #tpu.memory_space<vmem>>, vector<4x288xbf16>
    tpu.vector_store %arg4[%c8, %c0_9], %7 {strides = array<i32>} : memref<36x288xbf16, #tpu.memory_space<vmem>>, vector<4x288xbf16>,
    %c0_10 = arith.constant 0 : index
    %c0_11 = arith.constant 0 : index
    %c18 = arith.constant 18 : index
    %9 = vector.load %arg1[%c0_10, %c0_11, %c18] : memref<1x4x342xbf16, #tpu.memory_space<vmem>>, vector<1x4x288xbf16>
    %10 = vector.shape_cast %9 : vector<1x4x288xbf16> to vector<4x288xbf16>
    %c12 = arith.constant 12 : index
    %c0_12 = arith.constant 0 : index
    %11 = vector.load %arg4[%c12, %c0_12] : memref<36x288xbf16, #tpu.memory_space<vmem>>, vector<4x288xbf16>
    tpu.vector_store %arg4[%c12, %c0_12], %10 {strides = array<i32>} : memref<36x288xbf16, #tpu.memory_space<vmem>>, vector<4x288xbf16>,
    %c0_13 = arith.constant 0 : index
    %c0_14 = arith.constant 0 : index
    %c19 = arith.constant 19 : index
    %12 = vector.load %arg1[%c0_13, %c0_14, %c19] : memref<1x4x342xbf16, #tpu.memory_space<vmem>>, vector<1x4x288xbf16>
    %13 = vector.shape_cast %12 : vector<1x4x288xbf16> to vector<4x288xbf16>
    %c16 = arith.constant 16 : index
    %c0_15 = arith.constant 0 : index
    %14 = vector.load %arg4[%c16, %c0_15] : memref<36x288xbf16, #tpu.memory_space<vmem>>, vector<4x288xbf16>
    tpu.vector_store %arg4[%c16, %c0_15], %13 {strides = array<i32>} : memref<36x288xbf16, #tpu.memory_space<vmem>>, vector<4x288xbf16>,
    %c0_16 = arith.constant 0 : index
    %c0_17 = arith.constant 0 : index
    %c20 = arith.constant 20 : index
    %15 = vector.load %arg1[%c0_16, %c0_17, %c20] : memref<1x4x342xbf16, #tpu.memory_space<vmem>>, vector<1x4x288xbf16>
    %16 = vector.shape_cast %15 : vector<1x4x288xbf16> to vector<4x288xbf16>
    %c20_18 = arith.constant 20 : index
    %c0_19 = arith.constant 0 : index
    %17 = vector.load %arg4[%c20_18, %c0_19] : memref<36x288xbf16, #tpu.memory_space<vmem>>, vector<4x288xbf16>
    tpu.vector_store %arg4[%c20_18, %c0_19], %16 {strides = array<i32>} : memref<36x288xbf16, #tpu.memory_space<vmem>>, vector<4x288xbf16>,
    %c0_20 = arith.constant 0 : index
    %c0_21 = arith.constant 0 : index
    %c36 = arith.constant 36 : index
    %18 = vector.load %arg1[%c0_20, %c0_21, %c36] : memref<1x4x342xbf16, #tpu.memory_space<vmem>>, vector<1x4x288xbf16>
    %19 = vector.shape_cast %18 : vector<1x4x288xbf16> to vector<4x288xbf16>
    %c24 = arith.constant 24 : index
    %c0_22 = arith.constant 0 : index
    %20 = vector.load %arg4[%c24, %c0_22] : memref<36x288xbf16, #tpu.memory_space<vmem>>, vector<4x288xbf16>
    tpu.vector_store %arg4[%c24, %c0_22], %19 {strides = array<i32>} : memref<36x288xbf16, #tpu.memory_space<vmem>>, vector<4x288xbf16>,
    %c0_23 = arith.constant 0 : index
    %c0_24 = arith.constant 0 : index
    %c37 = arith.constant 37 : index
    %21 = vector.load %arg1[%c0_23, %c0_24, %c37] : memref<1x4x342xbf16, #tpu.memory_space<vmem>>, vector<1x4x288xbf16>
    %22 = vector.shape_cast %21 : vector<1x4x288xbf16> to vector<4x288xbf16>
    %c28 = arith.constant 28 : index
    %c0_25 = arith.constant 0 : index
    %23 = vector.load %arg4[%c28, %c0_25] : memref<36x288xbf16, #tpu.memory_space<vmem>>, vector<4x288xbf16>
    tpu.vector_store %arg4[%c28, %c0_25], %22 {strides = array<i32>} : memref<36x288xbf16, #tpu.memory_space<vmem>>, vector<4x288xbf16>,
    %c0_26 = arith.constant 0 : index
    %c0_27 = arith.constant 0 : index
    %c38 = arith.constant 38 : index
    %24 = vector.load %arg1[%c0_26, %c0_27, %c38] : memref<1x4x342xbf16, #tpu.memory_space<vmem>>, vector<1x4x288xbf16>
    %25 = vector.shape_cast %24 : vector<1x4x288xbf16> to vector<4x288xbf16>
    %c32 = arith.constant 32 : index
    %c0_28 = arith.constant 0 : index
    %26 = vector.load %arg4[%c32, %c0_28] : memref<36x288xbf16, #tpu.memory_space<vmem>>, vector<4x288xbf16>
    tpu.vector_store %arg4[%c32, %c0_28], %25 {strides = array<i32>} : memref<36x288xbf16, #tpu.memory_space<vmem>>, vector<4x288xbf16>,
    %c0_29 = arith.constant 0 : index
    %c0_30 = arith.constant 0 : index
    %27 = vector.load %arg2[%c0_29, %c0_30] : memref<4x36xbf16, #tpu.memory_space<vmem>>, vector<4x36xbf16>
    %c0_31 = arith.constant 0 : index
    %c0_32 = arith.constant 0 : index
    %28 = vector.load %arg4[%c0_31, %c0_32] : memref<36x288xbf16, #tpu.memory_space<vmem>>, vector<36x288xbf16>
    %cst = arith.constant dense<0.000000e+00> : vector<4x288xf32>
    %29 = tpu.matmul %27, %28, %cst {dimension_numbers = #tpu.dot_dimension_numbers<[1], [0], [0], [1], [0, 0, 1, 1], [], []>} : vector<4x36xbf16>, vector<36x288xbf16>, vector<4x288xf32> -> vector<4x288xf32>
    %c0_33 = arith.constant 0 : index
    %c0_34 = arith.constant 0 : index
    %c0_35 = arith.constant 0 : index
    %30 = vector.load %arg3[%c0_33, %c0_34, %c0_35] : memref<1x4x288xf32, #tpu.memory_space<vmem>>, vector<1x4x288xf32>
    %31 = vector.shape_cast %30 : vector<1x4x288xf32> to vector<4x288xf32>
    %32 = vector.shape_cast %29 : vector<4x288xf32> to vector<1x4x288xf32>
    tpu.vector_store %arg3[%c0_33, %c0_34, %c0_35], %32 {strides = array<i32>} : memref<1x4x288xf32, #tpu.memory_space<vmem>>, vector<1x4x288xf32>,
    return
  }
  func.func @transform_0(%arg0: i32) -> (i32, i32, i32) {
    %c0_i32 = arith.constant 0 : i32
    %c0_i32_0 = arith.constant 0 : i32
    %c0_i32_1 = arith.constant 0 : i32
    return %arg0, %c0_i32, %c0_i32_0 : i32, i32, i32
  }
  func.func @transform_1(%arg0: i32) -> (i32, i32) {
    %c0_i32 = arith.constant 0 : i32
    %c0_i32_0 = arith.constant 0 : i32
    %c0_i32_1 = arith.constant 0 : i32
    return %c0_i32, %c0_i32_0 : i32, i32
  }
  func.func @transform_2(%arg0: i32) -> (i32, i32, i32) {
    %c0_i32 = arith.constant 0 : i32
    %c0_i32_0 = arith.constant 0 : i32
    %c0_i32_1 = arith.constant 0 : i32
    return %arg0, %c0_i32, %c0_i32_0 : i32, i32, i32
  }
}

module attributes {stable_mosaic.version = 11 : i64} {
  func.func @kernel(%arg0: i32, %arg1: memref<1x4x288xbf16, #tpu.memory_space<vmem>>, %arg2: memref<4x4xbf16, #tpu.memory_space<vmem>>, %arg3: memref<4x1xf32, #tpu.memory_space<vmem>>, %arg4: memref<1x4x288xf32, #tpu.memory_space<vmem>>) attributes {dimension_semantics = [#tpu.dimension_semantics<parallel>], iteration_bounds = array<i64: 2>, scalar_prefetch = 0 : i64, scratch_operands = 0 : i64, tpu.core_type = #tpu.core_type<tc>, window_params = [{transform_indices = @transform_0, window_bounds = array<i64: 1, 4, 288>}, {pipeline_mode = #tpu.pipeline_mode<synchronous>, transform_indices = @transform_1, window_bounds = array<i64: 4, 4>}, {pipeline_mode = #tpu.pipeline_mode<synchronous>, transform_indices = @transform_2, window_bounds = array<i64: 4, 1>}, {transform_indices = @transform_3, window_bounds = array<i64: 1, 4, 288>}]} {
    %c0 = arith.constant 0 : index
    %c0_0 = arith.constant 0 : index
    %0 = vector.load %arg2[%c0, %c0_0] : memref<4x4xbf16, #tpu.memory_space<vmem>>, vector<4x4xbf16>
    %c0_1 = arith.constant 0 : index
    %c0_2 = arith.constant 0 : index
    %c0_3 = arith.constant 0 : index
    %1 = vector.load %arg1[%c0_1, %c0_2, %c0_3] : memref<1x4x288xbf16, #tpu.memory_space<vmem>>, vector<1x4x288xbf16>
    %2 = vector.shape_cast %1 : vector<1x4x288xbf16> to vector<4x288xbf16>
    %cst = arith.constant dense<0.000000e+00> : vector<4x288xf32>
    %3 = tpu.matmul %0, %2, %cst {dimension_numbers = #tpu.dot_dimension_numbers<[1], [0], [0], [1], [0, 0, 1, 1], [], []>} : vector<4x4xbf16>, vector<4x288xbf16>, vector<4x288xf32> -> vector<4x288xf32>
    %c0_4 = arith.constant 0 : index
    %c0_5 = arith.constant 0 : index
    %4 = vector.load %arg3[%c0_4, %c0_5] : memref<4x1xf32, #tpu.memory_space<vmem>>, vector<4x1xf32>
    %5 = vector.broadcast %4 : vector<4x1xf32> to vector<4x288xf32>
    %6 = arith.addf %3, %5 : vector<4x288xf32>
    %c0_6 = arith.constant 0 : index
    %c0_7 = arith.constant 0 : index
    %c0_8 = arith.constant 0 : index
    %7 = vector.load %arg4[%c0_6, %c0_7, %c0_8] : memref<1x4x288xf32, #tpu.memory_space<vmem>>, vector<1x4x288xf32>
    %8 = vector.shape_cast %7 : vector<1x4x288xf32> to vector<4x288xf32>
    %9 = vector.shape_cast %6 : vector<4x288xf32> to vector<1x4x288xf32>
    tpu.vector_store %arg4[%c0_6, %c0_7, %c0_8], %9 {strides = array<i32>} : memref<1x4x288xf32, #tpu.memory_space<vmem>>, vector<1x4x288xf32>,
    return
  }
  func.func @transform_0(%arg0: i32) -> (i32, i32, i32) {
    %c0_i32 = arith.constant 0 : i32
    %c0_i32_0 = arith.constant 0 : i32
    %c0_i32_1 = arith.constant 0 : i32
    return %arg0, %c0_i32, %c0_i32_0 : i32, i32, i32
  }
  func.func @transform_1(%arg0: i32) -> (i32, i32) {
    %c0_i32 = arith.constant 0 : i32
    %c0_i32_0 = arith.constant 0 : i32
    %c0_i32_1 = arith.constant 0 : i32
    return %c0_i32, %c0_i32_0 : i32, i32
  }
  func.func @transform_2(%arg0: i32) -> (i32, i32) {
    %c0_i32 = arith.constant 0 : i32
    %c0_i32_0 = arith.constant 0 : i32
    %c0_i32_1 = arith.constant 0 : i32
    return %c0_i32, %c0_i32_0 : i32, i32
  }
  func.func @transform_3(%arg0: i32) -> (i32, i32, i32) {
    %c0_i32 = arith.constant 0 : i32
    %c0_i32_0 = arith.constant 0 : i32
    %c0_i32_1 = arith.constant 0 : i32
    return %arg0, %c0_i32, %c0_i32_0 : i32, i32, i32
  }
}

module attributes {stable_mosaic.version = 11 : i64} {
  func.func @kernel(%arg0: i32, %arg1: memref<1x16x90xbf16, #tpu.memory_space<vmem>>, %arg2: memref<8x64xbf16, #tpu.memory_space<vmem>>, %arg3: memref<1x8x72xf32, #tpu.memory_space<vmem>>, %arg4: memref<64x72xbf16, #tpu.memory_space<vmem>>) attributes {dimension_semantics = [#tpu.dimension_semantics<parallel>], iteration_bounds = array<i64: 2>, scalar_prefetch = 0 : i64, scratch_operands = 1 : i64, tpu.core_type = #tpu.core_type<tc>, window_params = [{transform_indices = @transform_0, window_bounds = array<i64: 1, 16, 90>}, {pipeline_mode = #tpu.pipeline_mode<synchronous>, transform_indices = @transform_1, window_bounds = array<i64: 8, 64>}, {transform_indices = @transform_2, window_bounds = array<i64: 1, 8, 72>}]} {
    %c0 = arith.constant 0 : index
    %c0_0 = arith.constant 0 : index
    %c0_1 = arith.constant 0 : index
    %0 = vector.load %arg1[%c0, %c0_0, %c0_1] : memref<1x16x90xbf16, #tpu.memory_space<vmem>>, vector<1x16x72xbf16>
    %1 = vector.shape_cast %0 : vector<1x16x72xbf16> to vector<16x72xbf16>
    %c0_2 = arith.constant 0 : index
    %c0_3 = arith.constant 0 : index
    %2 = vector.load %arg4[%c0_2, %c0_3] : memref<64x72xbf16, #tpu.memory_space<vmem>>, vector<16x72xbf16>
    tpu.vector_store %arg4[%c0_2, %c0_3], %1 {strides = array<i32>} : memref<64x72xbf16, #tpu.memory_space<vmem>>, vector<16x72xbf16>,
    %c0_4 = arith.constant 0 : index
    %c0_5 = arith.constant 0 : index
    %c1 = arith.constant 1 : index
    %3 = vector.load %arg1[%c0_4, %c0_5, %c1] : memref<1x16x90xbf16, #tpu.memory_space<vmem>>, vector<1x16x72xbf16>
    %4 = vector.shape_cast %3 : vector<1x16x72xbf16> to vector<16x72xbf16>
    %c16 = arith.constant 16 : index
    %c0_6 = arith.constant 0 : index
    %5 = vector.load %arg4[%c16, %c0_6] : memref<64x72xbf16, #tpu.memory_space<vmem>>, vector<16x72xbf16>
    tpu.vector_store %arg4[%c16, %c0_6], %4 {strides = array<i32>} : memref<64x72xbf16, #tpu.memory_space<vmem>>, vector<16x72xbf16>,
    %c0_7 = arith.constant 0 : index
    %c0_8 = arith.constant 0 : index
    %c9 = arith.constant 9 : index
    %6 = vector.load %arg1[%c0_7, %c0_8, %c9] : memref<1x16x90xbf16, #tpu.memory_space<vmem>>, vector<1x16x72xbf16>
    %7 = vector.shape_cast %6 : vector<1x16x72xbf16> to vector<16x72xbf16>
    %c32 = arith.constant 32 : index
    %c0_9 = arith.constant 0 : index
    %8 = vector.load %arg4[%c32, %c0_9] : memref<64x72xbf16, #tpu.memory_space<vmem>>, vector<16x72xbf16>
    tpu.vector_store %arg4[%c32, %c0_9], %7 {strides = array<i32>} : memref<64x72xbf16, #tpu.memory_space<vmem>>, vector<16x72xbf16>,
    %c0_10 = arith.constant 0 : index
    %c0_11 = arith.constant 0 : index
    %c10 = arith.constant 10 : index
    %9 = vector.load %arg1[%c0_10, %c0_11, %c10] : memref<1x16x90xbf16, #tpu.memory_space<vmem>>, vector<1x16x72xbf16>
    %10 = vector.shape_cast %9 : vector<1x16x72xbf16> to vector<16x72xbf16>
    %c48 = arith.constant 48 : index
    %c0_12 = arith.constant 0 : index
    %11 = vector.load %arg4[%c48, %c0_12] : memref<64x72xbf16, #tpu.memory_space<vmem>>, vector<16x72xbf16>
    tpu.vector_store %arg4[%c48, %c0_12], %10 {strides = array<i32>} : memref<64x72xbf16, #tpu.memory_space<vmem>>, vector<16x72xbf16>,
    %c0_13 = arith.constant 0 : index
    %c0_14 = arith.constant 0 : index
    %12 = vector.load %arg2[%c0_13, %c0_14] : memref<8x64xbf16, #tpu.memory_space<vmem>>, vector<8x64xbf16>
    %c0_15 = arith.constant 0 : index
    %c0_16 = arith.constant 0 : index
    %13 = vector.load %arg4[%c0_15, %c0_16] : memref<64x72xbf16, #tpu.memory_space<vmem>>, vector<64x72xbf16>
    %cst = arith.constant dense<0.000000e+00> : vector<8x72xf32>
    %14 = tpu.matmul %12, %13, %cst {dimension_numbers = #tpu.dot_dimension_numbers<[1], [0], [0], [1], [0, 0, 1, 1], [], []>} : vector<8x64xbf16>, vector<64x72xbf16>, vector<8x72xf32> -> vector<8x72xf32>
    %c0_17 = arith.constant 0 : index
    %c0_18 = arith.constant 0 : index
    %c0_19 = arith.constant 0 : index
    %15 = vector.load %arg3[%c0_17, %c0_18, %c0_19] : memref<1x8x72xf32, #tpu.memory_space<vmem>>, vector<1x8x72xf32>
    %16 = vector.shape_cast %15 : vector<1x8x72xf32> to vector<8x72xf32>
    %17 = vector.shape_cast %14 : vector<8x72xf32> to vector<1x8x72xf32>
    tpu.vector_store %arg3[%c0_17, %c0_18, %c0_19], %17 {strides = array<i32>} : memref<1x8x72xf32, #tpu.memory_space<vmem>>, vector<1x8x72xf32>,
    return
  }
  func.func @transform_0(%arg0: i32) -> (i32, i32, i32) {
    %c0_i32 = arith.constant 0 : i32
    %c0_i32_0 = arith.constant 0 : i32
    %c0_i32_1 = arith.constant 0 : i32
    return %arg0, %c0_i32, %c0_i32_0 : i32, i32, i32
  }
  func.func @transform_1(%arg0: i32) -> (i32, i32) {
    %c0_i32 = arith.constant 0 : i32
    %c0_i32_0 = arith.constant 0 : i32
    %c0_i32_1 = arith.constant 0 : i32
    return %c0_i32, %c0_i32_0 : i32, i32
  }
  func.func @transform_2(%arg0: i32) -> (i32, i32, i32) {
    %c0_i32 = arith.constant 0 : i32
    %c0_i32_0 = arith.constant 0 : i32
    %c0_i32_1 = arith.constant 0 : i32
    return %arg0, %c0_i32, %c0_i32_0 : i32, i32, i32
  }
}

module attributes {stable_mosaic.version = 11 : i64} {
  func.func @kernel(%arg0: i32, %arg1: memref<1x8x80xbf16, #tpu.memory_space<vmem>>, %arg2: memref<8x8xbf16, #tpu.memory_space<vmem>>, %arg3: memref<8x1xf32, #tpu.memory_space<vmem>>, %arg4: memref<1x8x80xf32, #tpu.memory_space<vmem>>) attributes {dimension_semantics = [#tpu.dimension_semantics<parallel>], iteration_bounds = array<i64: 2>, scalar_prefetch = 0 : i64, scratch_operands = 0 : i64, tpu.core_type = #tpu.core_type<tc>, window_params = [{transform_indices = @transform_0, window_bounds = array<i64: 1, 8, 80>}, {pipeline_mode = #tpu.pipeline_mode<synchronous>, transform_indices = @transform_1, window_bounds = array<i64: 8, 8>}, {pipeline_mode = #tpu.pipeline_mode<synchronous>, transform_indices = @transform_2, window_bounds = array<i64: 8, 1>}, {transform_indices = @transform_3, window_bounds = array<i64: 1, 8, 80>}]} {
    %c0 = arith.constant 0 : index
    %c0_0 = arith.constant 0 : index
    %0 = vector.load %arg2[%c0, %c0_0] : memref<8x8xbf16, #tpu.memory_space<vmem>>, vector<8x8xbf16>
    %c0_1 = arith.constant 0 : index
    %c0_2 = arith.constant 0 : index
    %c0_3 = arith.constant 0 : index
    %1 = vector.load %arg1[%c0_1, %c0_2, %c0_3] : memref<1x8x80xbf16, #tpu.memory_space<vmem>>, vector<1x8x80xbf16>
    %2 = vector.shape_cast %1 : vector<1x8x80xbf16> to vector<8x80xbf16>
    %cst = arith.constant dense<0.000000e+00> : vector<8x80xf32>
    %3 = tpu.matmul %0, %2, %cst {dimension_numbers = #tpu.dot_dimension_numbers<[1], [0], [0], [1], [0, 0, 1, 1], [], []>} : vector<8x8xbf16>, vector<8x80xbf16>, vector<8x80xf32> -> vector<8x80xf32>
    %c0_4 = arith.constant 0 : index
    %c0_5 = arith.constant 0 : index
    %4 = vector.load %arg3[%c0_4, %c0_5] : memref<8x1xf32, #tpu.memory_space<vmem>>, vector<8x1xf32>
    %5 = vector.broadcast %4 : vector<8x1xf32> to vector<8x80xf32>
    %6 = arith.addf %3, %5 : vector<8x80xf32>
    %c0_6 = arith.constant 0 : index
    %c0_7 = arith.constant 0 : index
    %c0_8 = arith.constant 0 : index
    %7 = vector.load %arg4[%c0_6, %c0_7, %c0_8] : memref<1x8x80xf32, #tpu.memory_space<vmem>>, vector<1x8x80xf32>
    %8 = vector.shape_cast %7 : vector<1x8x80xf32> to vector<8x80xf32>
    %9 = vector.shape_cast %6 : vector<8x80xf32> to vector<1x8x80xf32>
    tpu.vector_store %arg4[%c0_6, %c0_7, %c0_8], %9 {strides = array<i32>} : memref<1x8x80xf32, #tpu.memory_space<vmem>>, vector<1x8x80xf32>,
    return
  }
  func.func @transform_0(%arg0: i32) -> (i32, i32, i32) {
    %c0_i32 = arith.constant 0 : i32
    %c0_i32_0 = arith.constant 0 : i32
    %c0_i32_1 = arith.constant 0 : i32
    return %arg0, %c0_i32, %c0_i32_0 : i32, i32, i32
  }
  func.func @transform_1(%arg0: i32) -> (i32, i32) {
    %c0_i32 = arith.constant 0 : i32
    %c0_i32_0 = arith.constant 0 : i32
    %c0_i32_1 = arith.constant 0 : i32
    return %c0_i32, %c0_i32_0 : i32, i32
  }
  func.func @transform_2(%arg0: i32) -> (i32, i32) {
    %c0_i32 = arith.constant 0 : i32
    %c0_i32_0 = arith.constant 0 : i32
    %c0_i32_1 = arith.constant 0 : i32
    return %c0_i32, %c0_i32_0 : i32, i32
  }
  func.func @transform_3(%arg0: i32) -> (i32, i32, i32) {
    %c0_i32 = arith.constant 0 : i32
    %c0_i32_0 = arith.constant 0 : i32
    %c0_i32_1 = arith.constant 0 : i32
    return %arg0, %c0_i32, %c0_i32_0 : i32, i32, i32
  }
}

module attributes {stable_mosaic.version = 11 : i64} {
  func.func @kernel(%arg0: i32, %arg1: memref<1x8x64xbf16, #tpu.memory_space<vmem>>, %arg2: memref<16x8xbf16, #tpu.memory_space<vmem>>, %arg3: memref<16x1xf32, #tpu.memory_space<vmem>>, %arg4: memref<1x16x64xbf16, #tpu.memory_space<vmem>>) attributes {dimension_semantics = [#tpu.dimension_semantics<parallel>], iteration_bounds = array<i64: 2>, scalar_prefetch = 0 : i64, scratch_operands = 0 : i64, tpu.core_type = #tpu.core_type<tc>, window_params = [{transform_indices = @transform_0, window_bounds = array<i64: 1, 8, 64>}, {pipeline_mode = #tpu.pipeline_mode<synchronous>, transform_indices = @transform_1, window_bounds = array<i64: 16, 8>}, {pipeline_mode = #tpu.pipeline_mode<synchronous>, transform_indices = @transform_2, window_bounds = array<i64: 16, 1>}, {transform_indices = @transform_3, window_bounds = array<i64: 1, 16, 64>}]} {
    %c0 = arith.constant 0 : index
    %c0_0 = arith.constant 0 : index
    %0 = vector.load %arg2[%c0, %c0_0] : memref<16x8xbf16, #tpu.memory_space<vmem>>, vector<16x8xbf16>
    %c0_1 = arith.constant 0 : index
    %c0_2 = arith.constant 0 : index
    %c0_3 = arith.constant 0 : index
    %1 = vector.load %arg1[%c0_1, %c0_2, %c0_3] : memref<1x8x64xbf16, #tpu.memory_space<vmem>>, vector<1x8x64xbf16>
    %2 = vector.shape_cast %1 : vector<1x8x64xbf16> to vector<8x64xbf16>
    %cst = arith.constant dense<0.000000e+00> : vector<16x64xf32>
    %3 = tpu.matmul %0, %2, %cst {dimension_numbers = #tpu.dot_dimension_numbers<[1], [0], [0], [1], [0, 0, 1, 1], [], []>} : vector<16x8xbf16>, vector<8x64xbf16>, vector<16x64xf32> -> vector<16x64xf32>
    %c0_4 = arith.constant 0 : index
    %c0_5 = arith.constant 0 : index
    %4 = vector.load %arg3[%c0_4, %c0_5] : memref<16x1xf32, #tpu.memory_space<vmem>>, vector<16x1xf32>
    %5 = vector.broadcast %4 : vector<16x1xf32> to vector<16x64xf32>
    %6 = arith.addf %3, %5 : vector<16x64xf32>
    %7 = arith.truncf %6 : vector<16x64xf32> to vector<16x64xbf16>
    %c0_6 = arith.constant 0 : index
    %c0_7 = arith.constant 0 : index
    %c0_8 = arith.constant 0 : index
    %8 = vector.load %arg4[%c0_6, %c0_7, %c0_8] : memref<1x16x64xbf16, #tpu.memory_space<vmem>>, vector<1x16x64xbf16>
    %9 = vector.shape_cast %8 : vector<1x16x64xbf16> to vector<16x64xbf16>
    %10 = vector.shape_cast %7 : vector<16x64xbf16> to vector<1x16x64xbf16>
    tpu.vector_store %arg4[%c0_6, %c0_7, %c0_8], %10 {strides = array<i32>} : memref<1x16x64xbf16, #tpu.memory_space<vmem>>, vector<1x16x64xbf16>,
    return
  }
  func.func @transform_0(%arg0: i32) -> (i32, i32, i32) {
    %c0_i32 = arith.constant 0 : i32
    %c0_i32_0 = arith.constant 0 : i32
    %c0_i32_1 = arith.constant 0 : i32
    return %arg0, %c0_i32, %c0_i32_0 : i32, i32, i32
  }
  func.func @transform_1(%arg0: i32) -> (i32, i32) {
    %c0_i32 = arith.constant 0 : i32
    %c0_i32_0 = arith.constant 0 : i32
    %c0_i32_1 = arith.constant 0 : i32
    return %c0_i32, %c0_i32_0 : i32, i32
  }
  func.func @transform_2(%arg0: i32) -> (i32, i32) {
    %c0_i32 = arith.constant 0 : i32
    %c0_i32_0 = arith.constant 0 : i32
    %c0_i32_1 = arith.constant 0 : i32
    return %c0_i32, %c0_i32_0 : i32, i32
  }
  func.func @transform_3(%arg0: i32) -> (i32, i32, i32) {
    %c0_i32 = arith.constant 0 : i32
    %c0_i32_0 = arith.constant 0 : i32
    %c0_i32_1 = arith.constant 0 : i32
    return %arg0, %c0_i32, %c0_i32_0 : i32, i32, i32
  }
}

module attributes {stable_mosaic.version = 11 : i64} {
  func.func @kernel(%arg0: i32, %arg1: memref<1x4x256xbf16, #tpu.memory_space<vmem>>, %arg2: memref<1x4x256xbf16, #tpu.memory_space<vmem>>, %arg3: memref<4x8xbf16, #tpu.memory_space<vmem>>, %arg4: memref<1x4x256xbf16, #tpu.memory_space<vmem>>, %arg5: memref<8x256xbf16, #tpu.memory_space<vmem>>) attributes {dimension_semantics = [#tpu.dimension_semantics<parallel>], iteration_bounds = array<i64: 2>, scalar_prefetch = 0 : i64, scratch_operands = 1 : i64, tpu.core_type = #tpu.core_type<tc>, window_params = [{transform_indices = @transform_0, window_bounds = array<i64: 1, 4, 256>}, {transform_indices = @transform_1, window_bounds = array<i64: 1, 4, 256>}, {pipeline_mode = #tpu.pipeline_mode<synchronous>, transform_indices = @transform_2, window_bounds = array<i64: 4, 8>}, {transform_indices = @transform_3, window_bounds = array<i64: 1, 4, 256>}]} {
    %c0 = arith.constant 0 : index
    %c0_0 = arith.constant 0 : index
    %c0_1 = arith.constant 0 : index
    %0 = vector.load %arg1[%c0, %c0_0, %c0_1] : memref<1x4x256xbf16, #tpu.memory_space<vmem>>, vector<1x4x256xbf16>
    %1 = vector.shape_cast %0 : vector<1x4x256xbf16> to vector<4x256xbf16>
    %c0_2 = arith.constant 0 : index
    %c0_3 = arith.constant 0 : index
    %2 = vector.load %arg5[%c0_2, %c0_3] : memref<8x256xbf16, #tpu.memory_space<vmem>>, vector<4x256xbf16>
    tpu.vector_store %arg5[%c0_2, %c0_3], %1 {strides = array<i32>} : memref<8x256xbf16, #tpu.memory_space<vmem>>, vector<4x256xbf16>,
    %c0_4 = arith.constant 0 : index
    %c0_5 = arith.constant 0 : index
    %c0_6 = arith.constant 0 : index
    %3 = vector.load %arg2[%c0_4, %c0_5, %c0_6] : memref<1x4x256xbf16, #tpu.memory_space<vmem>>, vector<1x4x256xbf16>
    %4 = vector.shape_cast %3 : vector<1x4x256xbf16> to vector<4x256xbf16>
    %c4 = arith.constant 4 : index
    %c0_7 = arith.constant 0 : index
    %5 = vector.load %arg5[%c4, %c0_7] : memref<8x256xbf16, #tpu.memory_space<vmem>>, vector<4x256xbf16>
    tpu.vector_store %arg5[%c4, %c0_7], %4 {strides = array<i32>} : memref<8x256xbf16, #tpu.memory_space<vmem>>, vector<4x256xbf16>,
    %c0_8 = arith.constant 0 : index
    %c0_9 = arith.constant 0 : index
    %6 = vector.load %arg3[%c0_8, %c0_9] : memref<4x8xbf16, #tpu.memory_space<vmem>>, vector<4x8xbf16>
    %c0_10 = arith.constant 0 : index
    %c0_11 = arith.constant 0 : index
    %7 = vector.load %arg5[%c0_10, %c0_11] : memref<8x256xbf16, #tpu.memory_space<vmem>>, vector<8x256xbf16>
    %cst = arith.constant dense<0.000000e+00> : vector<4x256xf32>
    %8 = tpu.matmul %6, %7, %cst {dimension_numbers = #tpu.dot_dimension_numbers<[1], [0], [0], [1], [0, 0, 1, 1], [], []>} : vector<4x8xbf16>, vector<8x256xbf16>, vector<4x256xf32> -> vector<4x256xf32>
    %9 = arith.truncf %8 : vector<4x256xf32> to vector<4x256xbf16>
    %c0_12 = arith.constant 0 : index
    %c0_13 = arith.constant 0 : index
    %c0_14 = arith.constant 0 : index
    %10 = vector.load %arg4[%c0_12, %c0_13, %c0_14] : memref<1x4x256xbf16, #tpu.memory_space<vmem>>, vector<1x4x256xbf16>
    %11 = vector.shape_cast %10 : vector<1x4x256xbf16> to vector<4x256xbf16>
    %12 = vector.shape_cast %9 : vector<4x256xbf16> to vector<1x4x256xbf16>
    tpu.vector_store %arg4[%c0_12, %c0_13, %c0_14], %12 {strides = array<i32>} : memref<1x4x256xbf16, #tpu.memory_space<vmem>>, vector<1x4x256xbf16>,
    return
  }
  func.func @transform_0(%arg0: i32) -> (i32, i32, i32) {
    %c0_i32 = arith.constant 0 : i32
    %c0_i32_0 = arith.constant 0 : i32
    %c0_i32_1 = arith.constant 0 : i32
    return %arg0, %c0_i32, %c0_i32_0 : i32, i32, i32
  }
  func.func @transform_1(%arg0: i32) -> (i32, i32, i32) {
    %c0_i32 = arith.constant 0 : i32
    %c0_i32_0 = arith.constant 0 : i32
    %c0_i32_1 = arith.constant 0 : i32
    return %arg0, %c0_i32, %c0_i32_0 : i32, i32, i32
  }
  func.func @transform_2(%arg0: i32) -> (i32, i32) {
    %c0_i32 = arith.constant 0 : i32
    %c0_i32_0 = arith.constant 0 : i32
    %c0_i32_1 = arith.constant 0 : i32
    return %c0_i32, %c0_i32_0 : i32, i32
  }
  func.func @transform_3(%arg0: i32) -> (i32, i32, i32) {
    %c0_i32 = arith.constant 0 : i32
    %c0_i32_0 = arith.constant 0 : i32
    %c0_i32_1 = arith.constant 0 : i32
    return %arg0, %c0_i32, %c0_i32_0 : i32, i32, i32
  }
}

module attributes {stable_mosaic.version = 11 : i64} {
  func.func @kernel(%arg0: i32, %arg1: memref<1x4x342xbf16, #tpu.memory_space<vmem>>, %arg2: memref<4x36xbf16, #tpu.memory_space<vmem>>, %arg3: memref<1x4x288xf32, #tpu.memory_space<vmem>>, %arg4: memref<1x4x288xf32, #tpu.memory_space<vmem>>, %arg5: memref<36x288xbf16, #tpu.memory_space<vmem>>) attributes {dimension_semantics = [#tpu.dimension_semantics<parallel>], iteration_bounds = array<i64: 2>, scalar_prefetch = 0 : i64, scratch_operands = 1 : i64, tpu.core_type = #tpu.core_type<tc>, window_params = [{transform_indices = @transform_0, window_bounds = array<i64: 1, 4, 342>}, {pipeline_mode = #tpu.pipeline_mode<synchronous>, transform_indices = @transform_1, window_bounds = array<i64: 4, 36>}, {transform_indices = @transform_2, window_bounds = array<i64: 1, 4, 288>}, {transform_indices = @transform_3, window_bounds = array<i64: 1, 4, 288>}]} {
    %c0 = arith.constant 0 : index
    %c0_0 = arith.constant 0 : index
    %c0_1 = arith.constant 0 : index
    %0 = vector.load %arg1[%c0, %c0_0, %c0_1] : memref<1x4x342xbf16, #tpu.memory_space<vmem>>, vector<1x4x288xbf16>
    %1 = vector.shape_cast %0 : vector<1x4x288xbf16> to vector<4x288xbf16>
    %c0_2 = arith.constant 0 : index
    %c0_3 = arith.constant 0 : index
    %2 = vector.load %arg5[%c0_2, %c0_3] : memref<36x288xbf16, #tpu.memory_space<vmem>>, vector<4x288xbf16>
    tpu.vector_store %arg5[%c0_2, %c0_3], %1 {strides = array<i32>} : memref<36x288xbf16, #tpu.memory_space<vmem>>, vector<4x288xbf16>,
    %c0_4 = arith.constant 0 : index
    %c0_5 = arith.constant 0 : index
    %c1 = arith.constant 1 : index
    %3 = vector.load %arg1[%c0_4, %c0_5, %c1] : memref<1x4x342xbf16, #tpu.memory_space<vmem>>, vector<1x4x288xbf16>
    %4 = vector.shape_cast %3 : vector<1x4x288xbf16> to vector<4x288xbf16>
    %c4 = arith.constant 4 : index
    %c0_6 = arith.constant 0 : index
    %5 = vector.load %arg5[%c4, %c0_6] : memref<36x288xbf16, #tpu.memory_space<vmem>>, vector<4x288xbf16>
    tpu.vector_store %arg5[%c4, %c0_6], %4 {strides = array<i32>} : memref<36x288xbf16, #tpu.memory_space<vmem>>, vector<4x288xbf16>,
    %c0_7 = arith.constant 0 : index
    %c0_8 = arith.constant 0 : index
    %c2 = arith.constant 2 : index
    %6 = vector.load %arg1[%c0_7, %c0_8, %c2] : memref<1x4x342xbf16, #tpu.memory_space<vmem>>, vector<1x4x288xbf16>
    %7 = vector.shape_cast %6 : vector<1x4x288xbf16> to vector<4x288xbf16>
    %c8 = arith.constant 8 : index
    %c0_9 = arith.constant 0 : index
    %8 = vector.load %arg5[%c8, %c0_9] : memref<36x288xbf16, #tpu.memory_space<vmem>>, vector<4x288xbf16>
    tpu.vector_store %arg5[%c8, %c0_9], %7 {strides = array<i32>} : memref<36x288xbf16, #tpu.memory_space<vmem>>, vector<4x288xbf16>,
    %c0_10 = arith.constant 0 : index
    %c0_11 = arith.constant 0 : index
    %c18 = arith.constant 18 : index
    %9 = vector.load %arg1[%c0_10, %c0_11, %c18] : memref<1x4x342xbf16, #tpu.memory_space<vmem>>, vector<1x4x288xbf16>
    %10 = vector.shape_cast %9 : vector<1x4x288xbf16> to vector<4x288xbf16>
    %c12 = arith.constant 12 : index
    %c0_12 = arith.constant 0 : index
    %11 = vector.load %arg5[%c12, %c0_12] : memref<36x288xbf16, #tpu.memory_space<vmem>>, vector<4x288xbf16>
    tpu.vector_store %arg5[%c12, %c0_12], %10 {strides = array<i32>} : memref<36x288xbf16, #tpu.memory_space<vmem>>, vector<4x288xbf16>,
    %c0_13 = arith.constant 0 : index
    %c0_14 = arith.constant 0 : index
    %c19 = arith.constant 19 : index
    %12 = vector.load %arg1[%c0_13, %c0_14, %c19] : memref<1x4x342xbf16, #tpu.memory_space<vmem>>, vector<1x4x288xbf16>
    %13 = vector.shape_cast %12 : vector<1x4x288xbf16> to vector<4x288xbf16>
    %c16 = arith.constant 16 : index
    %c0_15 = arith.constant 0 : index
    %14 = vector.load %arg5[%c16, %c0_15] : memref<36x288xbf16, #tpu.memory_space<vmem>>, vector<4x288xbf16>
    tpu.vector_store %arg5[%c16, %c0_15], %13 {strides = array<i32>} : memref<36x288xbf16, #tpu.memory_space<vmem>>, vector<4x288xbf16>,
    %c0_16 = arith.constant 0 : index
    %c0_17 = arith.constant 0 : index
    %c20 = arith.constant 20 : index
    %15 = vector.load %arg1[%c0_16, %c0_17, %c20] : memref<1x4x342xbf16, #tpu.memory_space<vmem>>, vector<1x4x288xbf16>
    %16 = vector.shape_cast %15 : vector<1x4x288xbf16> to vector<4x288xbf16>
    %c20_18 = arith.constant 20 : index
    %c0_19 = arith.constant 0 : index
    %17 = vector.load %arg5[%c20_18, %c0_19] : memref<36x288xbf16, #tpu.memory_space<vmem>>, vector<4x288xbf16>
    tpu.vector_store %arg5[%c20_18, %c0_19], %16 {strides = array<i32>} : memref<36x288xbf16, #tpu.memory_space<vmem>>, vector<4x288xbf16>,
    %c0_20 = arith.constant 0 : index
    %c0_21 = arith.constant 0 : index
    %c36 = arith.constant 36 : index
    %18 = vector.load %arg1[%c0_20, %c0_21, %c36] : memref<1x4x342xbf16, #tpu.memory_space<vmem>>, vector<1x4x288xbf16>
    %19 = vector.shape_cast %18 : vector<1x4x288xbf16> to vector<4x288xbf16>
    %c24 = arith.constant 24 : index
    %c0_22 = arith.constant 0 : index
    %20 = vector.load %arg5[%c24, %c0_22] : memref<36x288xbf16, #tpu.memory_space<vmem>>, vector<4x288xbf16>
    tpu.vector_store %arg5[%c24, %c0_22], %19 {strides = array<i32>} : memref<36x288xbf16, #tpu.memory_space<vmem>>, vector<4x288xbf16>,
    %c0_23 = arith.constant 0 : index
    %c0_24 = arith.constant 0 : index
    %c37 = arith.constant 37 : index
    %21 = vector.load %arg1[%c0_23, %c0_24, %c37] : memref<1x4x342xbf16, #tpu.memory_space<vmem>>, vector<1x4x288xbf16>
    %22 = vector.shape_cast %21 : vector<1x4x288xbf16> to vector<4x288xbf16>
    %c28 = arith.constant 28 : index
    %c0_25 = arith.constant 0 : index
    %23 = vector.load %arg5[%c28, %c0_25] : memref<36x288xbf16, #tpu.memory_space<vmem>>, vector<4x288xbf16>
    tpu.vector_store %arg5[%c28, %c0_25], %22 {strides = array<i32>} : memref<36x288xbf16, #tpu.memory_space<vmem>>, vector<4x288xbf16>,
    %c0_26 = arith.constant 0 : index
    %c0_27 = arith.constant 0 : index
    %c38 = arith.constant 38 : index
    %24 = vector.load %arg1[%c0_26, %c0_27, %c38] : memref<1x4x342xbf16, #tpu.memory_space<vmem>>, vector<1x4x288xbf16>
    %25 = vector.shape_cast %24 : vector<1x4x288xbf16> to vector<4x288xbf16>
    %c32 = arith.constant 32 : index
    %c0_28 = arith.constant 0 : index
    %26 = vector.load %arg5[%c32, %c0_28] : memref<36x288xbf16, #tpu.memory_space<vmem>>, vector<4x288xbf16>
    tpu.vector_store %arg5[%c32, %c0_28], %25 {strides = array<i32>} : memref<36x288xbf16, #tpu.memory_space<vmem>>, vector<4x288xbf16>,
    %c0_29 = arith.constant 0 : index
    %c0_30 = arith.constant 0 : index
    %27 = vector.load %arg2[%c0_29, %c0_30] : memref<4x36xbf16, #tpu.memory_space<vmem>>, vector<4x36xbf16>
    %c0_31 = arith.constant 0 : index
    %c0_32 = arith.constant 0 : index
    %28 = vector.load %arg5[%c0_31, %c0_32] : memref<36x288xbf16, #tpu.memory_space<vmem>>, vector<36x288xbf16>
    %cst = arith.constant dense<0.000000e+00> : vector<4x288xf32>
    %29 = tpu.matmul %27, %28, %cst {dimension_numbers = #tpu.dot_dimension_numbers<[1], [0], [0], [1], [0, 0, 1, 1], [], []>} : vector<4x36xbf16>, vector<36x288xbf16>, vector<4x288xf32> -> vector<4x288xf32>
    %c0_33 = arith.constant 0 : index
    %c0_34 = arith.constant 0 : index
    %c0_35 = arith.constant 0 : index
    %30 = vector.load %arg3[%c0_33, %c0_34, %c0_35] : memref<1x4x288xf32, #tpu.memory_space<vmem>>, vector<1x4x288xf32>
    %31 = vector.shape_cast %30 : vector<1x4x288xf32> to vector<4x288xf32>
    %32 = arith.addf %29, %31 : vector<4x288xf32>
    %c0_36 = arith.constant 0 : index
    %c0_37 = arith.constant 0 : index
    %c0_38 = arith.constant 0 : index
    %33 = vector.load %arg4[%c0_36, %c0_37, %c0_38] : memref<1x4x288xf32, #tpu.memory_space<vmem>>, vector<1x4x288xf32>
    %34 = vector.shape_cast %33 : vector<1x4x288xf32> to vector<4x288xf32>
    %35 = vector.shape_cast %32 : vector<4x288xf32> to vector<1x4x288xf32>
    tpu.vector_store %arg4[%c0_36, %c0_37, %c0_38], %35 {strides = array<i32>} : memref<1x4x288xf32, #tpu.memory_space<vmem>>, vector<1x4x288xf32>,
    return
  }
  func.func @transform_0(%arg0: i32) -> (i32, i32, i32) {
    %c0_i32 = arith.constant 0 : i32
    %c0_i32_0 = arith.constant 0 : i32
    %c0_i32_1 = arith.constant 0 : i32
    return %arg0, %c0_i32, %c0_i32_0 : i32, i32, i32
  }
  func.func @transform_1(%arg0: i32) -> (i32, i32) {
    %c0_i32 = arith.constant 0 : i32
    %c0_i32_0 = arith.constant 0 : i32
    %c0_i32_1 = arith.constant 0 : i32
    return %c0_i32, %c0_i32_0 : i32, i32
  }
  func.func @transform_2(%arg0: i32) -> (i32, i32, i32) {
    %c0_i32 = arith.constant 0 : i32
    %c0_i32_0 = arith.constant 0 : i32
    %c0_i32_1 = arith.constant 0 : i32
    return %arg0, %c0_i32, %c0_i32_0 : i32, i32, i32
  }
  func.func @transform_3(%arg0: i32) -> (i32, i32, i32) {
    %c0_i32 = arith.constant 0 : i32
    %c0_i32_0 = arith.constant 0 : i32
    %c0_i32_1 = arith.constant 0 : i32
    return %arg0, %c0_i32, %c0_i32_0 : i32, i32, i32
  }
}

</mosaic_0001>

<llo_original>
// kernel: _lambda_.7
$region0: #{_lambda_.7}
  #allocation0 [shape = 'u32[]', space=smem, size = 0x4, offset = 0x4, fixed_abs, tag = 'smem constant byte address 0x4 - core index']
  #allocation1 [shape = 'u32[72,128]{1,0:T(1,128)}', space=vmem, size = 0x9000, scoped, tag = 'internal scratch']
  #allocation2 [shape = 'bf16[36,288]{1,0:T(8,128)(2,1)}', space=vmem, size = 0x7800, scoped, tag = 'scratch operand']
  %s0 = inlined_call_operand.vmem [shape: bf16[2,4,342], index: 0, kind: input, shape index: {}]
  %s1 = inlined_call_operand.vmem [shape: bf16[4,36], index: 1, kind: input, shape index: {}]
  %s2 = inlined_call_operand.vmem [shape: f32[2,4,288], index: 2, kind: output, shape index: {}]
  %s3 = sld [smem:[#allocation0]]
  $region41: #{_lambda_.7} parent=0
    _
  %s5 = ssub.s32 1, %s3
  %s6 = scalar_select 0, %s5, %s3
  loop: start=0, step=1, limit=4
  $region2: #{_lambda_.7} parent=0 // loop_pre_header
    _
  $region3: #{_lambda_.7} parent=0 // loop_header
    %s8 = sphi 0, %s12
    %p9 = scmp.ge.s32.totalorder %s8, 4
    %s18 = sphi 0, %s20
    %s21 = sphi 0, %s18
    %s22 = sphi 0, %s21
    %s38 = sphi 0, %s22
    %s42 = sphi 0, %s42
    %s44 = sphi 0, %s42
    %s45 = sphi 0, %s44
    %s59 = sphi 0, %s45
    %s65 = sphi 0, %s67
    %s68 = sphi 0, %s65
    %s69 = sphi 0, %s68
    %s85 = sphi 0, %s69
  $region4: #{_lambda_.7} parent=0 // loop_header_branch
    %11 = sbr.rel (%p9) target = $region8
  $region5: #{_lambda_.7} parent=0 // loop_body
    %s13 = ssub.s32 %s8, 1
    %s14 = ssub.s32 %s8, 2
    %s15 = sadd.s32 %s8, 1
    %s16 = ssub.s32 %s8, %s15
    %p17 = scmp.eq.s32.totalorder %s16, 0
    %s19 = sadd.s32 %s18, 1
    %s20 = scalar_select %p17, %s18, %s19
    %p23 = pneg %p17
    %p24 = scmp.eq.s32.totalorder %s8, 1
    %p25 = por %p23, %p24
    %p26 = scmp.ne.s32.totalorder %s18, %s21
    %p27 = scmp.eq.s32.totalorder %s8, 0
    %p28 = por %p26, %p27
    %p29 = scmp.ne.s32.totalorder %s18, %s21
    %p30 = scmp.eq.s32.totalorder %s13, 1
    %p31 = por %p29, %p30
    %p32 = scmp.ne.s32.totalorder %s21, %s22
    %p33 = scmp.eq.s32.totalorder %s13, 0
    %p34 = por %p32, %p33
    %p35 = scmp.ne.s32.totalorder %s21, %s22
    %p36 = scmp.eq.s32.totalorder %s14, 1
    %p37 = por %p35, %p36
    %p39 = scmp.ne.s32.totalorder %s22, %s38
    %p40 = scmp.eq.s32.totalorder %s14, 0
    %p41 = por %p39, %p40
    %s43 = sadd.s32 %s42, 1
    %p46 = scmp.eq.s32.totalorder %s8, 1
    %p47 = scmp.ne.s32.totalorder %s42, %s44
    %p48 = scmp.eq.s32.totalorder %s8, 0
    %p49 = por %p47, %p48
    %p50 = scmp.ne.s32.totalorder %s42, %s44
    %p51 = scmp.eq.s32.totalorder %s13, 1
    %p52 = por %p50, %p51
    %p53 = scmp.ne.s32.totalorder %s44, %s45
    %p54 = scmp.eq.s32.totalorder %s13, 0
    %p55 = por %p53, %p54
    %p56 = scmp.ne.s32.totalorder %s44, %s45
    %p57 = scmp.eq.s32.totalorder %s14, 1
    %p58 = por %p56, %p57
    %p60 = scmp.ne.s32.totalorder %s45, %s59
    %p61 = scmp.eq.s32.totalorder %s14, 0
    %p62 = por %p60, %p61
    %s63 = ssub.s32 %s8, %s15
    %p64 = scmp.eq.s32.totalorder %s63, 0
    %s66 = sadd.s32 %s65, 1
    %s67 = scalar_select %p64, %s65, %s66
    %p70 = pneg %p64
    %p71 = scmp.eq.s32.totalorder %s8, 1
    %p72 = por %p70, %p71
    %p73 = scmp.ne.s32.totalorder %s65, %s68
    %p74 = scmp.eq.s32.totalorder %s8, 0
    %p75 = por %p73, %p74
    %p76 = scmp.ne.s32.totalorder %s65, %s68
    %p77 = scmp.eq.s32.totalorder %s13, 1
    %p78 = por %p76, %p77
    %p79 = scmp.ne.s32.totalorder %s68, %s69
    %p80 = scmp.eq.s32.totalorder %s13, 0
    %p81 = por %p79, %p80
    %p82 = scmp.ne.s32.totalorder %s68, %s69
    %p83 = scmp.eq.s32.totalorder %s14, 1
    %p84 = por %p82, %p83
    %p86 = scmp.ne.s32.totalorder %s69, %s85
    %p87 = scmp.eq.s32.totalorder %s14, 0
    %p88 = por %p86, %p87
    %p89 = scmp.le.s32.totalorder 1, %s8
    %p90 = scmp.lt.s32.totalorder %s8, 3
    %p91 = pnand %p89, %p90
    %p92 = pneg %p91
    // Predicated region
    $region9: #{_lambda_.7} parent=5 // pred_check
      _
    $region10: #{_lambda_.7} parent=5 // pred_check_branch
      %94 = sbr.rel (%p91) target = $region12
    $region11: #{_lambda_.7} parent=5 // pred_region
      %s95 = ssub.s32 %s8, 1
      // Predicated region
      $region13: #{_lambda_.7} parent=11 // pred_check
        %p96 = pneg %p55
      $region14: #{_lambda_.7} parent=11 // pred_check_branch
        %98 = sbr.rel (%p96) target = $region16
      $region15: #{_lambda_.7} parent=11 // pred_region
        _
      $region16: #{_lambda_.7} parent=11 // pred_fallthru
        _
    $region12: #{_lambda_.7} parent=5 // pred_fallthru
      _
    %p99 = scmp.lt.s32.totalorder %s8, 2
    // Predicated region
    $region17: #{_lambda_.7} parent=5 // pred_check
      %p100 = pneg %p99
    $region18: #{_lambda_.7} parent=5 // pred_check_branch
      %102 = sbr.rel (%p100) target = $region20
    $region19: #{_lambda_.7} parent=5 // pred_region
      // Predicated region
      $region21: #{_lambda_.7} parent=19 // pred_check
        %p103 = pneg %p28
      $region22: #{_lambda_.7} parent=19 // pred_check_branch
        %105 = sbr.rel (%p103) target = $region24
      $region23: #{_lambda_.7} parent=19 // pred_region
        %p106 = scmp.lt.s32.totalorder %s8, 1
        %s107 = scalar_select %p106, %s8, 1
        %s108 = smul.addr %s107, 3
        %s109 = smul.addr %s108, 2
        %s110 = scalar_lea.vmem %s0, %s109
      $region24: #{_lambda_.7} parent=19 // pred_fallthru
        _
    $region20: #{_lambda_.7} parent=5 // pred_fallthru
      _
    %p111 = scmp.le.s32.totalorder 1, %s8
    %p112 = scmp.lt.s32.totalorder %s8, 3
    %p113 = pnand %p111, %p112
    %p114 = pneg %p113
    // Predicated region
    $region25: #{_lambda_.7} parent=5 // pred_check
      _
    $region26: #{_lambda_.7} parent=5 // pred_check_branch
      %116 = sbr.rel (%p113) target = $region28
    $region27: #{_lambda_.7} parent=5 // pred_region
      %s117 = ssub.s32 %s8, 1
      %p118 = scmp.lt.s32.totalorder %s13, 1
      %s119 = scalar_select %p118, %s13, 1
      %s120 = smul.addr %s119, 3
      %s121 = smul.addr %s120, 2
      %s122 = scalar_lea.vmem %s0, %s121
      %p123 = pneg %p34
      %p124 = pneg %p31
      %p125 = pneg %p55
      %p126 = pneg %p52
      %p127 = pneg %p81
      %p128 = pneg %p78
      %p129 = scmp.lt.s32.totalorder %s13, 1
      %s130 = scalar_select %p129, %s13, 1
      %s131 = smul.addr %s130, 3
      %s132 = smul.addr %s131, 4
      %s133 = scalar_lea.vmem %s2, %s132
      %p134 = scmp.lt.s32.totalorder %s13, 1
      %s135 = scalar_select %p134, %s13, 1
      %s136 = smul.addr %s135, 3
      %s137 = smul.addr %s136, 2
      %s138 = scalar_lea.vmem %s0, %s137
      %p139 = scmp.lt.s32.totalorder %s13, 1
      %s140 = scalar_select %p139, %s13, 1
      %s141 = smul.addr %s140, 3
      %s142 = smul.addr %s141, 4
      %s143 = scalar_lea.vmem %s2, %s142
      %v145 = vld [vmem:[%s138] sm:$0x3f]
      %147 = vst [vmem:[#allocation1] ss:$2 sm:$0xff] %v145
      %v148 = vld.sshfl [vmem:[#allocation1] sm:$0xff pattern:$0x75643120]
      %v149 = vld.sshfl [vmem:[#allocation1 + $0x8] sm:$0xff pattern:$0x75643120]
      %152 = vst [vmem:[#allocation2] sm:$0x33] %v148
      %vm153 = vcmask 254976
      %154 = vst.msk [vmem:[#allocation2 + $0x8] sm:$0x3] %vm153, %v149
      %v155 = vld [vmem:[%s138] sm:$0x3f]
      %s157 = scalar_lea.vmem [#allocation1], 1
      %158 = vst [vmem:[%s157] ss:$2 sm:$0xff] %v155
      %v159 = vld.sshfl [vmem:[#allocation1] sm:$0xff pattern:$0x75643120]
      %v161 = vld.sshfl [vmem:[#allocation1 + $0x8] sm:$0xff pattern:$0x75643120]
      %163 = vrot.lane.b32.xlu0 %v159, 127
      %v164 = vpop.permute.xlu0 %163
      %165 = vrot.lane.b32.xlu0 %v161, 127
      %v166 = vpop.permute.xlu0 %165
      %v167 = vrot.slane %v164, 4
      %v168 = vrot.slane %v166, 4
      %vm169 = vcmask 1043456
      %v170 = vsel %vm169, %v167, %v168
      %vm171 = vcmask 1039360
      %v172 = vsel %vm171, %v164, %v170
      %175 = vst [vmem:[#allocation2] sm:$0xcc] %v172
      %vm176 = vcmask 257026
      %177 = vst.msk [vmem:[#allocation2 + $0x8] sm:$0xc] %vm176, %v166
      %v178 = vld [vmem:[%s138] sm:$0x3f]
      %180 = vst [vmem:[#allocation1] ss:$2 sm:$0xff] %v178
      %v181 = vld.sshfl [vmem:[#allocation1] sm:$0xff pattern:$0x75643120]
      %v183 = vld.sshfl [vmem:[#allocation1 + $0x8] sm:$0xff pattern:$0x75643120]
      %185 = vrot.lane.b32.xlu0 %v181, 126
      %v186 = vpop.permute.xlu0 %185
      %187 = vrot.lane.b32.xlu0 %v183, 126
      %v188 = vpop.permute.xlu0 %187
      %v189 = vrot.slane %v186, 4
      %v190 = vrot.slane %v188, 4
      %v191 = vsel %vm169, %v189, %v190
      %vm192 = vcmask 1031168
      %v193 = vsel %vm192, %v186, %v191
      %196 = vst [vmem:[#allocation2 + $0xc] sm:$0x33] %v193
      %197 = vst.msk [vmem:[#allocation2 + $0x14] sm:$0x3] %vm153, %v188
      %v198 = vld [vmem:[%s138] sm:$0x3f]
      %s200 = scalar_lea.vmem [#allocation1], 1
      %201 = vst [vmem:[%s200] ss:$2 sm:$0xff] %v198
      %v202 = vld.sshfl [vmem:[#allocation1] sm:$0xff pattern:$0x75643120]
      %v204 = vld.sshfl [vmem:[#allocation1 + $0x8] sm:$0xff pattern:$0x75643120]
      %206 = vrot.lane.b32.xlu0 %v202, 110
      %v207 = vpop.permute.xlu0 %206
      %208 = vrot.lane.b32.xlu0 %v204, 110
      %v209 = vpop.permute.xlu0 %208
      %v210 = vrot.slane %v207, 4
      %v211 = vrot.slane %v209, 4
      %v212 = vsel %vm169, %v210, %v211
      %vm213 = vcmask 900096
      %v214 = vsel %vm213, %v207, %v212
      %217 = vst [vmem:[#allocation2 + $0xc] sm:$0xcc] %v214
      %218 = vst.msk [vmem:[#allocation2 + $0x14] sm:$0xc] %vm176, %v209
      %v219 = vld [vmem:[%s138] sm:$0x3f]
      %221 = vst [vmem:[#allocation1] ss:$2 sm:$0xff] %v219
      %v222 = vld.sshfl [vmem:[#allocation1] sm:$0xff pattern:$0x75643120]
      %v224 = vld.sshfl [vmem:[#allocation1 + $0x8] sm:$0xff pattern:$0x75643120]
      %226 = vrot.lane.b32.xlu0 %v222, 109
      %v227 = vpop.permute.xlu0 %226
      %228 = vrot.lane.b32.xlu0 %v224, 109
      %v229 = vpop.permute.xlu0 %228
      %v230 = vrot.slane %v227, 4
      %v231 = vrot.slane %v229, 4
      %v232 = vsel %vm169, %v230, %v231
      %vm233 = vcmask 891904
      %v234 = vsel %vm233, %v227, %v232
      %237 = vst [vmem:[#allocation2 + $0x18] sm:$0x33] %v234
      %238 = vst.msk [vmem:[#allocation2 + $0x20] sm:$0x3] %vm153, %v229
      %v239 = vld [vmem:[%s138] sm:$0x3f]
      %s241 = scalar_lea.vmem [#allocation1], 1
      %242 = vst [vmem:[%s241] ss:$2 sm:$0xff] %v239
      %v243 = vld.sshfl [vmem:[#allocation1] sm:$0xff pattern:$0x75643120]
      %v245 = vld.sshfl [vmem:[#allocation1 + $0x8] sm:$0xff pattern:$0x75643120]
      %247 = vrot.lane.b32.xlu0 %v243, 108
      %v248 = vpop.permute.xlu0 %247
      %249 = vrot.lane.b32.xlu0 %v245, 108
      %v250 = vpop.permute.xlu0 %249
      %v251 = vrot.slane %v248, 4
      %v252 = vrot.slane %v250, 4
      %v253 = vsel %vm169, %v251, %v252
      %vm254 = vcmask 883712
      %v255 = vsel %vm254, %v248, %v253
      %258 = vst [vmem:[#allocation2 + $0x18] sm:$0xcc] %v255
      %259 = vst.msk [vmem:[#allocation2 + $0x20] sm:$0xc] %vm176, %v250
      %v260 = vld [vmem:[%s138] sm:$0x3f]
      %262 = vst [vmem:[#allocation1] ss:$2 sm:$0xff] %v260
      %v263 = vld.sshfl [vmem:[#allocation1] sm:$0xff pattern:$0x75643120]
      %v265 = vld.sshfl [vmem:[#allocation1 + $0x8] sm:$0xff pattern:$0x75643120]
      %267 = vrot.lane.b32.xlu0 %v263, 92
      %v268 = vpop.permute.xlu0 %267
      %269 = vrot.lane.b32.xlu0 %v265, 92
      %v270 = vpop.permute.xlu0 %269
      %v271 = vrot.slane %v268, 4
      %v272 = vrot.slane %v270, 4
      %v273 = vsel %vm169, %v271, %v272
      %vm274 = vcmask 752640
      %v275 = vsel %vm274, %v268, %v273
      %278 = vst [vmem:[#allocation2 + $0x24] sm:$0x33] %v275
      %279 = vst.msk [vmem:[#allocation2 + $0x2c] sm:$0x3] %vm153, %v270
      %v280 = vld [vmem:[%s138] sm:$0x3f]
      %s282 = scalar_lea.vmem [#allocation1], 1
      %283 = vst [vmem:[%s282] ss:$2 sm:$0xff] %v280
      %v284 = vld.sshfl [vmem:[#allocation1] sm:$0xff pattern:$0x75643120]
      %v286 = vld.sshfl [vmem:[#allocation1 + $0x8] sm:$0xff pattern:$0x75643120]
      %288 = vrot.lane.b32.xlu0 %v284, 91
      %v289 = vpop.permute.xlu0 %288
      %290 = vrot.lane.b32.xlu0 %v286, 91
      %v291 = vpop.permute.xlu0 %290
      %v292 = vrot.slane %v289, 4
      %v293 = vrot.slane %v291, 4
      %v294 = vsel %vm169, %v292, %v293
      %vm295 = vcmask 744448
      %v296 = vsel %vm295, %v289, %v294
      %299 = vst [vmem:[#allocation2 + $0x24] sm:$0xcc] %v296
      %300 = vst.msk [vmem:[#allocation2 + $0x2c] sm:$0xc] %vm176, %v291
      %v301 = vld [vmem:[%s138] sm:$0x3f]
      %303 = vst [vmem:[#allocation1] ss:$2 sm:$0xff] %v301
      %v304 = vld.sshfl [vmem:[#allocation1] sm:$0xff pattern:$0x75643120]
      %v306 = vld.sshfl [vmem:[#allocation1 + $0x8] sm:$0xff pattern:$0x75643120]
      %308 = vrot.lane.b32.xlu0 %v304, 90
      %v309 = vpop.permute.xlu0 %308
      %310 = vrot.lane.b32.xlu0 %v306, 90
      %v311 = vpop.permute.xlu0 %310
      %v312 = vrot.slane %v309, 4
      %v313 = vrot.slane %v311, 4
      %v314 = vsel %vm169, %v312, %v313
      %vm315 = vcmask 736256
      %v316 = vsel %vm315, %v309, %v314
      %319 = vst [vmem:[#allocation2 + $0x30] sm:$0x33] %v316
      %320 = vst.msk [vmem:[#allocation2 + $0x38] sm:$0x3] %vm153, %v311
      %v321 = vld [vmem:[%s1] sm:$0x3]
      %v322 = vld [vmem:[#allocation2] sm:$0xff]
      %v323 = vld [vmem:[#allocation2 + $0x8] sm:$0xf]
      %v324 = vld [vmem:[#allocation2 + $0xc] sm:$0xff]
      %v325 = vld [vmem:[#allocation2 + $0x14] sm:$0xf]
      %v326 = vld [vmem:[#allocation2 + $0x18] sm:$0xff]
      %v327 = vld [vmem:[#allocation2 + $0x20] sm:$0xf]
      %v328 = vld [vmem:[#allocation2 + $0x24] sm:$0xff]
      %v329 = vld [vmem:[#allocation2 + $0x2c] sm:$0xf]
      %v330 = vld [vmem:[#allocation2 + $0x30] sm:$0x33]
      %v331 = vld [vmem:[#allocation2 + $0x38] sm:$0x3]
      %v342 = vunpack.c.l.b16 %v322
      %v343 = vunpack.c.h.b16 %v322
      %v344 = vunpack.c.l.b16 %v323
      %v345 = vunpack.c.l.b16 %v324
      %v346 = vunpack.c.h.b16 %v324
      %v347 = vunpack.c.l.b16 %v325
      %v348 = vunpack.c.l.b16 %v326
      %v349 = vunpack.c.h.b16 %v326
      %v350 = vunpack.c.l.b16 %v327
      %v351 = vunpack.c.l.b16 %v328
      %v352 = vunpack.c.h.b16 %v328
      %v353 = vunpack.c.l.b16 %v329
      %v354 = vunpack.c.l.b16 %v330
      %v355 = vunpack.c.h.b16 %v330
      %v356 = vunpack.c.l.b16 %v331
      %v357 = vpack.c.b16 %v345, %v342
      %v358 = vpack.c.b16 %v346, %v343
      %v359 = vpack.c.b16 %v347, %v344
      %v360 = vpack.c.b16 %v351, %v348
      %v361 = vpack.c.b16 %v352, %v349
      %v362 = vpack.c.b16 %v353, %v350
      %v363 = vpack.c.b16 %v354, %v354
      %v364 = vpack.c.b16 %v355, %v355
      %v365 = vpack.c.b16 %v356, %v356
      %vm372 = vcmask 293888
      %v374 = vsel %vm372, %v321, 0
      %vm376 = vcmask 1041408
      %v378 = vsel %vm376, %v363, 0
      %v381 = vsel %vm376, %v364, 0
      %v384 = vsel %vm376, %v365, 0
      %386 = vmatpush.bf16.msra.mxu0 0
      %387 = vmatpush.bf16.msra.mxu0 0
      %388 = vmatpush.bf16.msra.mxu0 0
      %389 = vmatpush.bf16.msra.mxu0 0
      %390 = vmatpush.bf16.msra.mxu0 0
      %391 = vmatpush.bf16.msra.mxu0 %v378
      %392 = vmatpush.bf16.msra.mxu0 %v360
      %393 = vmatpush.bf16.msra.mxu0 %v357
      %394 = vmatmul.bf16.gmra.mxu0 %v374
      %v395 = vpop.f32.mrf.mxu0
      %v396 = vadd.f32 0.0, %v395
      %v397 = vpop.f32.mrf.mxu0
      %398 = vdwg.mxu0
      %399 = vmatpush.bf16.msra.mxu0 0
      %400 = vmatpush.bf16.msra.mxu0 0
      %401 = vmatpush.bf16.msra.mxu0 0
      %402 = vmatpush.bf16.msra.mxu0 0
      %403 = vmatpush.bf16.msra.mxu0 0
      %404 = vmatpush.bf16.msra.mxu0 %v381
      %405 = vmatpush.bf16.msra.mxu0 %v361
      %406 = vmatpush.bf16.msra.mxu0 %v358
      %407 = vmatmul.bf16.gmra.mxu0 %v374
      %v408 = vpop.f32.mrf.mxu0
      %v409 = vadd.f32 0.0, %v408
      %v410 = vpop.f32.mrf.mxu0
      %411 = vdwg.mxu0
      %412 = vmatpush.bf16.msra.mxu0 0
      %413 = vmatpush.bf16.msra.mxu0 0
      %414 = vmatpush.bf16.msra.mxu0 0
      %415 = vmatpush.bf16.msra.mxu0 0
      %416 = vmatpush.bf16.msra.mxu0 0
      %417 = vmatpush.bf16.msra.mxu0 %v384
      %418 = vmatpush.bf16.msra.mxu0 %v362
      %419 = vmatpush.bf16.msra.mxu0 %v359
      %420 = vmatmul.bf16.gmra.mxu0 %v374
      %v421 = vpop.f32.mrf.mxu0
      %v422 = vadd.f32 0.0, %v421
      %v423 = vpop.f32.mrf.mxu0
      %424 = vdwg.mxu0
      %v427 = vrot.slane %v409, 4
      %vm428 = vcmask 1043456
      %v429 = vsel %vm428, %v396, %v427
      %431 = vst [vmem:[%s143] sm:$0xff] %v429
      %vm432 = vcmask 257024
      %433 = vst.msk [vmem:[%s143 + $0x8] sm:$0xf] %vm432, %v422
      %p434 = scmp.lt.s32.totalorder %s13, 1
      %s435 = scalar_select %p434, %s13, 1
      %s436 = smul.addr %s435, 3
      %s437 = smul.addr %s436, 4
      %s438 = scalar_lea.vmem %s2, %s437
      // Predicated region
      $region29: #{_lambda_.7} parent=27 // pred_check
        %p439 = pneg %p78
      $region30: #{_lambda_.7} parent=27 // pred_check_branch
        %441 = sbr.rel (%p439) target = $region32
      $region31: #{_lambda_.7} parent=27 // pred_region
        _
      $region32: #{_lambda_.7} parent=27 // pred_fallthru
        _
    $region28: #{_lambda_.7} parent=5 // pred_fallthru
      _
    %p442 = scmp.le.s32.totalorder 2, %s8
    // Predicated region
    $region33: #{_lambda_.7} parent=5 // pred_check
      %p443 = pneg %p442
    $region34: #{_lambda_.7} parent=5 // pred_check_branch
      %445 = sbr.rel (%p443) target = $region36
    $region35: #{_lambda_.7} parent=5 // pred_region
      %s446 = ssub.s32 %s8, 2
      // Predicated region
      $region37: #{_lambda_.7} parent=35 // pred_check
        %p447 = pneg %p84
      $region38: #{_lambda_.7} parent=35 // pred_check_branch
        %449 = sbr.rel (%p447) target = $region40
      $region39: #{_lambda_.7} parent=35 // pred_region
        %p450 = scmp.lt.s32.totalorder %s14, 1
        %s451 = scalar_select %p450, %s14, 1
        %s452 = smul.addr %s451, 3
        %s453 = smul.addr %s452, 4
        %s454 = scalar_lea.vmem %s2, %s453
      $region40: #{_lambda_.7} parent=35 // pred_fallthru
        _
    $region36: #{_lambda_.7} parent=5 // pred_fallthru
      _
  $region6: #{_lambda_.7} parent=0 // loop_footer
    %s12 = sadd.s32 1, %s8
  $region7: #{_lambda_.7} parent=0 // loop_footer_branch
    %7 = sbr.rel target = $region3
  $region8: #{_lambda_.7} parent=0 // loop_exit
    _

// kernel: reverse.0
$region0: #{reverse.0}
  %s0 = inlined_call_operand.vmem [shape: f32[2,4,16,7], index: 0, kind: input, shape index: {}]
  %s1 = inlined_call_operand.vmem [shape: f32[2,4,16,7], index: 1, kind: output, shape index: {}]
  $region1: #{reverse.0} parent=0
    #allocation0 [shape = 'u8[65536]{0}', space=vmem, size = 0x10000, scoped, tag = 'operand span for operand 0']
    #allocation1 [shape = 'u8[32768]{0}', space=vmem, size = 0x8000, scoped, tag = 'operand span for operand 1']
    %s2 = scalar_lea.vmem [#allocation0], 8
    // Predicated region
    $region2: #{reverse.0} parent=1 // pred_check
      _
    $region3: #{reverse.0} parent=1 // pred_check_branch
      %4 = sbr.rel (0) target = $region5
    $region4: #{reverse.0} parent=1 // pred_region
      // Predicated region
      $region6: #{reverse.0} parent=4 // pred_check
        _
      $region7: #{reverse.0} parent=4 // pred_check_branch
        %6 = sbr.rel (0) target = $region9
      $region8: #{reverse.0} parent=4 // pred_region
        // Predicated region
        $region21: #{reverse.0} parent=8 // pred_check
          _
        $region22: #{reverse.0} parent=8 // pred_check_branch
          %36 = sbr.rel (0) target = $region24
        $region23: #{reverse.0} parent=8 // pred_region
          loop: start=0, step=1, limit=1
          $region25: #{reverse.0} parent=23 // loop_pre_header
            _
          $region26: #{reverse.0} parent=23 // loop_header
            %s38 = sphi 0, %s42
            %p39 = scmp.ge.s32.totalorder %s38, 1
            %s43 = sphi %s0, %s0
            %s44 = sphi %s2, %s2
          $region27: #{reverse.0} parent=23 // loop_header_branch
            %41 = sbr.rel (%p39) target = $region31
          $region28: #{reverse.0} parent=23 // loop_body
            %v45 = vld [vmem:[%s43] sm:$0xff]
            %46 = vst [vmem:[%s44] sm:$0xff] %v45
            %v47 = vld [vmem:[%s43 + $0x8] sm:$0xff]
            %48 = vst [vmem:[%s44 + $0x10] sm:$0xff] %v47
            %v49 = vld [vmem:[%s43 + $0x10] sm:$0xff]
            %50 = vst [vmem:[%s44 + $0x20] sm:$0xff] %v49
            %v51 = vld [vmem:[%s43 + $0x18] sm:$0xff]
            %52 = vst [vmem:[%s44 + $0x30] sm:$0xff] %v51
            %v53 = vld [vmem:[%s43 + $0x20] sm:$0xff]
            %54 = vst [vmem:[%s44 + $0x40] sm:$0xff] %v53
            %v55 = vld [vmem:[%s43 + $0x28] sm:$0xff]
            %56 = vst [vmem:[%s44 + $0x50] sm:$0xff] %v55
            %v57 = vld [vmem:[%s43 + $0x30] sm:$0xff]
            %58 = vst [vmem:[%s44 + $0x60] sm:$0xff] %v57
            %v59 = vld [vmem:[%s43 + $0x38] sm:$0xff]
            %60 = vst [vmem:[%s44 + $0x70] sm:$0xff] %v59
          $region29: #{reverse.0} parent=23 // loop_footer
            %s42 = sadd.s32 1, %s38
          $region30: #{reverse.0} parent=23 // loop_footer_branch
            %37 = sbr.rel target = $region26
          $region31: #{reverse.0} parent=23 // loop_exit
            _
        $region24: #{reverse.0} parent=8 // pred_fallthru
          _
        // Predicated region
        $region32: #{reverse.0} parent=8 // pred_check
          _
        $region33: #{reverse.0} parent=8 // pred_check_branch
          %62 = sbr.rel target = $region35
        $region34: #{reverse.0} parent=8 // pred_region
          _
        $region35: #{reverse.0} parent=8 // pred_fallthru
          _
      $region9: #{reverse.0} parent=4 // pred_fallthru
        _
      // Predicated region
      $region10: #{reverse.0} parent=4 // pred_check
        _
      $region11: #{reverse.0} parent=4 // pred_check_branch
        %8 = sbr.rel target = $region13
      $region12: #{reverse.0} parent=4 // pred_region
        %s10 = ssub.s32 256, 1
        loop: start=0, step=1, limit=1
        $region14: #{reverse.0} parent=12 // loop_pre_header
          _
        $region15: #{reverse.0} parent=12 // loop_header
          %s12 = sphi 0, %s16
          %p13 = scmp.ge.s32.totalorder %s12, 1
          %s17 = sphi %s0, %s0
          %s18 = sphi %s2, %s2
        $region16: #{reverse.0} parent=12 // loop_header_branch
          %15 = sbr.rel (%p13) target = $region20
        $region17: #{reverse.0} parent=12 // loop_body
          %v19 = vld [vmem:[%s17] sm:%s10]
          %20 = vst [vmem:[%s18] sm:%s10] %v19
          %v21 = vld [vmem:[%s17 + $0x8] sm:%s10]
          %22 = vst [vmem:[%s18 + $0x10] sm:%s10] %v21
          %v23 = vld [vmem:[%s17 + $0x10] sm:%s10]
          %24 = vst [vmem:[%s18 + $0x20] sm:%s10] %v23
          %v25 = vld [vmem:[%s17 + $0x18] sm:%s10]
          %26 = vst [vmem:[%s18 + $0x30] sm:%s10] %v25
          %v27 = vld [vmem:[%s17 + $0x20] sm:%s10]
          %28 = vst [vmem:[%s18 + $0x40] sm:%s10] %v27
          %v29 = vld [vmem:[%s17 + $0x28] sm:%s10]
          %30 = vst [vmem:[%s18 + $0x50] sm:%s10] %v29
          %v31 = vld [vmem:[%s17 + $0x30] sm:%s10]
          %32 = vst [vmem:[%s18 + $0x60] sm:%s10] %v31
          %v33 = vld [vmem:[%s17 + $0x38] sm:%s10]
          %34 = vst [vmem:[%s18 + $0x70] sm:%s10] %v33
        $region18: #{reverse.0} parent=12 // loop_footer
          %s16 = sadd.s32 1, %s12
        $region19: #{reverse.0} parent=12 // loop_footer_branch
          %11 = sbr.rel target = $region15
        $region20: #{reverse.0} parent=12 // loop_exit
          _
      $region13: #{reverse.0} parent=4 // pred_fallthru
        _
    $region5: #{reverse.0} parent=1 // pred_fallthru
      _
    %63 = vnop
    %s64 = scalar_lea.vmem [#allocation0], 7
    %v65 = vld [vmem:[%s64] ss:$-1 sm:$0xff]
    %v66 = vrot.slane %v65, 1
    %67 = vst [vmem:[#allocation1] sm:$0xff] %v66
    %s68 = scalar_lea.vmem [#allocation0], 8
    %s69 = scalar_lea.vmem %s68, 7 [#allocation0]
    %v70 = vld [vmem:[%s69] ss:$-1 sm:$0xff]
    %v71 = vrot.slane %v70, 1
    %v72 = vlaneseq
    %v73 = vshrl.u32 %v72, 7
    %vm74 = vcmp.lt.s32.totalorder %v73, 7
    %75 = vst.msk [vmem:[#allocation1] sm:$0xff] %vm74, %v71
    %s76 = scalar_lea.vmem [#allocation1], 8
    %s77 = scalar_lea.vmem [#allocation0], 16
    %s78 = scalar_lea.vmem %s77, 7 [#allocation0]
    %v79 = vld [vmem:[%s78] ss:$-1 sm:$0xff]
    %v80 = vrot.slane %v79, 1
    %81 = vst [vmem:[%s76] sm:$0xff] %v80
    %s82 = scalar_lea.vmem %s77, 8 [#allocation0]
    %s83 = scalar_lea.vmem %s82, 7 [#allocation0]
    %v84 = vld [vmem:[%s83] ss:$-1 sm:$0xff]
    %v85 = vrot.slane %v84, 1
    %v86 = vlaneseq
    %v87 = vshrl.u32 %v86, 7
    %vm88 = vcmp.lt.s32.totalorder %v87, 7
    %89 = vst.msk [vmem:[%s76] sm:$0xff] %vm88, %v85
    %s90 = scalar_lea.vmem [#allocation1], 16
    %s91 = scalar_lea.vmem [#allocation0], 32
    %s92 = scalar_lea.vmem %s91, 7 [#allocation0]
    %v93 = vld [vmem:[%s92] ss:$-1 sm:$0xff]
    %v94 = vrot.slane %v93, 1
    %95 = vst [vmem:[%s90] sm:$0xff] %v94
    %s96 = scalar_lea.vmem %s91, 8 [#allocation0]
    %s97 = scalar_lea.vmem %s96, 7 [#allocation0]
    %v98 = vld [vmem:[%s97] ss:$-1 sm:$0xff]
    %v99 = vrot.slane %v98, 1
    %v100 = vlaneseq
    %v101 = vshrl.u32 %v100, 7
    %vm102 = vcmp.lt.s32.totalorder %v101, 7
    %103 = vst.msk [vmem:[%s90] sm:$0xff] %vm102, %v99
    %s104 = scalar_lea.vmem [#allocation1], 24
    %s105 = scalar_lea.vmem [#allocation0], 48
    %s106 = scalar_lea.vmem %s105, 7 [#allocation0]
    %v107 = vld [vmem:[%s106] ss:$-1 sm:$0xff]
    %v108 = vrot.slane %v107, 1
    %109 = vst [vmem:[%s104] sm:$0xff] %v108
    %s110 = scalar_lea.vmem %s105, 8 [#allocation0]
    %s111 = scalar_lea.vmem %s110, 7 [#allocation0]
    %v112 = vld [vmem:[%s111] ss:$-1 sm:$0xff]
    %v113 = vrot.slane %v112, 1
    %v114 = vlaneseq
    %v115 = vshrl.u32 %v114, 7
    %vm116 = vcmp.lt.s32.totalorder %v115, 7
    %117 = vst.msk [vmem:[%s104] sm:$0xff] %vm116, %v113
    %s118 = scalar_lea.vmem [#allocation1], 32
    %s119 = scalar_lea.vmem [#allocation0], 64
    %s120 = scalar_lea.vmem %s119, 7 [#allocation0]
    %v121 = vld [vmem:[%s120] ss:$-1 sm:$0xff]
    %v122 = vrot.slane %v121, 1
    %123 = vst [vmem:[%s118] sm:$0xff] %v122
    %s124 = scalar_lea.vmem %s119, 8 [#allocation0]
    %s125 = scalar_lea.vmem %s124, 7 [#allocation0]
    %v126 = vld [vmem:[%s125] ss:$-1 sm:$0xff]
    %v127 = vrot.slane %v126, 1
    %v128 = vlaneseq
    %v129 = vshrl.u32 %v128, 7
    %vm130 = vcmp.lt.s32.totalorder %v129, 7
    %131 = vst.msk [vmem:[%s118] sm:$0xff] %vm130, %v127
    %s132 = scalar_lea.vmem [#allocation1], 40
    %s133 = scalar_lea.vmem [#allocation0], 80
    %s134 = scalar_lea.vmem %s133, 7 [#allocation0]
    %v135 = vld [vmem:[%s134] ss:$-1 sm:$0xff]
    %v136 = vrot.slane %v135, 1
    %137 = vst [vmem:[%s132] sm:$0xff] %v136
    %s138 = scalar_lea.vmem %s133, 8 [#allocation0]
    %s139 = scalar_lea.vmem %s138, 7 [#allocation0]
    %v140 = vld [vmem:[%s139] ss:$-1 sm:$0xff]
    %v141 = vrot.slane %v140, 1
    %v142 = vlaneseq
    %v143 = vshrl.u32 %v142, 7
    %vm144 = vcmp.lt.s32.totalorder %v143, 7
    %145 = vst.msk [vmem:[%s132] sm:$0xff] %vm144, %v141
    %s146 = scalar_lea.vmem [#allocation1], 48
    %s147 = scalar_lea.vmem [#allocation0], 96
    %s148 = scalar_lea.vmem %s147, 7 [#allocation0]
    %v149 = vld [vmem:[%s148] ss:$-1 sm:$0xff]
    %v150 = vrot.slane %v149, 1
    %151 = vst [vmem:[%s146] sm:$0xff] %v150
    %s152 = scalar_lea.vmem %s147, 8 [#allocation0]
    %s153 = scalar_lea.vmem %s152, 7 [#allocation0]
    %v154 = vld [vmem:[%s153] ss:$-1 sm:$0xff]
    %v155 = vrot.slane %v154, 1
    %v156 = vlaneseq
    %v157 = vshrl.u32 %v156, 7
    %vm158 = vcmp.lt.s32.totalorder %v157, 7
    %159 = vst.msk [vmem:[%s146] sm:$0xff] %vm158, %v155
    %s160 = scalar_lea.vmem [#allocation1], 56
    %s161 = scalar_lea.vmem [#allocation0], 112
    %s162 = scalar_lea.vmem %s161, 7 [#allocation0]
    %v163 = vld [vmem:[%s162] ss:$-1 sm:$0xff]
    %v164 = vrot.slane %v163, 1
    %165 = vst [vmem:[%s160] sm:$0xff] %v164
    %s166 = scalar_lea.vmem %s161, 8 [#allocation0]
    %s167 = scalar_lea.vmem %s166, 7 [#allocation0]
    %v168 = vld [vmem:[%s167] ss:$-1 sm:$0xff]
    %v169 = vrot.slane %v168, 1
    %v170 = vlaneseq
    %v171 = vshrl.u32 %v170, 7
    %vm172 = vcmp.lt.s32.totalorder %v171, 7
    %173 = vst.msk [vmem:[%s160] sm:$0xff] %vm172, %v169
    // Predicated region
    $region36: #{reverse.0} parent=1 // pred_check
      _
    $region37: #{reverse.0} parent=1 // pred_check_branch
      %175 = sbr.rel (0) target = $region39
    $region38: #{reverse.0} parent=1 // pred_region
      // Predicated region
      $region40: #{reverse.0} parent=38 // pred_check
        _
      $region41: #{reverse.0} parent=38 // pred_check_branch
        %177 = sbr.rel (0) target = $region43
      $region42: #{reverse.0} parent=38 // pred_region
        // Predicated region
        $region55: #{reverse.0} parent=42 // pred_check
          _
        $region56: #{reverse.0} parent=42 // pred_check_branch
          %207 = sbr.rel (0) target = $region58
        $region57: #{reverse.0} parent=42 // pred_region
          loop: start=0, step=1, limit=1
          $region59: #{reverse.0} parent=57 // loop_pre_header
            _
          $region60: #{reverse.0} parent=57 // loop_header
            %s209 = sphi 0, %s213
            %p210 = scmp.ge.s32.totalorder %s209, 1
            %s214 = sphi [#allocation1], [#allocation1]
            %s215 = sphi %s1, %s1
          $region61: #{reverse.0} parent=57 // loop_header_branch
            %212 = sbr.rel (%p210) target = $region65
          $region62: #{reverse.0} parent=57 // loop_body
            %v216 = vld [vmem:[%s214] sm:$0xff]
            %217 = vst [vmem:[%s215] sm:$0xff] %v216
            %v218 = vld [vmem:[%s214 + $0x8] sm:$0xff]
            %219 = vst [vmem:[%s215 + $0x8] sm:$0xff] %v218
            %v220 = vld [vmem:[%s214 + $0x10] sm:$0xff]
            %221 = vst [vmem:[%s215 + $0x10] sm:$0xff] %v220
            %v222 = vld [vmem:[%s214 + $0x18] sm:$0xff]
            %223 = vst [vmem:[%s215 + $0x18] sm:$0xff] %v222
            %v224 = vld [vmem:[%s214 + $0x20] sm:$0xff]
            %225 = vst [vmem:[%s215 + $0x20] sm:$0xff] %v224
            %v226 = vld [vmem:[%s214 + $0x28] sm:$0xff]
            %227 = vst [vmem:[%s215 + $0x28] sm:$0xff] %v226
            %v228 = vld [vmem:[%s214 + $0x30] sm:$0xff]
            %229 = vst [vmem:[%s215 + $0x30] sm:$0xff] %v228
            %v230 = vld [vmem:[%s214 + $0x38] sm:$0xff]
            %231 = vst [vmem:[%s215 + $0x38] sm:$0xff] %v230
          $region63: #{reverse.0} parent=57 // loop_footer
            %s213 = sadd.s32 1, %s209
          $region64: #{reverse.0} parent=57 // loop_footer_branch
            %208 = sbr.rel target = $region60
          $region65: #{reverse.0} parent=57 // loop_exit
            _
        $region58: #{reverse.0} parent=42 // pred_fallthru
          _
        // Predicated region
        $region66: #{reverse.0} parent=42 // pred_check
          _
        $region67: #{reverse.0} parent=42 // pred_check_branch
          %233 = sbr.rel target = $region69
        $region68: #{reverse.0} parent=42 // pred_region
          _
        $region69: #{reverse.0} parent=42 // pred_fallthru
          _
      $region43: #{reverse.0} parent=38 // pred_fallthru
        _
      // Predicated region
      $region44: #{reverse.0} parent=38 // pred_check
        _
      $region45: #{reverse.0} parent=38 // pred_check_branch
        %179 = sbr.rel target = $region47
      $region46: #{reverse.0} parent=38 // pred_region
        %s181 = ssub.s32 256, 1
        loop: start=0, step=1, limit=1
        $region48: #{reverse.0} parent=46 // loop_pre_header
          _
        $region49: #{reverse.0} parent=46 // loop_header
          %s183 = sphi 0, %s187
          %p184 = scmp.ge.s32.totalorder %s183, 1
          %s188 = sphi [#allocation1], [#allocation1]
          %s189 = sphi %s1, %s1
        $region50: #{reverse.0} parent=46 // loop_header_branch
          %186 = sbr.rel (%p184) target = $region54
        $region51: #{reverse.0} parent=46 // loop_body
          %v190 = vld [vmem:[%s188] sm:%s181]
          %191 = vst [vmem:[%s189] sm:%s181] %v190
          %v192 = vld [vmem:[%s188 + $0x8] sm:%s181]
          %193 = vst [vmem:[%s189 + $0x8] sm:%s181] %v192
          %v194 = vld [vmem:[%s188 + $0x10] sm:%s181]
          %195 = vst [vmem:[%s189 + $0x10] sm:%s181] %v194
          %v196 = vld [vmem:[%s188 + $0x18] sm:%s181]
          %197 = vst [vmem:[%s189 + $0x18] sm:%s181] %v196
          %v198 = vld [vmem:[%s188 + $0x20] sm:%s181]
          %199 = vst [vmem:[%s189 + $0x20] sm:%s181] %v198
          %v200 = vld [vmem:[%s188 + $0x28] sm:%s181]
          %201 = vst [vmem:[%s189 + $0x28] sm:%s181] %v200
          %v202 = vld [vmem:[%s188 + $0x30] sm:%s181]
          %203 = vst [vmem:[%s189 + $0x30] sm:%s181] %v202
          %v204 = vld [vmem:[%s188 + $0x38] sm:%s181]
          %205 = vst [vmem:[%s189 + $0x38] sm:%s181] %v204
        $region52: #{reverse.0} parent=46 // loop_footer
          %s187 = sadd.s32 1, %s183
        $region53: #{reverse.0} parent=46 // loop_footer_branch
          %182 = sbr.rel target = $region49
        $region54: #{reverse.0} parent=46 // loop_exit
          _
      $region47: #{reverse.0} parent=38 // pred_fallthru
        _
    $region39: #{reverse.0} parent=1 // pred_fallthru
      _
    %234 = vnop

// kernel: _lambda_.8
$region0: #{_lambda_.8}
  #allocation0 [shape = 'u32[]', space=smem, size = 0x4, offset = 0x4, fixed_abs, tag = 'smem constant byte address 0x4 - core index']
  #allocation1 [shape = 'u32[72,128]{1,0:T(1,128)}', space=vmem, size = 0x9000, scoped, tag = 'internal scratch']
  %s0 = inlined_call_operand.vmem [shape: bf16[2,4,288], index: 0, kind: input, shape index: {}]
  %s1 = inlined_call_operand.vmem [shape: bf16[4,4], index: 1, kind: input, shape index: {}]
  %s2 = inlined_call_operand.vmem [shape: f32[4,1], index: 2, kind: input, shape index: {}]
  %s3 = inlined_call_operand.vmem [shape: f32[2,4,288], index: 3, kind: output, shape index: {}]
  %s4 = sld [smem:[#allocation0]]
  $region45: #{_lambda_.8} parent=0
    _
  %s6 = ssub.s32 1, %s4
  %s7 = scalar_select 0, %s6, %s4
  loop: start=0, step=1, limit=4
  $region2: #{_lambda_.8} parent=0 // loop_pre_header
    _
  $region3: #{_lambda_.8} parent=0 // loop_header
    %s9 = sphi 0, %s13
    %p10 = scmp.ge.s32.totalorder %s9, 4
    %s19 = sphi 0, %s21
    %s22 = sphi 0, %s19
    %s23 = sphi 0, %s22
    %s39 = sphi 0, %s23
    %s43 = sphi 0, %s43
    %s45 = sphi 0, %s43
    %s46 = sphi 0, %s45
    %s60 = sphi 0, %s46
    %s64 = sphi 0, %s64
    %s66 = sphi 0, %s64
    %s67 = sphi 0, %s66
    %s81 = sphi 0, %s67
    %s87 = sphi 0, %s89
    %s90 = sphi 0, %s87
    %s91 = sphi 0, %s90
    %s107 = sphi 0, %s91
  $region4: #{_lambda_.8} parent=0 // loop_header_branch
    %12 = sbr.rel (%p10) target = $region8
  $region5: #{_lambda_.8} parent=0 // loop_body
    %s14 = ssub.s32 %s9, 1
    %s15 = ssub.s32 %s9, 2
    %s16 = sadd.s32 %s9, 1
    %s17 = ssub.s32 %s9, %s16
    %p18 = scmp.eq.s32.totalorder %s17, 0
    %s20 = sadd.s32 %s19, 1
    %s21 = scalar_select %p18, %s19, %s20
    %p24 = pneg %p18
    %p25 = scmp.eq.s32.totalorder %s9, 1
    %p26 = por %p24, %p25
    %p27 = scmp.ne.s32.totalorder %s19, %s22
    %p28 = scmp.eq.s32.totalorder %s9, 0
    %p29 = por %p27, %p28
    %p30 = scmp.ne.s32.totalorder %s19, %s22
    %p31 = scmp.eq.s32.totalorder %s14, 1
    %p32 = por %p30, %p31
    %p33 = scmp.ne.s32.totalorder %s22, %s23
    %p34 = scmp.eq.s32.totalorder %s14, 0
    %p35 = por %p33, %p34
    %p36 = scmp.ne.s32.totalorder %s22, %s23
    %p37 = scmp.eq.s32.totalorder %s15, 1
    %p38 = por %p36, %p37
    %p40 = scmp.ne.s32.totalorder %s23, %s39
    %p41 = scmp.eq.s32.totalorder %s15, 0
    %p42 = por %p40, %p41
    %s44 = sadd.s32 %s43, 1
    %p47 = scmp.eq.s32.totalorder %s9, 1
    %p48 = scmp.ne.s32.totalorder %s43, %s45
    %p49 = scmp.eq.s32.totalorder %s9, 0
    %p50 = por %p48, %p49
    %p51 = scmp.ne.s32.totalorder %s43, %s45
    %p52 = scmp.eq.s32.totalorder %s14, 1
    %p53 = por %p51, %p52
    %p54 = scmp.ne.s32.totalorder %s45, %s46
    %p55 = scmp.eq.s32.totalorder %s14, 0
    %p56 = por %p54, %p55
    %p57 = scmp.ne.s32.totalorder %s45, %s46
    %p58 = scmp.eq.s32.totalorder %s15, 1
    %p59 = por %p57, %p58
    %p61 = scmp.ne.s32.totalorder %s46, %s60
    %p62 = scmp.eq.s32.totalorder %s15, 0
    %p63 = por %p61, %p62
    %s65 = sadd.s32 %s64, 1
    %p68 = scmp.eq.s32.totalorder %s9, 1
    %p69 = scmp.ne.s32.totalorder %s64, %s66
    %p70 = scmp.eq.s32.totalorder %s9, 0
    %p71 = por %p69, %p70
    %p72 = scmp.ne.s32.totalorder %s64, %s66
    %p73 = scmp.eq.s32.totalorder %s14, 1
    %p74 = por %p72, %p73
    %p75 = scmp.ne.s32.totalorder %s66, %s67
    %p76 = scmp.eq.s32.totalorder %s14, 0
    %p77 = por %p75, %p76
    %p78 = scmp.ne.s32.totalorder %s66, %s67
    %p79 = scmp.eq.s32.totalorder %s15, 1
    %p80 = por %p78, %p79
    %p82 = scmp.ne.s32.totalorder %s67, %s81
    %p83 = scmp.eq.s32.totalorder %s15, 0
    %p84 = por %p82, %p83
    %s85 = ssub.s32 %s9, %s16
    %p86 = scmp.eq.s32.totalorder %s85, 0
    %s88 = sadd.s32 %s87, 1
    %s89 = scalar_select %p86, %s87, %s88
    %p92 = pneg %p86
    %p93 = scmp.eq.s32.totalorder %s9, 1
    %p94 = por %p92, %p93
    %p95 = scmp.ne.s32.totalorder %s87, %s90
    %p96 = scmp.eq.s32.totalorder %s9, 0
    %p97 = por %p95, %p96
    %p98 = scmp.ne.s32.totalorder %s87, %s90
    %p99 = scmp.eq.s32.totalorder %s14, 1
    %p100 = por %p98, %p99
    %p101 = scmp.ne.s32.totalorder %s90, %s91
    %p102 = scmp.eq.s32.totalorder %s14, 0
    %p103 = por %p101, %p102
    %p104 = scmp.ne.s32.totalorder %s90, %s91
    %p105 = scmp.eq.s32.totalorder %s15, 1
    %p106 = por %p104, %p105
    %p108 = scmp.ne.s32.totalorder %s91, %s107
    %p109 = scmp.eq.s32.totalorder %s15, 0
    %p110 = por %p108, %p109
    %p111 = scmp.le.s32.totalorder 1, %s9
    %p112 = scmp.lt.s32.totalorder %s9, 3
    %p113 = pnand %p111, %p112
    %p114 = pneg %p113
    // Predicated region
    $region9: #{_lambda_.8} parent=5 // pred_check
      _
    $region10: #{_lambda_.8} parent=5 // pred_check_branch
      %116 = sbr.rel (%p113) target = $region12
    $region11: #{_lambda_.8} parent=5 // pred_region
      %s117 = ssub.s32 %s9, 1
      // Predicated region
      $region13: #{_lambda_.8} parent=11 // pred_check
        %p118 = pneg %p56
      $region14: #{_lambda_.8} parent=11 // pred_check_branch
        %120 = sbr.rel (%p118) target = $region16
      $region15: #{_lambda_.8} parent=11 // pred_region
        _
      $region16: #{_lambda_.8} parent=11 // pred_fallthru
        _
      // Predicated region
      $region17: #{_lambda_.8} parent=11 // pred_check
        %p121 = pneg %p77
      $region18: #{_lambda_.8} parent=11 // pred_check_branch
        %123 = sbr.rel (%p121) target = $region20
      $region19: #{_lambda_.8} parent=11 // pred_region
        _
      $region20: #{_lambda_.8} parent=11 // pred_fallthru
        _
    $region12: #{_lambda_.8} parent=5 // pred_fallthru
      _
    %p124 = scmp.lt.s32.totalorder %s9, 2
    // Predicated region
    $region21: #{_lambda_.8} parent=5 // pred_check
      %p125 = pneg %p124
    $region22: #{_lambda_.8} parent=5 // pred_check_branch
      %127 = sbr.rel (%p125) target = $region24
    $region23: #{_lambda_.8} parent=5 // pred_region
      // Predicated region
      $region25: #{_lambda_.8} parent=23 // pred_check
        %p128 = pneg %p29
      $region26: #{_lambda_.8} parent=23 // pred_check_branch
        %130 = sbr.rel (%p128) target = $region28
      $region27: #{_lambda_.8} parent=23 // pred_region
        %p131 = scmp.lt.s32.totalorder %s9, 1
        %s132 = scalar_select %p131, %s9, 1
        %s133 = smul.addr %s132, 3
        %s134 = smul.addr %s133, 2
        %s135 = scalar_lea.vmem %s0, %s134
      $region28: #{_lambda_.8} parent=23 // pred_fallthru
        _
    $region24: #{_lambda_.8} parent=5 // pred_fallthru
      _
    %p136 = scmp.le.s32.totalorder 1, %s9
    %p137 = scmp.lt.s32.totalorder %s9, 3
    %p138 = pnand %p136, %p137
    %p139 = pneg %p138
    // Predicated region
    $region29: #{_lambda_.8} parent=5 // pred_check
      _
    $region30: #{_lambda_.8} parent=5 // pred_check_branch
      %141 = sbr.rel (%p138) target = $region32
    $region31: #{_lambda_.8} parent=5 // pred_region
      %s142 = ssub.s32 %s9, 1
      %p143 = scmp.lt.s32.totalorder %s14, 1
      %s144 = scalar_select %p143, %s14, 1
      %s145 = smul.addr %s144, 3
      %s146 = smul.addr %s145, 2
      %s147 = scalar_lea.vmem %s0, %s146
      %p148 = pneg %p35
      %p149 = pneg %p32
      %p150 = pneg %p56
      %p151 = pneg %p53
      %p152 = pneg %p77
      %p153 = pneg %p74
      %p154 = pneg %p103
      %p155 = pneg %p100
      %p156 = scmp.lt.s32.totalorder %s14, 1
      %s157 = scalar_select %p156, %s14, 1
      %s158 = smul.addr %s157, 3
      %s159 = smul.addr %s158, 4
      %s160 = scalar_lea.vmem %s3, %s159
      %p161 = scmp.lt.s32.totalorder %s14, 1
      %s162 = scalar_select %p161, %s14, 1
      %s163 = smul.addr %s162, 3
      %s164 = smul.addr %s163, 2
      %s165 = scalar_lea.vmem %s0, %s164
      %p166 = scmp.lt.s32.totalorder %s14, 1
      %s167 = scalar_select %p166, %s14, 1
      %s168 = smul.addr %s167, 3
      %s169 = smul.addr %s168, 4
      %s170 = scalar_lea.vmem %s3, %s169
      %v172 = vld [vmem:[%s1] sm:$0x3]
      %v173 = vld [vmem:[%s165] sm:$0x3f]
      %v174 = vld [vmem:[%s2] sm:$0xf]
      %176 = vset.pattern.permute.xlu0 0
      %177 = vperm.xlu0 %176, %v174
      %v178 = vpop.permute.xlu0 %177
      %181 = vst [vmem:[#allocation1] ss:$4 sm:$0xff] %v173
      %v182 = vld.sshfl [vmem:[#allocation1] sm:$0xff pattern:$0x73625140]
      %v183 = vld.sshfl [vmem:[#allocation1 + $0x8] sm:$0xff pattern:$0x73625140]
      %v184 = vld.sshfl [vmem:[#allocation1 + $0x10] sm:$0xff pattern:$0x73625140]
      %vm185 = vcmask 31744
      %v187 = vsel %vm185, %v172, 0
      %vm189 = vcmask 1041408
      %v190 = vsel %vm189, %v182, 0
      %v192 = vsel %vm189, %v183, 0
      %v194 = vsel %vm189, %v184, 0
      %196 = vmatpush.bf16.msra.mxu0 0
      %197 = vmatpush.bf16.msra.mxu0 0
      %198 = vmatpush.bf16.msra.mxu0 0
      %199 = vmatpush.bf16.msra.mxu0 0
      %200 = vmatpush.bf16.msra.mxu0 0
      %201 = vmatpush.bf16.msra.mxu0 0
      %202 = vmatpush.bf16.msra.mxu0 0
      %203 = vmatpush.bf16.msra.mxu0 %v190
      %204 = vmatmul.bf16.gmra.mxu0 %v187
      %v205 = vpop.f32.mrf.mxu0
      %v206 = vadd.f32 %v178, %v205
      %v207 = vpop.f32.mrf.mxu0
      %208 = vdwg.mxu0
      %209 = vmatpush.bf16.msra.mxu0 0
      %210 = vmatpush.bf16.msra.mxu0 0
      %211 = vmatpush.bf16.msra.mxu0 0
      %212 = vmatpush.bf16.msra.mxu0 0
      %213 = vmatpush.bf16.msra.mxu0 0
      %214 = vmatpush.bf16.msra.mxu0 0
      %215 = vmatpush.bf16.msra.mxu0 0
      %216 = vmatpush.bf16.msra.mxu0 %v192
      %217 = vmatmul.bf16.gmra.mxu0 %v187
      %v218 = vpop.f32.mrf.mxu0
      %v219 = vadd.f32 %v178, %v218
      %v220 = vpop.f32.mrf.mxu0
      %221 = vdwg.mxu0
      %222 = vmatpush.bf16.msra.mxu0 0
      %223 = vmatpush.bf16.msra.mxu0 0
      %224 = vmatpush.bf16.msra.mxu0 0
      %225 = vmatpush.bf16.msra.mxu0 0
      %226 = vmatpush.bf16.msra.mxu0 0
      %227 = vmatpush.bf16.msra.mxu0 0
      %228 = vmatpush.bf16.msra.mxu0 0
      %229 = vmatpush.bf16.msra.mxu0 %v194
      %230 = vmatmul.bf16.gmra.mxu0 %v187
      %v231 = vpop.f32.mrf.mxu0
      %v232 = vadd.f32 %v178, %v231
      %v233 = vpop.f32.mrf.mxu0
      %234 = vdwg.mxu0
      %v237 = vrot.slane %v219, 4
      %vm238 = vcmask 1043456
      %v239 = vsel %vm238, %v206, %v237
      %241 = vst [vmem:[%s170] sm:$0xff] %v239
      %vm242 = vcmask 257024
      %243 = vst.msk [vmem:[%s170 + $0x8] sm:$0xf] %vm242, %v232
      %p244 = scmp.lt.s32.totalorder %s14, 1
      %s245 = scalar_select %p244, %s14, 1
      %s246 = smul.addr %s245, 3
      %s247 = smul.addr %s246, 4
      %s248 = scalar_lea.vmem %s3, %s247
      // Predicated region
      $region33: #{_lambda_.8} parent=31 // pred_check
        %p249 = pneg %p100
      $region34: #{_lambda_.8} parent=31 // pred_check_branch
        %251 = sbr.rel (%p249) target = $region36
      $region35: #{_lambda_.8} parent=31 // pred_region
        _
      $region36: #{_lambda_.8} parent=31 // pred_fallthru
        _
    $region32: #{_lambda_.8} parent=5 // pred_fallthru
      _
    %p252 = scmp.le.s32.totalorder 2, %s9
    // Predicated region
    $region37: #{_lambda_.8} parent=5 // pred_check
      %p253 = pneg %p252
    $region38: #{_lambda_.8} parent=5 // pred_check_branch
      %255 = sbr.rel (%p253) target = $region40
    $region39: #{_lambda_.8} parent=5 // pred_region
      %s256 = ssub.s32 %s9, 2
      // Predicated region
      $region41: #{_lambda_.8} parent=39 // pred_check
        %p257 = pneg %p106
      $region42: #{_lambda_.8} parent=39 // pred_check_branch
        %259 = sbr.rel (%p257) target = $region44
      $region43: #{_lambda_.8} parent=39 // pred_region
        %p260 = scmp.lt.s32.totalorder %s15, 1
        %s261 = scalar_select %p260, %s15, 1
        %s262 = smul.addr %s261, 3
        %s263 = smul.addr %s262, 4
        %s264 = scalar_lea.vmem %s3, %s263
      $region44: #{_lambda_.8} parent=39 // pred_fallthru
        _
    $region40: #{_lambda_.8} parent=5 // pred_fallthru
      _
  $region6: #{_lambda_.8} parent=0 // loop_footer
    %s13 = sadd.s32 1, %s9
  $region7: #{_lambda_.8} parent=0 // loop_footer_branch
    %8 = sbr.rel target = $region3
  $region8: #{_lambda_.8} parent=0 // loop_exit
    _

// kernel: _lambda_.9
$region0: #{_lambda_.9}
  #allocation0 [shape = 'u32[]', space=smem, size = 0x4, offset = 0x4, fixed_abs, tag = 'smem constant byte address 0x4 - core index']
  #allocation1 [shape = 'u32[72,128]{1,0:T(1,128)}', space=vmem, size = 0x9000, scoped, tag = 'internal scratch']
  #allocation2 [shape = 'bf16[64,72]{1,0:T(8,128)(2,1)}', space=vmem, size = 0x4000, scoped, tag = 'scratch operand']
  %s0 = inlined_call_operand.vmem [shape: bf16[2,16,90], index: 0, kind: input, shape index: {}]
  %s1 = inlined_call_operand.vmem [shape: bf16[8,64], index: 1, kind: input, shape index: {}]
  %s2 = inlined_call_operand.vmem [shape: f32[2,8,72], index: 2, kind: output, shape index: {}]
  %s3 = sld [smem:[#allocation0]]
  $region41: #{_lambda_.9} parent=0
    _
  %s5 = ssub.s32 1, %s3
  %s6 = scalar_select 0, %s5, %s3
  loop: start=0, step=1, limit=4
  $region2: #{_lambda_.9} parent=0 // loop_pre_header
    _
  $region3: #{_lambda_.9} parent=0 // loop_header
    %s8 = sphi 0, %s12
    %p9 = scmp.ge.s32.totalorder %s8, 4
    %s18 = sphi 0, %s20
    %s21 = sphi 0, %s18
    %s22 = sphi 0, %s21
    %s38 = sphi 0, %s22
    %s42 = sphi 0, %s42
    %s44 = sphi 0, %s42
    %s45 = sphi 0, %s44
    %s59 = sphi 0, %s45
    %s65 = sphi 0, %s67
    %s68 = sphi 0, %s65
    %s69 = sphi 0, %s68
    %s85 = sphi 0, %s69
  $region4: #{_lambda_.9} parent=0 // loop_header_branch
    %11 = sbr.rel (%p9) target = $region8
  $region5: #{_lambda_.9} parent=0 // loop_body
    %s13 = ssub.s32 %s8, 1
    %s14 = ssub.s32 %s8, 2
    %s15 = sadd.s32 %s8, 1
    %s16 = ssub.s32 %s8, %s15
    %p17 = scmp.eq.s32.totalorder %s16, 0
    %s19 = sadd.s32 %s18, 1
    %s20 = scalar_select %p17, %s18, %s19
    %p23 = pneg %p17
    %p24 = scmp.eq.s32.totalorder %s8, 1
    %p25 = por %p23, %p24
    %p26 = scmp.ne.s32.totalorder %s18, %s21
    %p27 = scmp.eq.s32.totalorder %s8, 0
    %p28 = por %p26, %p27
    %p29 = scmp.ne.s32.totalorder %s18, %s21
    %p30 = scmp.eq.s32.totalorder %s13, 1
    %p31 = por %p29, %p30
    %p32 = scmp.ne.s32.totalorder %s21, %s22
    %p33 = scmp.eq.s32.totalorder %s13, 0
    %p34 = por %p32, %p33
    %p35 = scmp.ne.s32.totalorder %s21, %s22
    %p36 = scmp.eq.s32.totalorder %s14, 1
    %p37 = por %p35, %p36
    %p39 = scmp.ne.s32.totalorder %s22, %s38
    %p40 = scmp.eq.s32.totalorder %s14, 0
    %p41 = por %p39, %p40
    %s43 = sadd.s32 %s42, 1
    %p46 = scmp.eq.s32.totalorder %s8, 1
    %p47 = scmp.ne.s32.totalorder %s42, %s44
    %p48 = scmp.eq.s32.totalorder %s8, 0
    %p49 = por %p47, %p48
    %p50 = scmp.ne.s32.totalorder %s42, %s44
    %p51 = scmp.eq.s32.totalorder %s13, 1
    %p52 = por %p50, %p51
    %p53 = scmp.ne.s32.totalorder %s44, %s45
    %p54 = scmp.eq.s32.totalorder %s13, 0
    %p55 = por %p53, %p54
    %p56 = scmp.ne.s32.totalorder %s44, %s45
    %p57 = scmp.eq.s32.totalorder %s14, 1
    %p58 = por %p56, %p57
    %p60 = scmp.ne.s32.totalorder %s45, %s59
    %p61 = scmp.eq.s32.totalorder %s14, 0
    %p62 = por %p60, %p61
    %s63 = ssub.s32 %s8, %s15
    %p64 = scmp.eq.s32.totalorder %s63, 0
    %s66 = sadd.s32 %s65, 1
    %s67 = scalar_select %p64, %s65, %s66
    %p70 = pneg %p64
    %p71 = scmp.eq.s32.totalorder %s8, 1
    %p72 = por %p70, %p71
    %p73 = scmp.ne.s32.totalorder %s65, %s68
    %p74 = scmp.eq.s32.totalorder %s8, 0
    %p75 = por %p73, %p74
    %p76 = scmp.ne.s32.totalorder %s65, %s68
    %p77 = scmp.eq.s32.totalorder %s13, 1
    %p78 = por %p76, %p77
    %p79 = scmp.ne.s32.totalorder %s68, %s69
    %p80 = scmp.eq.s32.totalorder %s13, 0
    %p81 = por %p79, %p80
    %p82 = scmp.ne.s32.totalorder %s68, %s69
    %p83 = scmp.eq.s32.totalorder %s14, 1
    %p84 = por %p82, %p83
    %p86 = scmp.ne.s32.totalorder %s69, %s85
    %p87 = scmp.eq.s32.totalorder %s14, 0
    %p88 = por %p86, %p87
    %p89 = scmp.le.s32.totalorder 1, %s8
    %p90 = scmp.lt.s32.totalorder %s8, 3
    %p91 = pnand %p89, %p90
    %p92 = pneg %p91
    // Predicated region
    $region9: #{_lambda_.9} parent=5 // pred_check
      _
    $region10: #{_lambda_.9} parent=5 // pred_check_branch
      %94 = sbr.rel (%p91) target = $region12
    $region11: #{_lambda_.9} parent=5 // pred_region
      %s95 = ssub.s32 %s8, 1
      // Predicated region
      $region13: #{_lambda_.9} parent=11 // pred_check
        %p96 = pneg %p55
      $region14: #{_lambda_.9} parent=11 // pred_check_branch
        %98 = sbr.rel (%p96) target = $region16
      $region15: #{_lambda_.9} parent=11 // pred_region
        _
      $region16: #{_lambda_.9} parent=11 // pred_fallthru
        _
    $region12: #{_lambda_.9} parent=5 // pred_fallthru
      _
    %p99 = scmp.lt.s32.totalorder %s8, 2
    // Predicated region
    $region17: #{_lambda_.9} parent=5 // pred_check
      %p100 = pneg %p99
    $region18: #{_lambda_.9} parent=5 // pred_check_branch
      %102 = sbr.rel (%p100) target = $region20
    $region19: #{_lambda_.9} parent=5 // pred_region
      // Predicated region
      $region21: #{_lambda_.9} parent=19 // pred_check
        %p103 = pneg %p28
      $region22: #{_lambda_.9} parent=19 // pred_check_branch
        %105 = sbr.rel (%p103) target = $region24
      $region23: #{_lambda_.9} parent=19 // pred_region
        %p106 = scmp.lt.s32.totalorder %s8, 1
        %s107 = scalar_select %p106, %s8, 1
        %s108 = smul.addr %s107, 2
        %s109 = smul.addr %s108, 4
        %s110 = scalar_lea.vmem %s0, %s109
      $region24: #{_lambda_.9} parent=19 // pred_fallthru
        _
    $region20: #{_lambda_.9} parent=5 // pred_fallthru
      _
    %p111 = scmp.le.s32.totalorder 1, %s8
    %p112 = scmp.lt.s32.totalorder %s8, 3
    %p113 = pnand %p111, %p112
    %p114 = pneg %p113
    // Predicated region
    $region25: #{_lambda_.9} parent=5 // pred_check
      _
    $region26: #{_lambda_.9} parent=5 // pred_check_branch
      %116 = sbr.rel (%p113) target = $region28
    $region27: #{_lambda_.9} parent=5 // pred_region
      %s117 = ssub.s32 %s8, 1
      %p118 = scmp.lt.s32.totalorder %s13, 1
      %s119 = scalar_select %p118, %s13, 1
      %s120 = smul.addr %s119, 2
      %s121 = smul.addr %s120, 4
      %s122 = scalar_lea.vmem %s0, %s121
      %p123 = pneg %p34
      %p124 = pneg %p31
      %p125 = pneg %p55
      %p126 = pneg %p52
      %p127 = pneg %p81
      %p128 = pneg %p78
      %p129 = scmp.lt.s32.totalorder %s13, 1
      %s130 = scalar_select %p129, %s13, 1
      %s131 = smul.addr %s130, 8
      %s132 = scalar_lea.vmem %s2, %s131
      %p133 = scmp.lt.s32.totalorder %s13, 1
      %s134 = scalar_select %p133, %s13, 1
      %s135 = smul.addr %s134, 2
      %s136 = smul.addr %s135, 4
      %s137 = scalar_lea.vmem %s0, %s136
      %p138 = scmp.lt.s32.totalorder %s13, 1
      %s139 = scalar_select %p138, %s13, 1
      %s140 = smul.addr %s139, 8
      %s141 = scalar_lea.vmem %s2, %s140
      %v143 = vld [vmem:[%s137] sm:$0xf]
      %v144 = vld [vmem:[%s137 + $0x4] sm:$0xf]
      %vm145 = vcmask 584704
      %146 = vst.msk [vmem:[#allocation2] sm:$0xf] %vm145, %v143
      %147 = vst.msk [vmem:[#allocation2 + $0x4] sm:$0xf] %vm145, %v144
      %v148 = vld [vmem:[%s137] sm:$0xf]
      %v149 = vld [vmem:[%s137 + $0x4] sm:$0xf]
      %152 = vrot.lane.b32.xlu0 %v148, 127
      %v153 = vpop.permute.xlu0 %152
      %154 = vrot.lane.b32.xlu0 %v149, 127
      %v155 = vpop.permute.xlu0 %154
      %158 = vst.msk [vmem:[#allocation2 + $0x8] sm:$0xf] %vm145, %v153
      %159 = vst.msk [vmem:[#allocation2 + $0xc] sm:$0xf] %vm145, %v155
      %v160 = vld [vmem:[%s137] sm:$0xf]
      %v161 = vld [vmem:[%s137 + $0x4] sm:$0xf]
      %164 = vrot.lane.b32.xlu0 %v160, 119
      %v165 = vpop.permute.xlu0 %164
      %166 = vrot.lane.b32.xlu0 %v161, 119
      %v167 = vpop.permute.xlu0 %166
      %170 = vst.msk [vmem:[#allocation2 + $0x10] sm:$0xf] %vm145, %v165
      %171 = vst.msk [vmem:[#allocation2 + $0x14] sm:$0xf] %vm145, %v167
      %v172 = vld [vmem:[%s137] sm:$0xf]
      %v173 = vld [vmem:[%s137 + $0x4] sm:$0xf]
      %176 = vrot.lane.b32.xlu0 %v172, 118
      %v177 = vpop.permute.xlu0 %176
      %178 = vrot.lane.b32.xlu0 %v173, 118
      %v179 = vpop.permute.xlu0 %178
      %182 = vst.msk [vmem:[#allocation2 + $0x18] sm:$0xf] %vm145, %v177
      %183 = vst.msk [vmem:[#allocation2 + $0x1c] sm:$0xf] %vm145, %v179
      %v184 = vld [vmem:[%s1] sm:$0xf]
      %v185 = vld [vmem:[#allocation2] sm:$0xf]
      %v186 = vld [vmem:[#allocation2 + $0x4] sm:$0xf]
      %v187 = vld [vmem:[#allocation2 + $0x8] sm:$0xf]
      %v188 = vld [vmem:[#allocation2 + $0xc] sm:$0xf]
      %v189 = vld [vmem:[#allocation2 + $0x10] sm:$0xf]
      %v190 = vld [vmem:[#allocation2 + $0x14] sm:$0xf]
      %v191 = vld [vmem:[#allocation2 + $0x18] sm:$0xf]
      %v192 = vld [vmem:[#allocation2 + $0x1c] sm:$0xf]
      %v201 = vunpack.c.l.b16 %v185
      %v202 = vunpack.c.l.b16 %v186
      %v203 = vunpack.c.l.b16 %v187
      %v204 = vunpack.c.l.b16 %v188
      %v205 = vunpack.c.l.b16 %v189
      %v206 = vunpack.c.l.b16 %v190
      %v207 = vunpack.c.l.b16 %v191
      %v208 = vunpack.c.l.b16 %v192
      %v209 = vpack.c.b16 %v202, %v201
      %v210 = vpack.c.b16 %v204, %v203
      %v211 = vpack.c.b16 %v206, %v205
      %v212 = vpack.c.b16 %v208, %v207
      %vm217 = vcmask 523264
      %v219 = vsel %vm217, %v184, 0
      %221 = vmatpush.bf16.msra.mxu0 0
      %222 = vmatpush.bf16.msra.mxu0 0
      %223 = vmatpush.bf16.msra.mxu0 0
      %224 = vmatpush.bf16.msra.mxu0 0
      %225 = vmatpush.bf16.msra.mxu0 %v212
      %226 = vmatpush.bf16.msra.mxu0 %v211
      %227 = vmatpush.bf16.msra.mxu0 %v210
      %228 = vmatpush.bf16.msra.mxu0 %v209
      %229 = vmatmul.bf16.gmra.mxu0 %v219
      %v230 = vpop.f32.mrf.mxu0
      %v231 = vadd.f32 0.0, %v230
      %v232 = vpop.f32.mrf.mxu0
      %233 = vdwg.mxu0
      %vm234 = vcmask 588800
      %235 = vst.msk [vmem:[%s141] sm:$0xff] %vm234, %v231
      %p236 = scmp.lt.s32.totalorder %s13, 1
      %s237 = scalar_select %p236, %s13, 1
      %s238 = smul.addr %s237, 8
      %s239 = scalar_lea.vmem %s2, %s238
      // Predicated region
      $region29: #{_lambda_.9} parent=27 // pred_check
        %p240 = pneg %p78
      $region30: #{_lambda_.9} parent=27 // pred_check_branch
        %242 = sbr.rel (%p240) target = $region32
      $region31: #{_lambda_.9} parent=27 // pred_region
        _
      $region32: #{_lambda_.9} parent=27 // pred_fallthru
        _
    $region28: #{_lambda_.9} parent=5 // pred_fallthru
      _
    %p243 = scmp.le.s32.totalorder 2, %s8
    // Predicated region
    $region33: #{_lambda_.9} parent=5 // pred_check
      %p244 = pneg %p243
    $region34: #{_lambda_.9} parent=5 // pred_check_branch
      %246 = sbr.rel (%p244) target = $region36
    $region35: #{_lambda_.9} parent=5 // pred_region
      %s247 = ssub.s32 %s8, 2
      // Predicated region
      $region37: #{_lambda_.9} parent=35 // pred_check
        %p248 = pneg %p84
      $region38: #{_lambda_.9} parent=35 // pred_check_branch
        %250 = sbr.rel (%p248) target = $region40
      $region39: #{_lambda_.9} parent=35 // pred_region
        %p251 = scmp.lt.s32.totalorder %s14, 1
        %s252 = scalar_select %p251, %s14, 1
        %s253 = smul.addr %s252, 8
        %s254 = scalar_lea.vmem %s2, %s253
      $region40: #{_lambda_.9} parent=35 // pred_fallthru
        _
    $region36: #{_lambda_.9} parent=5 // pred_fallthru
      _
  $region6: #{_lambda_.9} parent=0 // loop_footer
    %s12 = sadd.s32 1, %s8
  $region7: #{_lambda_.9} parent=0 // loop_footer_branch
    %7 = sbr.rel target = $region3
  $region8: #{_lambda_.9} parent=0 // loop_exit
    _

// kernel: reverse.3
$region0: #{reverse.3}
  #allocation0 [shape = 's32[1]{0}', space=sflag, size = 0x4, scoped, tag = 'scoped memory for reverse.3']
  %s0 = inlined_call_operand.vmem [shape: f32[2,8,8,3], index: 0, kind: input, shape index: {}]
  %s1 = inlined_call_operand.vmem [shape: f32[2,8,8,3], index: 1, kind: output, shape index: {}]
  %s2 = scalar_lea.vmem %s0, 16
  %v3 = vld [vmem:[%s2] sm:$0xff]
  %4 = vst [vmem:[%s1] sm:$0xff] %v3
  %s5 = scalar_lea.vmem %s0, 40
  %v6 = vld [vmem:[%s5] sm:$0xff]
  %s7 = scalar_lea.vmem %s1, 24
  %8 = vst [vmem:[%s7] sm:$0xff] %v6
  %s9 = scalar_lea.vmem %s0, 8
  %v10 = vld [vmem:[%s9] sm:$0xff]
  %s11 = scalar_lea.vmem %s1, 8
  %12 = vst [vmem:[%s11] sm:$0xff] %v10
  %s13 = scalar_lea.vmem %s0, 32
  %v14 = vld [vmem:[%s13] sm:$0xff]
  %s15 = scalar_lea.vmem %s1, 32
  %16 = vst [vmem:[%s15] sm:$0xff] %v14
  %v17 = vld [vmem:[%s0] sm:$0xff]
  %s18 = scalar_lea.vmem %s1, 16
  %19 = vst [vmem:[%s18] sm:$0xff] %v17
  %s20 = scalar_lea.vmem %s0, 24
  %v21 = vld [vmem:[%s20] sm:$0xff]
  %s22 = scalar_lea.vmem %s1, 40
  %23 = vst [vmem:[%s22] sm:$0xff] %v21

// kernel: _lambda_.10
$region0: #{_lambda_.10}
  #allocation0 [shape = 'u32[]', space=smem, size = 0x4, offset = 0x4, fixed_abs, tag = 'smem constant byte address 0x4 - core index']
  #allocation1 [shape = 'u32[72,128]{1,0:T(1,128)}', space=vmem, size = 0x9000, scoped, tag = 'internal scratch']
  %s0 = inlined_call_operand.vmem [shape: bf16[2,8,80], index: 0, kind: input, shape index: {}]
  %s1 = inlined_call_operand.vmem [shape: bf16[8,8], index: 1, kind: input, shape index: {}]
  %s2 = inlined_call_operand.vmem [shape: f32[8,1], index: 2, kind: input, shape index: {}]
  %s3 = inlined_call_operand.vmem [shape: f32[2,8,80], index: 3, kind: output, shape index: {}]
  %s4 = sld [smem:[#allocation0]]
  $region45: #{_lambda_.10} parent=0
    _
  %s6 = ssub.s32 1, %s4
  %s7 = scalar_select 0, %s6, %s4
  loop: start=0, step=1, limit=4
  $region2: #{_lambda_.10} parent=0 // loop_pre_header
    _
  $region3: #{_lambda_.10} parent=0 // loop_header
    %s9 = sphi 0, %s13
    %p10 = scmp.ge.s32.totalorder %s9, 4
    %s19 = sphi 0, %s21
    %s22 = sphi 0, %s19
    %s23 = sphi 0, %s22
    %s39 = sphi 0, %s23
    %s43 = sphi 0, %s43
    %s45 = sphi 0, %s43
    %s46 = sphi 0, %s45
    %s60 = sphi 0, %s46
    %s64 = sphi 0, %s64
    %s66 = sphi 0, %s64
    %s67 = sphi 0, %s66
    %s81 = sphi 0, %s67
    %s87 = sphi 0, %s89
    %s90 = sphi 0, %s87
    %s91 = sphi 0, %s90
    %s107 = sphi 0, %s91
  $region4: #{_lambda_.10} parent=0 // loop_header_branch
    %12 = sbr.rel (%p10) target = $region8
  $region5: #{_lambda_.10} parent=0 // loop_body
    %s14 = ssub.s32 %s9, 1
    %s15 = ssub.s32 %s9, 2
    %s16 = sadd.s32 %s9, 1
    %s17 = ssub.s32 %s9, %s16
    %p18 = scmp.eq.s32.totalorder %s17, 0
    %s20 = sadd.s32 %s19, 1
    %s21 = scalar_select %p18, %s19, %s20
    %p24 = pneg %p18
    %p25 = scmp.eq.s32.totalorder %s9, 1
    %p26 = por %p24, %p25
    %p27 = scmp.ne.s32.totalorder %s19, %s22
    %p28 = scmp.eq.s32.totalorder %s9, 0
    %p29 = por %p27, %p28
    %p30 = scmp.ne.s32.totalorder %s19, %s22
    %p31 = scmp.eq.s32.totalorder %s14, 1
    %p32 = por %p30, %p31
    %p33 = scmp.ne.s32.totalorder %s22, %s23
    %p34 = scmp.eq.s32.totalorder %s14, 0
    %p35 = por %p33, %p34
    %p36 = scmp.ne.s32.totalorder %s22, %s23
    %p37 = scmp.eq.s32.totalorder %s15, 1
    %p38 = por %p36, %p37
    %p40 = scmp.ne.s32.totalorder %s23, %s39
    %p41 = scmp.eq.s32.totalorder %s15, 0
    %p42 = por %p40, %p41
    %s44 = sadd.s32 %s43, 1
    %p47 = scmp.eq.s32.totalorder %s9, 1
    %p48 = scmp.ne.s32.totalorder %s43, %s45
    %p49 = scmp.eq.s32.totalorder %s9, 0
    %p50 = por %p48, %p49
    %p51 = scmp.ne.s32.totalorder %s43, %s45
    %p52 = scmp.eq.s32.totalorder %s14, 1
    %p53 = por %p51, %p52
    %p54 = scmp.ne.s32.totalorder %s45, %s46
    %p55 = scmp.eq.s32.totalorder %s14, 0
    %p56 = por %p54, %p55
    %p57 = scmp.ne.s32.totalorder %s45, %s46
    %p58 = scmp.eq.s32.totalorder %s15, 1
    %p59 = por %p57, %p58
    %p61 = scmp.ne.s32.totalorder %s46, %s60
    %p62 = scmp.eq.s32.totalorder %s15, 0
    %p63 = por %p61, %p62
    %s65 = sadd.s32 %s64, 1
    %p68 = scmp.eq.s32.totalorder %s9, 1
    %p69 = scmp.ne.s32.totalorder %s64, %s66
    %p70 = scmp.eq.s32.totalorder %s9, 0
    %p71 = por %p69, %p70
    %p72 = scmp.ne.s32.totalorder %s64, %s66
    %p73 = scmp.eq.s32.totalorder %s14, 1
    %p74 = por %p72, %p73
    %p75 = scmp.ne.s32.totalorder %s66, %s67
    %p76 = scmp.eq.s32.totalorder %s14, 0
    %p77 = por %p75, %p76
    %p78 = scmp.ne.s32.totalorder %s66, %s67
    %p79 = scmp.eq.s32.totalorder %s15, 1
    %p80 = por %p78, %p79
    %p82 = scmp.ne.s32.totalorder %s67, %s81
    %p83 = scmp.eq.s32.totalorder %s15, 0
    %p84 = por %p82, %p83
    %s85 = ssub.s32 %s9, %s16
    %p86 = scmp.eq.s32.totalorder %s85, 0
    %s88 = sadd.s32 %s87, 1
    %s89 = scalar_select %p86, %s87, %s88
    %p92 = pneg %p86
    %p93 = scmp.eq.s32.totalorder %s9, 1
    %p94 = por %p92, %p93
    %p95 = scmp.ne.s32.totalorder %s87, %s90
    %p96 = scmp.eq.s32.totalorder %s9, 0
    %p97 = por %p95, %p96
    %p98 = scmp.ne.s32.totalorder %s87, %s90
    %p99 = scmp.eq.s32.totalorder %s14, 1
    %p100 = por %p98, %p99
    %p101 = scmp.ne.s32.totalorder %s90, %s91
    %p102 = scmp.eq.s32.totalorder %s14, 0
    %p103 = por %p101, %p102
    %p104 = scmp.ne.s32.totalorder %s90, %s91
    %p105 = scmp.eq.s32.totalorder %s15, 1
    %p106 = por %p104, %p105
    %p108 = scmp.ne.s32.totalorder %s91, %s107
    %p109 = scmp.eq.s32.totalorder %s15, 0
    %p110 = por %p108, %p109
    %p111 = scmp.le.s32.totalorder 1, %s9
    %p112 = scmp.lt.s32.totalorder %s9, 3
    %p113 = pnand %p111, %p112
    %p114 = pneg %p113
    // Predicated region
    $region9: #{_lambda_.10} parent=5 // pred_check
      _
    $region10: #{_lambda_.10} parent=5 // pred_check_branch
      %116 = sbr.rel (%p113) target = $region12
    $region11: #{_lambda_.10} parent=5 // pred_region
      %s117 = ssub.s32 %s9, 1
      // Predicated region
      $region13: #{_lambda_.10} parent=11 // pred_check
        %p118 = pneg %p56
      $region14: #{_lambda_.10} parent=11 // pred_check_branch
        %120 = sbr.rel (%p118) target = $region16
      $region15: #{_lambda_.10} parent=11 // pred_region
        _
      $region16: #{_lambda_.10} parent=11 // pred_fallthru
        _
      // Predicated region
      $region17: #{_lambda_.10} parent=11 // pred_check
        %p121 = pneg %p77
      $region18: #{_lambda_.10} parent=11 // pred_check_branch
        %123 = sbr.rel (%p121) target = $region20
      $region19: #{_lambda_.10} parent=11 // pred_region
        _
      $region20: #{_lambda_.10} parent=11 // pred_fallthru
        _
    $region12: #{_lambda_.10} parent=5 // pred_fallthru
      _
    %p124 = scmp.lt.s32.totalorder %s9, 2
    // Predicated region
    $region21: #{_lambda_.10} parent=5 // pred_check
      %p125 = pneg %p124
    $region22: #{_lambda_.10} parent=5 // pred_check_branch
      %127 = sbr.rel (%p125) target = $region24
    $region23: #{_lambda_.10} parent=5 // pred_region
      // Predicated region
      $region25: #{_lambda_.10} parent=23 // pred_check
        %p128 = pneg %p29
      $region26: #{_lambda_.10} parent=23 // pred_check_branch
        %130 = sbr.rel (%p128) target = $region28
      $region27: #{_lambda_.10} parent=23 // pred_region
        %p131 = scmp.lt.s32.totalorder %s9, 1
        %s132 = scalar_select %p131, %s9, 1
        %s133 = smul.addr %s132, 4
        %s134 = scalar_lea.vmem %s0, %s133
      $region28: #{_lambda_.10} parent=23 // pred_fallthru
        _
    $region24: #{_lambda_.10} parent=5 // pred_fallthru
      _
    %p135 = scmp.le.s32.totalorder 1, %s9
    %p136 = scmp.lt.s32.totalorder %s9, 3
    %p137 = pnand %p135, %p136
    %p138 = pneg %p137
    // Predicated region
    $region29: #{_lambda_.10} parent=5 // pred_check
      _
    $region30: #{_lambda_.10} parent=5 // pred_check_branch
      %140 = sbr.rel (%p137) target = $region32
    $region31: #{_lambda_.10} parent=5 // pred_region
      %s141 = ssub.s32 %s9, 1
      %p142 = scmp.lt.s32.totalorder %s14, 1
      %s143 = scalar_select %p142, %s14, 1
      %s144 = smul.addr %s143, 4
      %s145 = scalar_lea.vmem %s0, %s144
      %p146 = pneg %p35
      %p147 = pneg %p32
      %p148 = pneg %p56
      %p149 = pneg %p53
      %p150 = pneg %p77
      %p151 = pneg %p74
      %p152 = pneg %p103
      %p153 = pneg %p100
      %p154 = scmp.lt.s32.totalorder %s14, 1
      %s155 = scalar_select %p154, %s14, 1
      %s156 = smul.addr %s155, 8
      %s157 = scalar_lea.vmem %s3, %s156
      %p158 = scmp.lt.s32.totalorder %s14, 1
      %s159 = scalar_select %p158, %s14, 1
      %s160 = smul.addr %s159, 4
      %s161 = scalar_lea.vmem %s0, %s160
      %p162 = scmp.lt.s32.totalorder %s14, 1
      %s163 = scalar_select %p162, %s14, 1
      %s164 = smul.addr %s163, 8
      %s165 = scalar_lea.vmem %s3, %s164
      %v167 = vld [vmem:[%s1] sm:$0xf]
      %v168 = vld [vmem:[%s161] sm:$0xf]
      %v169 = vld [vmem:[%s2] sm:$0xff]
      %171 = vset.pattern.permute.xlu0 0
      %172 = vperm.xlu0 %171, %v169
      %v173 = vpop.permute.xlu0 %172
      %vm175 = vcmask 64512
      %v177 = vsel %vm175, %v167, 0
      %vm179 = vcmask 1043456
      %v181 = vsel %vm179, %v168, 0
      %183 = vmatpush.bf16.msra.mxu0 0
      %184 = vmatpush.bf16.msra.mxu0 0
      %185 = vmatpush.bf16.msra.mxu0 0
      %186 = vmatpush.bf16.msra.mxu0 0
      %187 = vmatpush.bf16.msra.mxu0 0
      %188 = vmatpush.bf16.msra.mxu0 0
      %189 = vmatpush.bf16.msra.mxu0 0
      %190 = vmatpush.bf16.msra.mxu0 %v181
      %191 = vmatmul.bf16.gmra.mxu0 %v177
      %v192 = vpop.f32.mrf.mxu0
      %v193 = vadd.f32 %v173, %v192
      %v194 = vpop.f32.mrf.mxu0
      %195 = vdwg.mxu0
      %vm196 = vcmask 654336
      %197 = vst.msk [vmem:[%s165] sm:$0xff] %vm196, %v193
      %p198 = scmp.lt.s32.totalorder %s14, 1
      %s199 = scalar_select %p198, %s14, 1
      %s200 = smul.addr %s199, 8
      %s201 = scalar_lea.vmem %s3, %s200
      // Predicated region
      $region33: #{_lambda_.10} parent=31 // pred_check
        %p202 = pneg %p100
      $region34: #{_lambda_.10} parent=31 // pred_check_branch
        %204 = sbr.rel (%p202) target = $region36
      $region35: #{_lambda_.10} parent=31 // pred_region
        _
      $region36: #{_lambda_.10} parent=31 // pred_fallthru
        _
    $region32: #{_lambda_.10} parent=5 // pred_fallthru
      _
    %p205 = scmp.le.s32.totalorder 2, %s9
    // Predicated region
    $region37: #{_lambda_.10} parent=5 // pred_check
      %p206 = pneg %p205
    $region38: #{_lambda_.10} parent=5 // pred_check_branch
      %208 = sbr.rel (%p206) target = $region40
    $region39: #{_lambda_.10} parent=5 // pred_region
      %s209 = ssub.s32 %s9, 2
      // Predicated region
      $region41: #{_lambda_.10} parent=39 // pred_check
        %p210 = pneg %p106
      $region42: #{_lambda_.10} parent=39 // pred_check_branch
        %212 = sbr.rel (%p210) target = $region44
      $region43: #{_lambda_.10} parent=39 // pred_region
        %p213 = scmp.lt.s32.totalorder %s15, 1
        %s214 = scalar_select %p213, %s15, 1
        %s215 = smul.addr %s214, 8
        %s216 = scalar_lea.vmem %s3, %s215
      $region44: #{_lambda_.10} parent=39 // pred_fallthru
        _
    $region40: #{_lambda_.10} parent=5 // pred_fallthru
      _
  $region6: #{_lambda_.10} parent=0 // loop_footer
    %s13 = sadd.s32 1, %s9
  $region7: #{_lambda_.10} parent=0 // loop_footer_branch
    %8 = sbr.rel target = $region3
  $region8: #{_lambda_.10} parent=0 // loop_exit
    _

// kernel: tile.6
$region0: #{tile.6}
  #allocation0 [shape = 's32[1]{0}', space=sflag, size = 0x4, scoped, tag = 'scoped memory for tile.6']
  %s0 = inlined_call_operand.vmem [shape: f32[4], index: 0, kind: input, shape index: {}]
  %s1 = inlined_call_operand.vmem [shape: f32[4,4], index: 1, kind: output, shape index: {}]
  // Predicated region
  $region2: #{tile.6} parent=0 // pred_check
    _
  $region3: #{tile.6} parent=0 // pred_check_branch
    %3 = sbr.rel (0) target = $region5
  $region4: #{tile.6} parent=0 // pred_region
    _
  $region5: #{tile.6} parent=0 // pred_fallthru
    _
  %v4 = vld [vmem:[%s0] ss:$0 sm:$0xff]
  %5 = vst [vmem:[%s1] sm:$0xf] %v4

// kernel: tile.0
$region0: #{tile.0}
  %s0 = inlined_call_operand.vmem [shape: f32[4,4], index: 0, kind: input, shape index: {}]
  %s1 = inlined_call_operand.vmem [shape: f32[16,1], index: 1, kind: output, shape index: {}]
  $region1: #{tile.0} parent=0
    #allocation0 [shape = 'u8[4096]{0}', space=vmem, size = 0x1000, scoped, tag = 'scoped mem for input reshape']
    %s3 = ssub.s32 16, 1
    %v4 = vld [vmem:[%s0] sm:%s3]
    %5 = vst [vmem:[#allocation0] sm:%s3] %v4
    %v6 = vld [vmem:[#allocation0] sm:$0xf]
    %vm7 = vcmask 7168
    %8 = vst.msk [vmem:[%s1] ss:$4 sm:$0xf] %vm7, %v6
    %v9 = vld [vmem:[#allocation0] sm:$0xf]
    %10 = vrot.lane.b32.xlu0 %v9, 127
    %v11 = vpop.permute.xlu0 %10
    %vm12 = vcmask 7168
    %s13 = scalar_lea.vmem %s1, 1
    %14 = vst.msk [vmem:[%s13] ss:$4 sm:$0xf] %vm12, %v11
    %v15 = vld [vmem:[#allocation0] sm:$0xf]
    %16 = vrot.lane.b32.xlu0 %v15, 126
    %v17 = vpop.permute.xlu0 %16
    %vm18 = vcmask 7168
    %s19 = scalar_lea.vmem %s1, 2
    %20 = vst.msk [vmem:[%s19] ss:$4 sm:$0xf] %vm18, %v17
    %v21 = vld [vmem:[#allocation0] sm:$0xf]
    %22 = vrot.lane.b32.xlu0 %v21, 125
    %v23 = vpop.permute.xlu0 %22
    %vm24 = vcmask 7168
    %s25 = scalar_lea.vmem %s1, 3
    %26 = vst.msk [vmem:[%s25] ss:$4 sm:$0xf] %vm24, %v23

// kernel: _lambda_.11
$region0: #{_lambda_.11}
  #allocation0 [shape = 'u32[]', space=smem, size = 0x4, offset = 0x4, fixed_abs, tag = 'smem constant byte address 0x4 - core index']
  #allocation1 [shape = 'u32[72,128]{1,0:T(1,128)}', space=vmem, size = 0x9000, scoped, tag = 'internal scratch']
  %s0 = inlined_call_operand.vmem [shape: bf16[2,8,64], index: 0, kind: input, shape index: {}]
  %s1 = inlined_call_operand.vmem [shape: bf16[16,8], index: 1, kind: input, shape index: {}]
  %s2 = inlined_call_operand.vmem [shape: f32[16,1], index: 2, kind: input, shape index: {}]
  %s3 = inlined_call_operand.vmem [shape: bf16[2,16,64], index: 3, kind: output, shape index: {}]
  %s4 = sld [smem:[#allocation0]]
  $region45: #{_lambda_.11} parent=0
    _
  %s6 = ssub.s32 1, %s4
  %s7 = scalar_select 0, %s6, %s4
  loop: start=0, step=1, limit=4
  $region2: #{_lambda_.11} parent=0 // loop_pre_header
    _
  $region3: #{_lambda_.11} parent=0 // loop_header
    %s9 = sphi 0, %s13
    %p10 = scmp.ge.s32.totalorder %s9, 4
    %s19 = sphi 0, %s21
    %s22 = sphi 0, %s19
    %s23 = sphi 0, %s22
    %s39 = sphi 0, %s23
    %s43 = sphi 0, %s43
    %s45 = sphi 0, %s43
    %s46 = sphi 0, %s45
    %s60 = sphi 0, %s46
    %s64 = sphi 0, %s64
    %s66 = sphi 0, %s64
    %s67 = sphi 0, %s66
    %s81 = sphi 0, %s67
    %s87 = sphi 0, %s89
    %s90 = sphi 0, %s87
    %s91 = sphi 0, %s90
    %s107 = sphi 0, %s91
  $region4: #{_lambda_.11} parent=0 // loop_header_branch
    %12 = sbr.rel (%p10) target = $region8
  $region5: #{_lambda_.11} parent=0 // loop_body
    %s14 = ssub.s32 %s9, 1
    %s15 = ssub.s32 %s9, 2
    %s16 = sadd.s32 %s9, 1
    %s17 = ssub.s32 %s9, %s16
    %p18 = scmp.eq.s32.totalorder %s17, 0
    %s20 = sadd.s32 %s19, 1
    %s21 = scalar_select %p18, %s19, %s20
    %p24 = pneg %p18
    %p25 = scmp.eq.s32.totalorder %s9, 1
    %p26 = por %p24, %p25
    %p27 = scmp.ne.s32.totalorder %s19, %s22
    %p28 = scmp.eq.s32.totalorder %s9, 0
    %p29 = por %p27, %p28
    %p30 = scmp.ne.s32.totalorder %s19, %s22
    %p31 = scmp.eq.s32.totalorder %s14, 1
    %p32 = por %p30, %p31
    %p33 = scmp.ne.s32.totalorder %s22, %s23
    %p34 = scmp.eq.s32.totalorder %s14, 0
    %p35 = por %p33, %p34
    %p36 = scmp.ne.s32.totalorder %s22, %s23
    %p37 = scmp.eq.s32.totalorder %s15, 1
    %p38 = por %p36, %p37
    %p40 = scmp.ne.s32.totalorder %s23, %s39
    %p41 = scmp.eq.s32.totalorder %s15, 0
    %p42 = por %p40, %p41
    %s44 = sadd.s32 %s43, 1
    %p47 = scmp.eq.s32.totalorder %s9, 1
    %p48 = scmp.ne.s32.totalorder %s43, %s45
    %p49 = scmp.eq.s32.totalorder %s9, 0
    %p50 = por %p48, %p49
    %p51 = scmp.ne.s32.totalorder %s43, %s45
    %p52 = scmp.eq.s32.totalorder %s14, 1
    %p53 = por %p51, %p52
    %p54 = scmp.ne.s32.totalorder %s45, %s46
    %p55 = scmp.eq.s32.totalorder %s14, 0
    %p56 = por %p54, %p55
    %p57 = scmp.ne.s32.totalorder %s45, %s46
    %p58 = scmp.eq.s32.totalorder %s15, 1
    %p59 = por %p57, %p58
    %p61 = scmp.ne.s32.totalorder %s46, %s60
    %p62 = scmp.eq.s32.totalorder %s15, 0
    %p63 = por %p61, %p62
    %s65 = sadd.s32 %s64, 1
    %p68 = scmp.eq.s32.totalorder %s9, 1
    %p69 = scmp.ne.s32.totalorder %s64, %s66
    %p70 = scmp.eq.s32.totalorder %s9, 0
    %p71 = por %p69, %p70
    %p72 = scmp.ne.s32.totalorder %s64, %s66
    %p73 = scmp.eq.s32.totalorder %s14, 1
    %p74 = por %p72, %p73
    %p75 = scmp.ne.s32.totalorder %s66, %s67
    %p76 = scmp.eq.s32.totalorder %s14, 0
    %p77 = por %p75, %p76
    %p78 = scmp.ne.s32.totalorder %s66, %s67
    %p79 = scmp.eq.s32.totalorder %s15, 1
    %p80 = por %p78, %p79
    %p82 = scmp.ne.s32.totalorder %s67, %s81
    %p83 = scmp.eq.s32.totalorder %s15, 0
    %p84 = por %p82, %p83
    %s85 = ssub.s32 %s9, %s16
    %p86 = scmp.eq.s32.totalorder %s85, 0
    %s88 = sadd.s32 %s87, 1
    %s89 = scalar_select %p86, %s87, %s88
    %p92 = pneg %p86
    %p93 = scmp.eq.s32.totalorder %s9, 1
    %p94 = por %p92, %p93
    %p95 = scmp.ne.s32.totalorder %s87, %s90
    %p96 = scmp.eq.s32.totalorder %s9, 0
    %p97 = por %p95, %p96
    %p98 = scmp.ne.s32.totalorder %s87, %s90
    %p99 = scmp.eq.s32.totalorder %s14, 1
    %p100 = por %p98, %p99
    %p101 = scmp.ne.s32.totalorder %s90, %s91
    %p102 = scmp.eq.s32.totalorder %s14, 0
    %p103 = por %p101, %p102
    %p104 = scmp.ne.s32.totalorder %s90, %s91
    %p105 = scmp.eq.s32.totalorder %s15, 1
    %p106 = por %p104, %p105
    %p108 = scmp.ne.s32.totalorder %s91, %s107
    %p109 = scmp.eq.s32.totalorder %s15, 0
    %p110 = por %p108, %p109
    %p111 = scmp.le.s32.totalorder 1, %s9
    %p112 = scmp.lt.s32.totalorder %s9, 3
    %p113 = pnand %p111, %p112
    %p114 = pneg %p113
    // Predicated region
    $region9: #{_lambda_.11} parent=5 // pred_check
      _
    $region10: #{_lambda_.11} parent=5 // pred_check_branch
      %116 = sbr.rel (%p113) target = $region12
    $region11: #{_lambda_.11} parent=5 // pred_region
      %s117 = ssub.s32 %s9, 1
      // Predicated region
      $region13: #{_lambda_.11} parent=11 // pred_check
        %p118 = pneg %p56
      $region14: #{_lambda_.11} parent=11 // pred_check_branch
        %120 = sbr.rel (%p118) target = $region16
      $region15: #{_lambda_.11} parent=11 // pred_region
        _
      $region16: #{_lambda_.11} parent=11 // pred_fallthru
        _
      // Predicated region
      $region17: #{_lambda_.11} parent=11 // pred_check
        %p121 = pneg %p77
      $region18: #{_lambda_.11} parent=11 // pred_check_branch
        %123 = sbr.rel (%p121) target = $region20
      $region19: #{_lambda_.11} parent=11 // pred_region
        _
      $region20: #{_lambda_.11} parent=11 // pred_fallthru
        _
    $region12: #{_lambda_.11} parent=5 // pred_fallthru
      _
    %p124 = scmp.lt.s32.totalorder %s9, 2
    // Predicated region
    $region21: #{_lambda_.11} parent=5 // pred_check
      %p125 = pneg %p124
    $region22: #{_lambda_.11} parent=5 // pred_check_branch
      %127 = sbr.rel (%p125) target = $region24
    $region23: #{_lambda_.11} parent=5 // pred_region
      // Predicated region
      $region25: #{_lambda_.11} parent=23 // pred_check
        %p128 = pneg %p29
      $region26: #{_lambda_.11} parent=23 // pred_check_branch
        %130 = sbr.rel (%p128) target = $region28
      $region27: #{_lambda_.11} parent=23 // pred_region
        %p131 = scmp.lt.s32.totalorder %s9, 1
        %s132 = scalar_select %p131, %s9, 1
        %s133 = smul.addr %s132, 4
        %s134 = scalar_lea.vmem %s0, %s133
      $region28: #{_lambda_.11} parent=23 // pred_fallthru
        _
    $region24: #{_lambda_.11} parent=5 // pred_fallthru
      _
    %p135 = scmp.le.s32.totalorder 1, %s9
    %p136 = scmp.lt.s32.totalorder %s9, 3
    %p137 = pnand %p135, %p136
    %p138 = pneg %p137
    // Predicated region
    $region29: #{_lambda_.11} parent=5 // pred_check
      _
    $region30: #{_lambda_.11} parent=5 // pred_check_branch
      %140 = sbr.rel (%p137) target = $region32
    $region31: #{_lambda_.11} parent=5 // pred_region
      %s141 = ssub.s32 %s9, 1
      %p142 = scmp.lt.s32.totalorder %s14, 1
      %s143 = scalar_select %p142, %s14, 1
      %s144 = smul.addr %s143, 4
      %s145 = scalar_lea.vmem %s0, %s144
      %p146 = pneg %p35
      %p147 = pneg %p32
      %p148 = pneg %p56
      %p149 = pneg %p53
      %p150 = pneg %p77
      %p151 = pneg %p74
      %p152 = pneg %p103
      %p153 = pneg %p100
      %p154 = scmp.lt.s32.totalorder %s14, 1
      %s155 = scalar_select %p154, %s14, 1
      %s156 = smul.addr %s155, 2
      %s157 = smul.addr %s156, 4
      %s158 = scalar_lea.vmem %s3, %s157
      %p159 = scmp.lt.s32.totalorder %s14, 1
      %s160 = scalar_select %p159, %s14, 1
      %s161 = smul.addr %s160, 4
      %s162 = scalar_lea.vmem %s0, %s161
      %p163 = scmp.lt.s32.totalorder %s14, 1
      %s164 = scalar_select %p163, %s14, 1
      %s165 = smul.addr %s164, 2
      %s166 = smul.addr %s165, 4
      %s167 = scalar_lea.vmem %s3, %s166
      %v169 = vld [vmem:[%s1] sm:$0xf]
      %v170 = vld [vmem:[%s1 + $0x4] sm:$0xf]
      %v171 = vld [vmem:[%s162] sm:$0xf]
      %v172 = vld [vmem:[%s2] sm:$0xff]
      %v173 = vld [vmem:[%s2 + $0x8] sm:$0xff]
      %175 = vset.pattern.permute.xlu0 0
      %176 = vperm.xlu0 %175, %v172
      %v177 = vpop.permute.xlu0 %176
      %180 = vset.pattern.permute.xlu0 0
      %181 = vperm.xlu0 %180, %v173
      %v182 = vpop.permute.xlu0 %181
      %v186 = vunpack.c.l.b16 %v169
      %v187 = vunpack.c.l.b16 %v170
      %v188 = vpack.c.b16 %v187, %v186
      %vm189 = vcmask 64512
      %v191 = vsel %vm189, %v188, 0
      %vm193 = vcmask 1043456
      %v195 = vsel %vm193, %v171, 0
      %197 = vmatpush.bf16.msra.mxu0 0
      %198 = vmatpush.bf16.msra.mxu0 0
      %199 = vmatpush.bf16.msra.mxu0 0
      %200 = vmatpush.bf16.msra.mxu0 0
      %201 = vmatpush.bf16.msra.mxu0 0
      %202 = vmatpush.bf16.msra.mxu0 0
      %203 = vmatpush.bf16.msra.mxu0 0
      %204 = vmatpush.bf16.msra.mxu0 %v195
      %205 = vmatmul.bf16.gmra.mxu0 %v191
      %v206 = vpop.f32.mrf.mxu0
      %v207 = vadd.f32 %v177, %v206
      %v208 = vpop.f32.mrf.mxu0
      %v209 = vadd.f32 %v182, %v208
      %210 = vdwg.mxu0
      %v211 = vpack.c.bf16 %v207, %v207
      %v212 = vpack.c.bf16 %v209, %v209
      %vm213 = vcmask 519168
      %214 = vst.msk [vmem:[%s167] sm:$0xf] %vm213, %v211
      %215 = vst.msk [vmem:[%s167 + $0x4] sm:$0xf] %vm213, %v212
      %p216 = scmp.lt.s32.totalorder %s14, 1
      %s217 = scalar_select %p216, %s14, 1
      %s218 = smul.addr %s217, 2
      %s219 = smul.addr %s218, 4
      %s220 = scalar_lea.vmem %s3, %s219
      // Predicated region
      $region33: #{_lambda_.11} parent=31 // pred_check
        %p221 = pneg %p100
      $region34: #{_lambda_.11} parent=31 // pred_check_branch
        %223 = sbr.rel (%p221) target = $region36
      $region35: #{_lambda_.11} parent=31 // pred_region
        _
      $region36: #{_lambda_.11} parent=31 // pred_fallthru
        _
    $region32: #{_lambda_.11} parent=5 // pred_fallthru
      _
    %p224 = scmp.le.s32.totalorder 2, %s9
    // Predicated region
    $region37: #{_lambda_.11} parent=5 // pred_check
      %p225 = pneg %p224
    $region38: #{_lambda_.11} parent=5 // pred_check_branch
      %227 = sbr.rel (%p225) target = $region40
    $region39: #{_lambda_.11} parent=5 // pred_region
      %s228 = ssub.s32 %s9, 2
      // Predicated region
      $region41: #{_lambda_.11} parent=39 // pred_check
        %p229 = pneg %p106
      $region42: #{_lambda_.11} parent=39 // pred_check_branch
        %231 = sbr.rel (%p229) target = $region44
      $region43: #{_lambda_.11} parent=39 // pred_region
        %p232 = scmp.lt.s32.totalorder %s15, 1
        %s233 = scalar_select %p232, %s15, 1
        %s234 = smul.addr %s233, 2
        %s235 = smul.addr %s234, 4
        %s236 = scalar_lea.vmem %s3, %s235
      $region44: #{_lambda_.11} parent=39 // pred_fallthru
        _
    $region40: #{_lambda_.11} parent=5 // pred_fallthru
      _
  $region6: #{_lambda_.11} parent=0 // loop_footer
    %s13 = sadd.s32 1, %s9
  $region7: #{_lambda_.11} parent=0 // loop_footer_branch
    %8 = sbr.rel target = $region3
  $region8: #{_lambda_.11} parent=0 // loop_exit
    _

// kernel: _lambda_.12
$region0: #{_lambda_.12}
  #allocation0 [shape = 'u32[]', space=smem, size = 0x4, offset = 0x4, fixed_abs, tag = 'smem constant byte address 0x4 - core index']
  #allocation1 [shape = 'u32[72,128]{1,0:T(1,128)}', space=vmem, size = 0x9000, scoped, tag = 'internal scratch']
  #allocation2 [shape = 'bf16[8,256]{1,0:T(8,128)(2,1)}', space=vmem, size = 0x1000, scoped, tag = 'scratch operand']
  %s0 = inlined_call_operand.vmem [shape: bf16[2,4,256], index: 0, kind: input, shape index: {}]
  %s1 = inlined_call_operand.vmem [shape: bf16[2,4,256], index: 1, kind: input, shape index: {}]
  %s2 = inlined_call_operand.vmem [shape: bf16[4,8], index: 2, kind: input, shape index: {}]
  %s3 = inlined_call_operand.vmem [shape: bf16[2,4,256], index: 3, kind: output, shape index: {}]
  %s4 = sld [smem:[#allocation0]]
  $region45: #{_lambda_.12} parent=0
    _
  %s6 = ssub.s32 1, %s4
  %s7 = scalar_select 0, %s6, %s4
  loop: start=0, step=1, limit=4
  $region2: #{_lambda_.12} parent=0 // loop_pre_header
    _
  $region3: #{_lambda_.12} parent=0 // loop_header
    %s9 = sphi 0, %s13
    %p10 = scmp.ge.s32.totalorder %s9, 4
    %s19 = sphi 0, %s21
    %s22 = sphi 0, %s19
    %s23 = sphi 0, %s22
    %s39 = sphi 0, %s23
    %s45 = sphi 0, %s47
    %s48 = sphi 0, %s45
    %s49 = sphi 0, %s48
    %s65 = sphi 0, %s49
    %s69 = sphi 0, %s69
    %s71 = sphi 0, %s69
    %s72 = sphi 0, %s71
    %s86 = sphi 0, %s72
    %s92 = sphi 0, %s94
    %s95 = sphi 0, %s92
    %s96 = sphi 0, %s95
    %s112 = sphi 0, %s96
  $region4: #{_lambda_.12} parent=0 // loop_header_branch
    %12 = sbr.rel (%p10) target = $region8
  $region5: #{_lambda_.12} parent=0 // loop_body
    %s14 = ssub.s32 %s9, 1
    %s15 = ssub.s32 %s9, 2
    %s16 = sadd.s32 %s9, 1
    %s17 = ssub.s32 %s9, %s16
    %p18 = scmp.eq.s32.totalorder %s17, 0
    %s20 = sadd.s32 %s19, 1
    %s21 = scalar_select %p18, %s19, %s20
    %p24 = pneg %p18
    %p25 = scmp.eq.s32.totalorder %s9, 1
    %p26 = por %p24, %p25
    %p27 = scmp.ne.s32.totalorder %s19, %s22
    %p28 = scmp.eq.s32.totalorder %s9, 0
    %p29 = por %p27, %p28
    %p30 = scmp.ne.s32.totalorder %s19, %s22
    %p31 = scmp.eq.s32.totalorder %s14, 1
    %p32 = por %p30, %p31
    %p33 = scmp.ne.s32.totalorder %s22, %s23
    %p34 = scmp.eq.s32.totalorder %s14, 0
    %p35 = por %p33, %p34
    %p36 = scmp.ne.s32.totalorder %s22, %s23
    %p37 = scmp.eq.s32.totalorder %s15, 1
    %p38 = por %p36, %p37
    %p40 = scmp.ne.s32.totalorder %s23, %s39
    %p41 = scmp.eq.s32.totalorder %s15, 0
    %p42 = por %p40, %p41
    %s43 = ssub.s32 %s9, %s16
    %p44 = scmp.eq.s32.totalorder %s43, 0
    %s46 = sadd.s32 %s45, 1
    %s47 = scalar_select %p44, %s45, %s46
    %p50 = pneg %p44
    %p51 = scmp.eq.s32.totalorder %s9, 1
    %p52 = por %p50, %p51
    %p53 = scmp.ne.s32.totalorder %s45, %s48
    %p54 = scmp.eq.s32.totalorder %s9, 0
    %p55 = por %p53, %p54
    %p56 = scmp.ne.s32.totalorder %s45, %s48
    %p57 = scmp.eq.s32.totalorder %s14, 1
    %p58 = por %p56, %p57
    %p59 = scmp.ne.s32.totalorder %s48, %s49
    %p60 = scmp.eq.s32.totalorder %s14, 0
    %p61 = por %p59, %p60
    %p62 = scmp.ne.s32.totalorder %s48, %s49
    %p63 = scmp.eq.s32.totalorder %s15, 1
    %p64 = por %p62, %p63
    %p66 = scmp.ne.s32.totalorder %s49, %s65
    %p67 = scmp.eq.s32.totalorder %s15, 0
    %p68 = por %p66, %p67
    %s70 = sadd.s32 %s69, 1
    %p73 = scmp.eq.s32.totalorder %s9, 1
    %p74 = scmp.ne.s32.totalorder %s69, %s71
    %p75 = scmp.eq.s32.totalorder %s9, 0
    %p76 = por %p74, %p75
    %p77 = scmp.ne.s32.totalorder %s69, %s71
    %p78 = scmp.eq.s32.totalorder %s14, 1
    %p79 = por %p77, %p78
    %p80 = scmp.ne.s32.totalorder %s71, %s72
    %p81 = scmp.eq.s32.totalorder %s14, 0
    %p82 = por %p80, %p81
    %p83 = scmp.ne.s32.totalorder %s71, %s72
    %p84 = scmp.eq.s32.totalorder %s15, 1
    %p85 = por %p83, %p84
    %p87 = scmp.ne.s32.totalorder %s72, %s86
    %p88 = scmp.eq.s32.totalorder %s15, 0
    %p89 = por %p87, %p88
    %s90 = ssub.s32 %s9, %s16
    %p91 = scmp.eq.s32.totalorder %s90, 0
    %s93 = sadd.s32 %s92, 1
    %s94 = scalar_select %p91, %s92, %s93
    %p97 = pneg %p91
    %p98 = scmp.eq.s32.totalorder %s9, 1
    %p99 = por %p97, %p98
    %p100 = scmp.ne.s32.totalorder %s92, %s95
    %p101 = scmp.eq.s32.totalorder %s9, 0
    %p102 = por %p100, %p101
    %p103 = scmp.ne.s32.totalorder %s92, %s95
    %p104 = scmp.eq.s32.totalorder %s14, 1
    %p105 = por %p103, %p104
    %p106 = scmp.ne.s32.totalorder %s95, %s96
    %p107 = scmp.eq.s32.totalorder %s14, 0
    %p108 = por %p106, %p107
    %p109 = scmp.ne.s32.totalorder %s95, %s96
    %p110 = scmp.eq.s32.totalorder %s15, 1
    %p111 = por %p109, %p110
    %p113 = scmp.ne.s32.totalorder %s96, %s112
    %p114 = scmp.eq.s32.totalorder %s15, 0
    %p115 = por %p113, %p114
    %p116 = scmp.le.s32.totalorder 1, %s9
    %p117 = scmp.lt.s32.totalorder %s9, 3
    %p118 = pnand %p116, %p117
    %p119 = pneg %p118
    // Predicated region
    $region9: #{_lambda_.12} parent=5 // pred_check
      _
    $region10: #{_lambda_.12} parent=5 // pred_check_branch
      %121 = sbr.rel (%p118) target = $region12
    $region11: #{_lambda_.12} parent=5 // pred_region
      %s122 = ssub.s32 %s9, 1
      // Predicated region
      $region13: #{_lambda_.12} parent=11 // pred_check
        %p123 = pneg %p82
      $region14: #{_lambda_.12} parent=11 // pred_check_branch
        %125 = sbr.rel (%p123) target = $region16
      $region15: #{_lambda_.12} parent=11 // pred_region
        _
      $region16: #{_lambda_.12} parent=11 // pred_fallthru
        _
    $region12: #{_lambda_.12} parent=5 // pred_fallthru
      _
    %p126 = scmp.lt.s32.totalorder %s9, 2
    // Predicated region
    $region17: #{_lambda_.12} parent=5 // pred_check
      %p127 = pneg %p126
    $region18: #{_lambda_.12} parent=5 // pred_check_branch
      %129 = sbr.rel (%p127) target = $region20
    $region19: #{_lambda_.12} parent=5 // pred_region
      // Predicated region
      $region21: #{_lambda_.12} parent=19 // pred_check
        %p130 = pneg %p29
      $region22: #{_lambda_.12} parent=19 // pred_check_branch
        %132 = sbr.rel (%p130) target = $region24
      $region23: #{_lambda_.12} parent=19 // pred_region
        %p133 = scmp.lt.s32.totalorder %s9, 1
        %s134 = scalar_select %p133, %s9, 1
        %s135 = smul.addr %s134, 2
        %s136 = smul.addr %s135, 2
        %s137 = scalar_lea.vmem %s0, %s136
      $region24: #{_lambda_.12} parent=19 // pred_fallthru
        _
      // Predicated region
      $region25: #{_lambda_.12} parent=19 // pred_check
        %p138 = pneg %p55
      $region26: #{_lambda_.12} parent=19 // pred_check_branch
        %140 = sbr.rel (%p138) target = $region28
      $region27: #{_lambda_.12} parent=19 // pred_region
        %p141 = scmp.lt.s32.totalorder %s9, 1
        %s142 = scalar_select %p141, %s9, 1
        %s143 = smul.addr %s142, 2
        %s144 = smul.addr %s143, 2
        %s145 = scalar_lea.vmem %s1, %s144
      $region28: #{_lambda_.12} parent=19 // pred_fallthru
        _
    $region20: #{_lambda_.12} parent=5 // pred_fallthru
      _
    %p146 = scmp.le.s32.totalorder 1, %s9
    %p147 = scmp.lt.s32.totalorder %s9, 3
    %p148 = pnand %p146, %p147
    %p149 = pneg %p148
    // Predicated region
    $region29: #{_lambda_.12} parent=5 // pred_check
      _
    $region30: #{_lambda_.12} parent=5 // pred_check_branch
      %151 = sbr.rel (%p148) target = $region32
    $region31: #{_lambda_.12} parent=5 // pred_region
      %s152 = ssub.s32 %s9, 1
      %p153 = scmp.lt.s32.totalorder %s14, 1
      %s154 = scalar_select %p153, %s14, 1
      %s155 = smul.addr %s154, 2
      %s156 = smul.addr %s155, 2
      %s157 = scalar_lea.vmem %s0, %s156
      %p158 = pneg %p35
      %p159 = pneg %p32
      %p160 = scmp.lt.s32.totalorder %s14, 1
      %s161 = scalar_select %p160, %s14, 1
      %s162 = smul.addr %s161, 2
      %s163 = smul.addr %s162, 2
      %s164 = scalar_lea.vmem %s1, %s163
      %p165 = pneg %p61
      %p166 = pneg %p58
      %p167 = pneg %p82
      %p168 = pneg %p79
      %p169 = pneg %p108
      %p170 = pneg %p105
      %p171 = scmp.lt.s32.totalorder %s14, 1
      %s172 = scalar_select %p171, %s14, 1
      %s173 = smul.addr %s172, 2
      %s174 = smul.addr %s173, 2
      %s175 = scalar_lea.vmem %s3, %s174
      %p176 = scmp.lt.s32.totalorder %s14, 1
      %s177 = scalar_select %p176, %s14, 1
      %s178 = smul.addr %s177, 2
      %s179 = smul.addr %s178, 2
      %s180 = scalar_lea.vmem %s0, %s179
      %p181 = scmp.lt.s32.totalorder %s14, 1
      %s182 = scalar_select %p181, %s14, 1
      %s183 = smul.addr %s182, 2
      %s184 = smul.addr %s183, 2
      %s185 = scalar_lea.vmem %s1, %s184
      %p186 = scmp.lt.s32.totalorder %s14, 1
      %s187 = scalar_select %p186, %s14, 1
      %s188 = smul.addr %s187, 2
      %s189 = smul.addr %s188, 2
      %s190 = scalar_lea.vmem %s3, %s189
      %v192 = vld [vmem:[%s180] sm:$0xf]
      %194 = vst [vmem:[#allocation1] ss:$2 sm:$0xff] %v192
      %v195 = vld.sshfl [vmem:[#allocation1] sm:$0xff pattern:$0x75643120]
      %197 = vst [vmem:[#allocation2] sm:$0x33] %v195
      %v198 = vld [vmem:[%s185] sm:$0xf]
      %s200 = scalar_lea.vmem [#allocation1], 1
      %201 = vst [vmem:[%s200] ss:$2 sm:$0xff] %v198
      %v202 = vld.sshfl [vmem:[#allocation1] sm:$0xff pattern:$0x75643120]
      %204 = vst [vmem:[#allocation2] sm:$0xcc] %v202
      %v205 = vld [vmem:[%s2] sm:$0x3]
      %v206 = vld [vmem:[#allocation2] sm:$0xff]
      %v208 = vunpack.c.l.b16 %v206
      %v209 = vunpack.c.h.b16 %v206
      %v210 = vpack.c.b16 %v208, %v208
      %v211 = vpack.c.b16 %v209, %v209
      %vm212 = vcmask 64512
      %v214 = vsel %vm212, %v205, 0
      %vm216 = vcmask 1043456
      %v218 = vsel %vm216, %v210, 0
      %v221 = vsel %vm216, %v211, 0
      %223 = vmatpush.bf16.msra.mxu0 0
      %224 = vmatpush.bf16.msra.mxu0 0
      %225 = vmatpush.bf16.msra.mxu0 0
      %226 = vmatpush.bf16.msra.mxu0 0
      %227 = vmatpush.bf16.msra.mxu0 0
      %228 = vmatpush.bf16.msra.mxu0 0
      %229 = vmatpush.bf16.msra.mxu0 0
      %230 = vmatpush.bf16.msra.mxu0 %v218
      %231 = vmatmul.bf16.gmra.mxu0 %v214
      %v232 = vpop.f32.mrf.mxu0
      %v233 = vadd.f32 0.0, %v232
      %v234 = vpop.f32.mrf.mxu0
      %235 = vdwg.mxu0
      %236 = vmatpush.bf16.msra.mxu0 0
      %237 = vmatpush.bf16.msra.mxu0 0
      %238 = vmatpush.bf16.msra.mxu0 0
      %239 = vmatpush.bf16.msra.mxu0 0
      %240 = vmatpush.bf16.msra.mxu0 0
      %241 = vmatpush.bf16.msra.mxu0 0
      %242 = vmatpush.bf16.msra.mxu0 0
      %243 = vmatpush.bf16.msra.mxu0 %v221
      %244 = vmatmul.bf16.gmra.mxu0 %v214
      %v245 = vpop.f32.mrf.mxu0
      %v246 = vadd.f32 0.0, %v245
      %v247 = vpop.f32.mrf.mxu0
      %248 = vdwg.mxu0
      %v249 = vpack.c.bf16 %v246, %v233
      %v251 = vrot.slane %v249, 2
      %vm252 = vcmask 1041408
      %v255 = vsel %vm252, %v249, %v251
      %257 = vst [vmem:[%s190] sm:$0xf] %v255
      %p258 = scmp.lt.s32.totalorder %s14, 1
      %s259 = scalar_select %p258, %s14, 1
      %s260 = smul.addr %s259, 2
      %s261 = smul.addr %s260, 2
      %s262 = scalar_lea.vmem %s3, %s261
      // Predicated region
      $region33: #{_lambda_.12} parent=31 // pred_check
        %p263 = pneg %p105
      $region34: #{_lambda_.12} parent=31 // pred_check_branch
        %265 = sbr.rel (%p263) target = $region36
      $region35: #{_lambda_.12} parent=31 // pred_region
        _
      $region36: #{_lambda_.12} parent=31 // pred_fallthru
        _
    $region32: #{_lambda_.12} parent=5 // pred_fallthru
      _
    %p266 = scmp.le.s32.totalorder 2, %s9
    // Predicated region
    $region37: #{_lambda_.12} parent=5 // pred_check
      %p267 = pneg %p266
    $region38: #{_lambda_.12} parent=5 // pred_check_branch
      %269 = sbr.rel (%p267) target = $region40
    $region39: #{_lambda_.12} parent=5 // pred_region
      %s270 = ssub.s32 %s9, 2
      // Predicated region
      $region41: #{_lambda_.12} parent=39 // pred_check
        %p271 = pneg %p111
      $region42: #{_lambda_.12} parent=39 // pred_check_branch
        %273 = sbr.rel (%p271) target = $region44
      $region43: #{_lambda_.12} parent=39 // pred_region
        %p274 = scmp.lt.s32.totalorder %s15, 1
        %s275 = scalar_select %p274, %s15, 1
        %s276 = smul.addr %s275, 2
        %s277 = smul.addr %s276, 2
        %s278 = scalar_lea.vmem %s3, %s277
      $region44: #{_lambda_.12} parent=39 // pred_fallthru
        _
    $region40: #{_lambda_.12} parent=5 // pred_fallthru
      _
  $region6: #{_lambda_.12} parent=0 // loop_footer
    %s13 = sadd.s32 1, %s9
  $region7: #{_lambda_.12} parent=0 // loop_footer_branch
    %8 = sbr.rel target = $region3
  $region8: #{_lambda_.12} parent=0 // loop_exit
    _

// kernel: _lambda_.13
$region0: #{_lambda_.13}
  #allocation0 [shape = 'u32[]', space=smem, size = 0x4, offset = 0x4, fixed_abs, tag = 'smem constant byte address 0x4 - core index']
  #allocation1 [shape = 'u32[72,128]{1,0:T(1,128)}', space=vmem, size = 0x9000, scoped, tag = 'internal scratch']
  #allocation2 [shape = 'bf16[36,288]{1,0:T(8,128)(2,1)}', space=vmem, size = 0x7800, scoped, tag = 'scratch operand']
  %s0 = inlined_call_operand.vmem [shape: bf16[2,4,342], index: 0, kind: input, shape index: {}]
  %s1 = inlined_call_operand.vmem [shape: bf16[4,36], index: 1, kind: input, shape index: {}]
  %s2 = inlined_call_operand.vmem [shape: f32[2,4,288], index: 2, kind: input, shape index: {}]
  %s3 = inlined_call_operand.vmem [shape: f32[2,4,288], index: 3, kind: output, shape index: {}]
  %s4 = sld [smem:[#allocation0]]
  $region45: #{_lambda_.13} parent=0
    _
  %s6 = ssub.s32 1, %s4
  %s7 = scalar_select 0, %s6, %s4
  loop: start=0, step=1, limit=4
  $region2: #{_lambda_.13} parent=0 // loop_pre_header
    _
  $region3: #{_lambda_.13} parent=0 // loop_header
    %s9 = sphi 0, %s13
    %p10 = scmp.ge.s32.totalorder %s9, 4
    %s19 = sphi 0, %s21
    %s22 = sphi 0, %s19
    %s23 = sphi 0, %s22
    %s39 = sphi 0, %s23
    %s43 = sphi 0, %s43
    %s45 = sphi 0, %s43
    %s46 = sphi 0, %s45
    %s60 = sphi 0, %s46
    %s66 = sphi 0, %s68
    %s69 = sphi 0, %s66
    %s70 = sphi 0, %s69
    %s86 = sphi 0, %s70
    %s92 = sphi 0, %s94
    %s95 = sphi 0, %s92
    %s96 = sphi 0, %s95
    %s112 = sphi 0, %s96
  $region4: #{_lambda_.13} parent=0 // loop_header_branch
    %12 = sbr.rel (%p10) target = $region8
  $region5: #{_lambda_.13} parent=0 // loop_body
    %s14 = ssub.s32 %s9, 1
    %s15 = ssub.s32 %s9, 2
    %s16 = sadd.s32 %s9, 1
    %s17 = ssub.s32 %s9, %s16
    %p18 = scmp.eq.s32.totalorder %s17, 0
    %s20 = sadd.s32 %s19, 1
    %s21 = scalar_select %p18, %s19, %s20
    %p24 = pneg %p18
    %p25 = scmp.eq.s32.totalorder %s9, 1
    %p26 = por %p24, %p25
    %p27 = scmp.ne.s32.totalorder %s19, %s22
    %p28 = scmp.eq.s32.totalorder %s9, 0
    %p29 = por %p27, %p28
    %p30 = scmp.ne.s32.totalorder %s19, %s22
    %p31 = scmp.eq.s32.totalorder %s14, 1
    %p32 = por %p30, %p31
    %p33 = scmp.ne.s32.totalorder %s22, %s23
    %p34 = scmp.eq.s32.totalorder %s14, 0
    %p35 = por %p33, %p34
    %p36 = scmp.ne.s32.totalorder %s22, %s23
    %p37 = scmp.eq.s32.totalorder %s15, 1
    %p38 = por %p36, %p37
    %p40 = scmp.ne.s32.totalorder %s23, %s39
    %p41 = scmp.eq.s32.totalorder %s15, 0
    %p42 = por %p40, %p41
    %s44 = sadd.s32 %s43, 1
    %p47 = scmp.eq.s32.totalorder %s9, 1
    %p48 = scmp.ne.s32.totalorder %s43, %s45
    %p49 = scmp.eq.s32.totalorder %s9, 0
    %p50 = por %p48, %p49
    %p51 = scmp.ne.s32.totalorder %s43, %s45
    %p52 = scmp.eq.s32.totalorder %s14, 1
    %p53 = por %p51, %p52
    %p54 = scmp.ne.s32.totalorder %s45, %s46
    %p55 = scmp.eq.s32.totalorder %s14, 0
    %p56 = por %p54, %p55
    %p57 = scmp.ne.s32.totalorder %s45, %s46
    %p58 = scmp.eq.s32.totalorder %s15, 1
    %p59 = por %p57, %p58
    %p61 = scmp.ne.s32.totalorder %s46, %s60
    %p62 = scmp.eq.s32.totalorder %s15, 0
    %p63 = por %p61, %p62
    %s64 = ssub.s32 %s9, %s16
    %p65 = scmp.eq.s32.totalorder %s64, 0
    %s67 = sadd.s32 %s66, 1
    %s68 = scalar_select %p65, %s66, %s67
    %p71 = pneg %p65
    %p72 = scmp.eq.s32.totalorder %s9, 1
    %p73 = por %p71, %p72
    %p74 = scmp.ne.s32.totalorder %s66, %s69
    %p75 = scmp.eq.s32.totalorder %s9, 0
    %p76 = por %p74, %p75
    %p77 = scmp.ne.s32.totalorder %s66, %s69
    %p78 = scmp.eq.s32.totalorder %s14, 1
    %p79 = por %p77, %p78
    %p80 = scmp.ne.s32.totalorder %s69, %s70
    %p81 = scmp.eq.s32.totalorder %s14, 0
    %p82 = por %p80, %p81
    %p83 = scmp.ne.s32.totalorder %s69, %s70
    %p84 = scmp.eq.s32.totalorder %s15, 1
    %p85 = por %p83, %p84
    %p87 = scmp.ne.s32.totalorder %s70, %s86
    %p88 = scmp.eq.s32.totalorder %s15, 0
    %p89 = por %p87, %p88
    %s90 = ssub.s32 %s9, %s16
    %p91 = scmp.eq.s32.totalorder %s90, 0
    %s93 = sadd.s32 %s92, 1
    %s94 = scalar_select %p91, %s92, %s93
    %p97 = pneg %p91
    %p98 = scmp.eq.s32.totalorder %s9, 1
    %p99 = por %p97, %p98
    %p100 = scmp.ne.s32.totalorder %s92, %s95
    %p101 = scmp.eq.s32.totalorder %s9, 0
    %p102 = por %p100, %p101
    %p103 = scmp.ne.s32.totalorder %s92, %s95
    %p104 = scmp.eq.s32.totalorder %s14, 1
    %p105 = por %p103, %p104
    %p106 = scmp.ne.s32.totalorder %s95, %s96
    %p107 = scmp.eq.s32.totalorder %s14, 0
    %p108 = por %p106, %p107
    %p109 = scmp.ne.s32.totalorder %s95, %s96
    %p110 = scmp.eq.s32.totalorder %s15, 1
    %p111 = por %p109, %p110
    %p113 = scmp.ne.s32.totalorder %s96, %s112
    %p114 = scmp.eq.s32.totalorder %s15, 0
    %p115 = por %p113, %p114
    %p116 = scmp.le.s32.totalorder 1, %s9
    %p117 = scmp.lt.s32.totalorder %s9, 3
    %p118 = pnand %p116, %p117
    %p119 = pneg %p118
    // Predicated region
    $region9: #{_lambda_.13} parent=5 // pred_check
      _
    $region10: #{_lambda_.13} parent=5 // pred_check_branch
      %121 = sbr.rel (%p118) target = $region12
    $region11: #{_lambda_.13} parent=5 // pred_region
      %s122 = ssub.s32 %s9, 1
      // Predicated region
      $region13: #{_lambda_.13} parent=11 // pred_check
        %p123 = pneg %p56
      $region14: #{_lambda_.13} parent=11 // pred_check_branch
        %125 = sbr.rel (%p123) target = $region16
      $region15: #{_lambda_.13} parent=11 // pred_region
        _
      $region16: #{_lambda_.13} parent=11 // pred_fallthru
        _
    $region12: #{_lambda_.13} parent=5 // pred_fallthru
      _
    %p126 = scmp.lt.s32.totalorder %s9, 2
    // Predicated region
    $region17: #{_lambda_.13} parent=5 // pred_check
      %p127 = pneg %p126
    $region18: #{_lambda_.13} parent=5 // pred_check_branch
      %129 = sbr.rel (%p127) target = $region20
    $region19: #{_lambda_.13} parent=5 // pred_region
      // Predicated region
      $region21: #{_lambda_.13} parent=19 // pred_check
        %p130 = pneg %p29
      $region22: #{_lambda_.13} parent=19 // pred_check_branch
        %132 = sbr.rel (%p130) target = $region24
      $region23: #{_lambda_.13} parent=19 // pred_region
        %p133 = scmp.lt.s32.totalorder %s9, 1
        %s134 = scalar_select %p133, %s9, 1
        %s135 = smul.addr %s134, 3
        %s136 = smul.addr %s135, 2
        %s137 = scalar_lea.vmem %s0, %s136
      $region24: #{_lambda_.13} parent=19 // pred_fallthru
        _
      // Predicated region
      $region25: #{_lambda_.13} parent=19 // pred_check
        %p138 = pneg %p76
      $region26: #{_lambda_.13} parent=19 // pred_check_branch
        %140 = sbr.rel (%p138) target = $region28
      $region27: #{_lambda_.13} parent=19 // pred_region
        %p141 = scmp.lt.s32.totalorder %s9, 1
        %s142 = scalar_select %p141, %s9, 1
        %s143 = smul.addr %s142, 3
        %s144 = smul.addr %s143, 4
        %s145 = scalar_lea.vmem %s2, %s144
      $region28: #{_lambda_.13} parent=19 // pred_fallthru
        _
    $region20: #{_lambda_.13} parent=5 // pred_fallthru
      _
    %p146 = scmp.le.s32.totalorder 1, %s9
    %p147 = scmp.lt.s32.totalorder %s9, 3
    %p148 = pnand %p146, %p147
    %p149 = pneg %p148
    // Predicated region
    $region29: #{_lambda_.13} parent=5 // pred_check
      _
    $region30: #{_lambda_.13} parent=5 // pred_check_branch
      %151 = sbr.rel (%p148) target = $region32
    $region31: #{_lambda_.13} parent=5 // pred_region
      %s152 = ssub.s32 %s9, 1
      %p153 = scmp.lt.s32.totalorder %s14, 1
      %s154 = scalar_select %p153, %s14, 1
      %s155 = smul.addr %s154, 3
      %s156 = smul.addr %s155, 2
      %s157 = scalar_lea.vmem %s0, %s156
      %p158 = pneg %p35
      %p159 = pneg %p32
      %p160 = pneg %p56
      %p161 = pneg %p53
      %p162 = scmp.lt.s32.totalorder %s14, 1
      %s163 = scalar_select %p162, %s14, 1
      %s164 = smul.addr %s163, 3
      %s165 = smul.addr %s164, 4
      %s166 = scalar_lea.vmem %s2, %s165
      %p167 = pneg %p82
      %p168 = pneg %p79
      %p169 = pneg %p108
      %p170 = pneg %p105
      %p171 = scmp.lt.s32.totalorder %s14, 1
      %s172 = scalar_select %p171, %s14, 1
      %s173 = smul.addr %s172, 3
      %s174 = smul.addr %s173, 4
      %s175 = scalar_lea.vmem %s3, %s174
      %p176 = scmp.lt.s32.totalorder %s14, 1
      %s177 = scalar_select %p176, %s14, 1
      %s178 = smul.addr %s177, 3
      %s179 = smul.addr %s178, 2
      %s180 = scalar_lea.vmem %s0, %s179
      %p181 = scmp.lt.s32.totalorder %s14, 1
      %s182 = scalar_select %p181, %s14, 1
      %s183 = smul.addr %s182, 3
      %s184 = smul.addr %s183, 4
      %s185 = scalar_lea.vmem %s2, %s184
      %p186 = scmp.lt.s32.totalorder %s14, 1
      %s187 = scalar_select %p186, %s14, 1
      %s188 = smul.addr %s187, 3
      %s189 = smul.addr %s188, 4
      %s190 = scalar_lea.vmem %s3, %s189
      %v192 = vld [vmem:[%s180] sm:$0x3f]
      %194 = vst [vmem:[#allocation1] ss:$2 sm:$0xff] %v192
      %v195 = vld.sshfl [vmem:[#allocation1] sm:$0xff pattern:$0x75643120]
      %v196 = vld.sshfl [vmem:[#allocation1 + $0x8] sm:$0xff pattern:$0x75643120]
      %199 = vst [vmem:[#allocation2] sm:$0x33] %v195
      %vm200 = vcmask 254976
      %201 = vst.msk [vmem:[#allocation2 + $0x8] sm:$0x3] %vm200, %v196
      %v202 = vld [vmem:[%s180] sm:$0x3f]
      %s204 = scalar_lea.vmem [#allocation1], 1
      %205 = vst [vmem:[%s204] ss:$2 sm:$0xff] %v202
      %v206 = vld.sshfl [vmem:[#allocation1] sm:$0xff pattern:$0x75643120]
      %v208 = vld.sshfl [vmem:[#allocation1 + $0x8] sm:$0xff pattern:$0x75643120]
      %210 = vrot.lane.b32.xlu0 %v206, 127
      %v211 = vpop.permute.xlu0 %210
      %212 = vrot.lane.b32.xlu0 %v208, 127
      %v213 = vpop.permute.xlu0 %212
      %v214 = vrot.slane %v211, 4
      %v215 = vrot.slane %v213, 4
      %vm216 = vcmask 1043456
      %v217 = vsel %vm216, %v214, %v215
      %vm218 = vcmask 1039360
      %v219 = vsel %vm218, %v211, %v217
      %222 = vst [vmem:[#allocation2] sm:$0xcc] %v219
      %vm223 = vcmask 257026
      %224 = vst.msk [vmem:[#allocation2 + $0x8] sm:$0xc] %vm223, %v213
      %v225 = vld [vmem:[%s180] sm:$0x3f]
      %227 = vst [vmem:[#allocation1] ss:$2 sm:$0xff] %v225
      %v228 = vld.sshfl [vmem:[#allocation1] sm:$0xff pattern:$0x75643120]
      %v230 = vld.sshfl [vmem:[#allocation1 + $0x8] sm:$0xff pattern:$0x75643120]
      %232 = vrot.lane.b32.xlu0 %v228, 126
      %v233 = vpop.permute.xlu0 %232
      %234 = vrot.lane.b32.xlu0 %v230, 126
      %v235 = vpop.permute.xlu0 %234
      %v236 = vrot.slane %v233, 4
      %v237 = vrot.slane %v235, 4
      %v238 = vsel %vm216, %v236, %v237
      %vm239 = vcmask 1031168
      %v240 = vsel %vm239, %v233, %v238
      %243 = vst [vmem:[#allocation2 + $0xc] sm:$0x33] %v240
      %244 = vst.msk [vmem:[#allocation2 + $0x14] sm:$0x3] %vm200, %v235
      %v245 = vld [vmem:[%s180] sm:$0x3f]
      %s247 = scalar_lea.vmem [#allocation1], 1
      %248 = vst [vmem:[%s247] ss:$2 sm:$0xff] %v245
      %v249 = vld.sshfl [vmem:[#allocation1] sm:$0xff pattern:$0x75643120]
      %v251 = vld.sshfl [vmem:[#allocation1 + $0x8] sm:$0xff pattern:$0x75643120]
      %253 = vrot.lane.b32.xlu0 %v249, 110
      %v254 = vpop.permute.xlu0 %253
      %255 = vrot.lane.b32.xlu0 %v251, 110
      %v256 = vpop.permute.xlu0 %255
      %v257 = vrot.slane %v254, 4
      %v258 = vrot.slane %v256, 4
      %v259 = vsel %vm216, %v257, %v258
      %vm260 = vcmask 900096
      %v261 = vsel %vm260, %v254, %v259
      %264 = vst [vmem:[#allocation2 + $0xc] sm:$0xcc] %v261
      %265 = vst.msk [vmem:[#allocation2 + $0x14] sm:$0xc] %vm223, %v256
      %v266 = vld [vmem:[%s180] sm:$0x3f]
      %268 = vst [vmem:[#allocation1] ss:$2 sm:$0xff] %v266
      %v269 = vld.sshfl [vmem:[#allocation1] sm:$0xff pattern:$0x75643120]
      %v271 = vld.sshfl [vmem:[#allocation1 + $0x8] sm:$0xff pattern:$0x75643120]
      %273 = vrot.lane.b32.xlu0 %v269, 109
      %v274 = vpop.permute.xlu0 %273
      %275 = vrot.lane.b32.xlu0 %v271, 109
      %v276 = vpop.permute.xlu0 %275
      %v277 = vrot.slane %v274, 4
      %v278 = vrot.slane %v276, 4
      %v279 = vsel %vm216, %v277, %v278
      %vm280 = vcmask 891904
      %v281 = vsel %vm280, %v274, %v279
      %284 = vst [vmem:[#allocation2 + $0x18] sm:$0x33] %v281
      %285 = vst.msk [vmem:[#allocation2 + $0x20] sm:$0x3] %vm200, %v276
      %v286 = vld [vmem:[%s180] sm:$0x3f]
      %s288 = scalar_lea.vmem [#allocation1], 1
      %289 = vst [vmem:[%s288] ss:$2 sm:$0xff] %v286
      %v290 = vld.sshfl [vmem:[#allocation1] sm:$0xff pattern:$0x75643120]
      %v292 = vld.sshfl [vmem:[#allocation1 + $0x8] sm:$0xff pattern:$0x75643120]
      %294 = vrot.lane.b32.xlu0 %v290, 108
      %v295 = vpop.permute.xlu0 %294
      %296 = vrot.lane.b32.xlu0 %v292, 108
      %v297 = vpop.permute.xlu0 %296
      %v298 = vrot.slane %v295, 4
      %v299 = vrot.slane %v297, 4
      %v300 = vsel %vm216, %v298, %v299
      %vm301 = vcmask 883712
      %v302 = vsel %vm301, %v295, %v300
      %305 = vst [vmem:[#allocation2 + $0x18] sm:$0xcc] %v302
      %306 = vst.msk [vmem:[#allocation2 + $0x20] sm:$0xc] %vm223, %v297
      %v307 = vld [vmem:[%s180] sm:$0x3f]
      %309 = vst [vmem:[#allocation1] ss:$2 sm:$0xff] %v307
      %v310 = vld.sshfl [vmem:[#allocation1] sm:$0xff pattern:$0x75643120]
      %v312 = vld.sshfl [vmem:[#allocation1 + $0x8] sm:$0xff pattern:$0x75643120]
      %314 = vrot.lane.b32.xlu0 %v310, 92
      %v315 = vpop.permute.xlu0 %314
      %316 = vrot.lane.b32.xlu0 %v312, 92
      %v317 = vpop.permute.xlu0 %316
      %v318 = vrot.slane %v315, 4
      %v319 = vrot.slane %v317, 4
      %v320 = vsel %vm216, %v318, %v319
      %vm321 = vcmask 752640
      %v322 = vsel %vm321, %v315, %v320
      %325 = vst [vmem:[#allocation2 + $0x24] sm:$0x33] %v322
      %326 = vst.msk [vmem:[#allocation2 + $0x2c] sm:$0x3] %vm200, %v317
      %v327 = vld [vmem:[%s180] sm:$0x3f]
      %s329 = scalar_lea.vmem [#allocation1], 1
      %330 = vst [vmem:[%s329] ss:$2 sm:$0xff] %v327
      %v331 = vld.sshfl [vmem:[#allocation1] sm:$0xff pattern:$0x75643120]
      %v333 = vld.sshfl [vmem:[#allocation1 + $0x8] sm:$0xff pattern:$0x75643120]
      %335 = vrot.lane.b32.xlu0 %v331, 91
      %v336 = vpop.permute.xlu0 %335
      %337 = vrot.lane.b32.xlu0 %v333, 91
      %v338 = vpop.permute.xlu0 %337
      %v339 = vrot.slane %v336, 4
      %v340 = vrot.slane %v338, 4
      %v341 = vsel %vm216, %v339, %v340
      %vm342 = vcmask 744448
      %v343 = vsel %vm342, %v336, %v341
      %346 = vst [vmem:[#allocation2 + $0x24] sm:$0xcc] %v343
      %347 = vst.msk [vmem:[#allocation2 + $0x2c] sm:$0xc] %vm223, %v338
      %v348 = vld [vmem:[%s180] sm:$0x3f]
      %350 = vst [vmem:[#allocation1] ss:$2 sm:$0xff] %v348
      %v351 = vld.sshfl [vmem:[#allocation1] sm:$0xff pattern:$0x75643120]
      %v353 = vld.sshfl [vmem:[#allocation1 + $0x8] sm:$0xff pattern:$0x75643120]
      %355 = vrot.lane.b32.xlu0 %v351, 90
      %v356 = vpop.permute.xlu0 %355
      %357 = vrot.lane.b32.xlu0 %v353, 90
      %v358 = vpop.permute.xlu0 %357
      %v359 = vrot.slane %v356, 4
      %v360 = vrot.slane %v358, 4
      %v361 = vsel %vm216, %v359, %v360
      %vm362 = vcmask 736256
      %v363 = vsel %vm362, %v356, %v361
      %366 = vst [vmem:[#allocation2 + $0x30] sm:$0x33] %v363
      %367 = vst.msk [vmem:[#allocation2 + $0x38] sm:$0x3] %vm200, %v358
      %v368 = vld [vmem:[%s1] sm:$0x3]
      %v369 = vld [vmem:[#allocation2] sm:$0xff]
      %v370 = vld [vmem:[#allocation2 + $0x8] sm:$0xf]
      %v371 = vld [vmem:[#allocation2 + $0xc] sm:$0xff]
      %v372 = vld [vmem:[#allocation2 + $0x14] sm:$0xf]
      %v373 = vld [vmem:[#allocation2 + $0x18] sm:$0xff]
      %v374 = vld [vmem:[#allocation2 + $0x20] sm:$0xf]
      %v375 = vld [vmem:[#allocation2 + $0x24] sm:$0xff]
      %v376 = vld [vmem:[#allocation2 + $0x2c] sm:$0xf]
      %v377 = vld [vmem:[#allocation2 + $0x30] sm:$0x33]
      %v378 = vld [vmem:[#allocation2 + $0x38] sm:$0x3]
      %v379 = vld [vmem:[%s185] sm:$0xff]
      %v380 = vld [vmem:[%s185 + $0x8] sm:$0xf]
      %v391 = vunpack.c.l.b16 %v369
      %v392 = vunpack.c.h.b16 %v369
      %v393 = vunpack.c.l.b16 %v370
      %v394 = vunpack.c.l.b16 %v371
      %v395 = vunpack.c.h.b16 %v371
      %v396 = vunpack.c.l.b16 %v372
      %v397 = vunpack.c.l.b16 %v373
      %v398 = vunpack.c.h.b16 %v373
      %v399 = vunpack.c.l.b16 %v374
      %v400 = vunpack.c.l.b16 %v375
      %v401 = vunpack.c.h.b16 %v375
      %v402 = vunpack.c.l.b16 %v376
      %v403 = vunpack.c.l.b16 %v377
      %v404 = vunpack.c.h.b16 %v377
      %v405 = vunpack.c.l.b16 %v378
      %v406 = vpack.c.b16 %v394, %v391
      %v407 = vpack.c.b16 %v395, %v392
      %v408 = vpack.c.b16 %v396, %v393
      %v409 = vpack.c.b16 %v400, %v397
      %v410 = vpack.c.b16 %v401, %v398
      %v411 = vpack.c.b16 %v402, %v399
      %v412 = vpack.c.b16 %v403, %v403
      %v413 = vpack.c.b16 %v404, %v404
      %v414 = vpack.c.b16 %v405, %v405
      %423 = vst [vmem:[#allocation1] ss:$2 sm:$0xff] %v379
      %s424 = scalar_lea.vmem [#allocation1], 16
      %425 = vst [vmem:[%s424] ss:$2 sm:$0xff] %v380
      %v426 = vld.sshfl [vmem:[#allocation1] sm:$0xff pattern:$0x75316420]
      %v427 = vld.sshfl [vmem:[#allocation1 + $0x8] sm:$0xff pattern:$0x75316420]
      %v428 = vld.sshfl [vmem:[#allocation1 + $0x10] sm:$0xff pattern:$0x75316420]
      %vm432 = vcmask 293888
      %v434 = vsel %vm432, %v368, 0
      %vm436 = vcmask 1041408
      %v438 = vsel %vm436, %v412, 0
      %v441 = vsel %vm436, %v413, 0
      %v444 = vsel %vm436, %v414, 0
      %446 = vmatpush.bf16.msra.mxu0 0
      %447 = vmatpush.bf16.msra.mxu0 0
      %448 = vmatpush.bf16.msra.mxu0 0
      %449 = vmatpush.bf16.msra.mxu0 0
      %450 = vmatpush.bf16.msra.mxu0 0
      %451 = vmatpush.bf16.msra.mxu0 %v438
      %452 = vmatpush.bf16.msra.mxu0 %v409
      %453 = vmatpush.bf16.msra.mxu0 %v406
      %454 = vmatmul.bf16.gmra.mxu0 %v434
      %v455 = vpop.f32.mrf.mxu0
      %v456 = vadd.f32 %v426, %v455
      %v457 = vpop.f32.mrf.mxu0
      %458 = vdwg.mxu0
      %459 = vmatpush.bf16.msra.mxu0 0
      %460 = vmatpush.bf16.msra.mxu0 0
      %461 = vmatpush.bf16.msra.mxu0 0
      %462 = vmatpush.bf16.msra.mxu0 0
      %463 = vmatpush.bf16.msra.mxu0 0
      %464 = vmatpush.bf16.msra.mxu0 %v441
      %465 = vmatpush.bf16.msra.mxu0 %v410
      %466 = vmatpush.bf16.msra.mxu0 %v407
      %467 = vmatmul.bf16.gmra.mxu0 %v434
      %v468 = vpop.f32.mrf.mxu0
      %v469 = vadd.f32 %v427, %v468
      %v470 = vpop.f32.mrf.mxu0
      %471 = vdwg.mxu0
      %472 = vmatpush.bf16.msra.mxu0 0
      %473 = vmatpush.bf16.msra.mxu0 0
      %474 = vmatpush.bf16.msra.mxu0 0
      %475 = vmatpush.bf16.msra.mxu0 0
      %476 = vmatpush.bf16.msra.mxu0 0
      %477 = vmatpush.bf16.msra.mxu0 %v444
      %478 = vmatpush.bf16.msra.mxu0 %v411
      %479 = vmatpush.bf16.msra.mxu0 %v408
      %480 = vmatmul.bf16.gmra.mxu0 %v434
      %v481 = vpop.f32.mrf.mxu0
      %v482 = vadd.f32 %v428, %v481
      %v483 = vpop.f32.mrf.mxu0
      %484 = vdwg.mxu0
      %v487 = vrot.slane %v469, 4
      %vm488 = vcmask 1043456
      %v489 = vsel %vm488, %v456, %v487
      %491 = vst [vmem:[%s190] sm:$0xff] %v489
      %vm492 = vcmask 257024
      %493 = vst.msk [vmem:[%s190 + $0x8] sm:$0xf] %vm492, %v482
      %p494 = scmp.lt.s32.totalorder %s14, 1
      %s495 = scalar_select %p494, %s14, 1
      %s496 = smul.addr %s495, 3
      %s497 = smul.addr %s496, 4
      %s498 = scalar_lea.vmem %s3, %s497
      // Predicated region
      $region33: #{_lambda_.13} parent=31 // pred_check
        %p499 = pneg %p105
      $region34: #{_lambda_.13} parent=31 // pred_check_branch
        %501 = sbr.rel (%p499) target = $region36
      $region35: #{_lambda_.13} parent=31 // pred_region
        _
      $region36: #{_lambda_.13} parent=31 // pred_fallthru
        _
    $region32: #{_lambda_.13} parent=5 // pred_fallthru
      _
    %p502 = scmp.le.s32.totalorder 2, %s9
    // Predicated region
    $region37: #{_lambda_.13} parent=5 // pred_check
      %p503 = pneg %p502
    $region38: #{_lambda_.13} parent=5 // pred_check_branch
      %505 = sbr.rel (%p503) target = $region40
    $region39: #{_lambda_.13} parent=5 // pred_region
      %s506 = ssub.s32 %s9, 2
      // Predicated region
      $region41: #{_lambda_.13} parent=39 // pred_check
        %p507 = pneg %p111
      $region42: #{_lambda_.13} parent=39 // pred_check_branch
        %509 = sbr.rel (%p507) target = $region44
      $region43: #{_lambda_.13} parent=39 // pred_region
        %p510 = scmp.lt.s32.totalorder %s15, 1
        %s511 = scalar_select %p510, %s15, 1
        %s512 = smul.addr %s511, 3
        %s513 = smul.addr %s512, 4
        %s514 = scalar_lea.vmem %s3, %s513
      $region44: #{_lambda_.13} parent=39 // pred_fallthru
        _
    $region40: #{_lambda_.13} parent=5 // pred_fallthru
      _
  $region6: #{_lambda_.13} parent=0 // loop_footer
    %s13 = sadd.s32 1, %s9
  $region7: #{_lambda_.13} parent=0 // loop_footer_branch
    %8 = sbr.rel target = $region3
  $region8: #{_lambda_.13} parent=0 // loop_exit
    _

</llo_original>
